<compile_context>
chip_gen: v6e
topology: v6e:2x2x1
jax: 0.10.0
libtpu: 0.0.40
codegen_flags: <defaults>
</compile_context>

<pallas_src>
import math
import numpy as np

import jax
import jax.numpy as jnp
from jax import lax
from jax.experimental import pallas as pl
from jax.experimental.pallas import tpu as pltpu


LRELU_SLOPE = 0.2
LRELU_GAIN = math.sqrt(2.0)

COMPUTE_DTYPE = jnp.bfloat16        # MXU-native operands; accumulation stays f32.

# Scoped-VMEM cap.  Per-step usage here is small (whole-slab per batch element
# plus tiny weights); v5e/v6e can go higher (128 MiB physical), v7x has 64 MiB
# physical so keep double-buffered inputs well below it.
_VMEM_LIMIT_BYTES = 64 * 1024 * 1024

_COMPILER_PARAMS = pltpu.CompilerParams(
    dimension_semantics=("parallel", "parallel"),    # (batch, cout-block)
    vmem_limit_bytes=_VMEM_LIMIT_BYTES,
)


def _round_up(x, m):
    return (x + m - 1) // m * m


def _make_blur_filter(k):
    """Mirror of make_kernel() in the PyTorch source (numpy trace-time const)."""
    k = np.asarray(k, dtype=np.float32)
    if k.ndim == 1:
        k = k[None, :] * k[:, None]
    return k / k.sum()


# upfirdn2d correlates with the flipped filter; [1,3,3,1] outer is symmetric
# but flip anyway to mirror the reference exactly.
_BLUR_B = np.ascontiguousarray(_make_blur_filter([1, 3, 3, 1])[::-1, ::-1])   # (4, 4)


# ----------------------------------------------------------------------------
# Trace-time weight transforms
# ----------------------------------------------------------------------------
def _compose_blur_conv(w, scale):
    """Fold the depthwise blur into the following dense conv (exact).

    y = corr(pad(x), B);  z = corr(y, W, stride s)
      => z = corr(pad(x), H, stride s)   with  H[c] = sum_{a+b=c} B[a] * W[b]
    (full 2-D convolution of the blur taps with the conv kernel).
    """
    w = w.astype(jnp.float32) * scale
    O, I, k, _ = w.shape
    kb = _BLUR_B.shape[0]
    h = jnp.zeros((O, I, k + kb - 1, k + kb - 1), jnp.float32)
    for a in range(kb):
        for b in range(kb):
            h = h.at[:, :, a:a + k, b:b + k].add(float(_BLUR_B[a, b]) * w)
    return h


def _stack_weights(h, n_phases, n_dy, n_dx, cout_p, cin_p):
    """(cout,cin,Kh,Kw) -> (n_dy*n_dx, cout_p, n_phases*cin_p), phase-major in K.

    For stride-2 convs (n_phases=4) the tap (dy,dx) of phase (py,px) is kernel
    position (2*dy+py, 2*dx+px); all 4 phases share the same flat lane offset,
    so they are stacked along the contraction dim of a single MXU matmul.
    """
    O, I = h.shape[0], h.shape[1]
    hp = jnp.zeros((cout_p, cin_p) + h.shape[2:], jnp.float32)
    hp = hp.at[:O, :I].set(h.astype(jnp.float32))
    parts = []
    for dy in range(n_dy):
        for dx in range(n_dx):
            if n_phases == 1:
                w_t = hp[:, :, dy, dx]                                  # (cout_p, cin_p)
            else:
                pp = [hp[:, :, 2 * dy + py, 2 * dx + px]
                      for py in range(2) for px in range(2)]
                w_t = jnp.stack(pp, axis=1).reshape(cout_p, n_phases * cin_p)
            parts.append(w_t)
    return jnp.stack(parts, axis=0)


def _space_to_depth_lanes(v, l_in):
    """(N, C, 2*Hh, 2*Wh) -> (N, 4*C, l_in): parity phases stacked on the
    channel (contraction) axis, spatial flattened on lanes, zero-padded lanes."""
    N, C, H2, W2 = v.shape
    Hh, Wh = H2 // 2, W2 // 2
    ph = v.reshape(N, C, Hh, 2, Wh, 2).transpose(0, 3, 5, 1, 2, 4)      # (N,2,2,C,Hh,Wh)
    ph = ph.reshape(N, 4 * C, Hh * Wh)
    return jnp.pad(ph, ((0, 0), (0, 0), (0, l_in - Hh * Wh)))


# ----------------------------------------------------------------------------
# Generic tap-matmul conv kernel (fused bias / LeakyReLU / residual / scale)
# ----------------------------------------------------------------------------
def _make_conv_kernel(offsets, l_out, lane_chunk, *, has_bias, act,
                      has_residual, out_scale):
    def kernel(*refs):
        it = iter(refs)
        x_ref = next(it)                                  # (K, L_in)           bf16
        w_ref = next(it)                                  # (n_off, cout_blk, K) bf16
        b_ref = next(it) if has_bias else None            # (cout_blk, 1)        f32
        r_ref = next(it) if has_residual else None        # (cout_blk, l_out)    f32
        o_ref = next(it)                                  # (cout_blk, l_out)

        # Static lane-chunk loop keeps the f32 accumulator register-resident.
        for c0 in range(0, l_out, lane_chunk):
            acc = None
            for t, off in enumerate(offsets):
                patch = x_ref[:, c0 + off:c0 + off + lane_chunk]        # (K, chunk)
                term = jnp.dot(w_ref[t], patch,
                               preferred_element_type=jnp.float32)      # (cout_blk, chunk)
                acc = term if acc is None else acc + term
            if has_bias:
                acc = acc + b_ref[...].astype(jnp.float32)              # lane broadcast
            if act:
                acc = jnp.where(acc >= 0.0, acc, LRELU_SLOPE * acc) * LRELU_GAIN
            if has_residual:
                acc = acc + r_ref[:, c0:c0 + lane_chunk].astype(jnp.float32)
            if out_scale != 1.0:
                acc = acc * out_scale
            o_ref[:, c0:c0 + lane_chunk] = acc.astype(o_ref.dtype)      # unmasked vst
    return kernel


def _pick_lane_chunk(l_out):
    for c in (512, 384, 256, 128):
        if l_out % c == 0:
            return c
    return 128


def _pick_cout_block(cout_p):
    if cout_p <= 128:
        return cout_p
    for blk in (128, 112, 96, 80, 64, 48, 32, 16):
        if cout_p % blk == 0:
            return blk
    return cout_p


def _tap_conv(x_lanes, w_stacked, offsets, l_out, *, bias=None, act=False,
              residual=None, out_scale=1.0, out_dtype=jnp.float32):
    """Conv as per-lane-offset MXU matmuls over a flattened-spatial slab."""
    N, K, l_in = x_lanes.shape
    n_off, cout_p, k_w = w_stacked.shape
    assert k_w == K and l_out % 128 == 0
    cout_blk = _pick_cout_block(cout_p)
    n_cb = cout_p // cout_blk
    lane_chunk = _pick_lane_chunk(l_out)

    kernel = _make_conv_kernel(tuple(offsets), l_out, lane_chunk,
                               has_bias=bias is not None, act=act,
                               has_residual=residual is not None,
                               out_scale=out_scale)

    # TODO(synk): for very large H*W (input slab > VMEM) add a halo-tiled
    # spatial grid axis via manual DMA instead of whole-slab input blocks.
    in_specs = [
        pl.BlockSpec((None, K, l_in), lambda n, j: (n, 0, 0)),
        pl.BlockSpec((n_off, cout_blk, K), lambda n, j: (0, j, 0)),
    ]
    operands = [x_lanes, w_stacked]
    if bias is not None:
        in_specs.append(pl.BlockSpec((cout_blk, 1), lambda n, j: (j, 0)))
        operands.append(bias)
    if residual is not None:
        in_specs.append(pl.BlockSpec((None, cout_blk, l_out), lambda n, j: (n, j, 0)))
        operands.append(residual)

    return pl.pallas_call(
        kernel,
        out_shape=jax.ShapeDtypeStruct((N, cout_p, l_out), out_dtype),
        grid=(N, n_cb),
        in_specs=in_specs,
        out_specs=pl.BlockSpec((None, cout_blk, l_out), lambda n, j: (n, j, 0)),
        compiler_params=_COMPILER_PARAMS,
    )(*operands)


# ----------------------------------------------------------------------------
# ResBlock forward (Pallas)
# ----------------------------------------------------------------------------
@jax.jit
def res_block_forward(x, w1, b1, w2, b2, w_skip):
    N, cin, H, W = x.shape
    cout = w2.shape[0]
    cin_p = _round_up(cin, 16)        # bf16 sublane packing = 16
    cout_p = _round_up(cout, 16)

    # --- conv1: EqualConv2d 3x3 s1 p1 (no bias) + FusedLeakyReLU(b1) --------
    Hp1, Wp1 = H + 2, W + 2
    l_out1 = _round_up(H * Wp1, 128)              # lane-dense (H rows, pitch Wp1)
    l_in1 = l_out1 + 2 * Wp1 + 2                  # + max tap offset
    x1 = jnp.pad(x, ((0, 0), (0, cin_p - cin), (1, 1), (1, 1)))
    x1 = x1.reshape(N, cin_p, Hp1 * Wp1)
    x1 = jnp.pad(x1, ((0, 0), (0, 0), (0, l_in1 - Hp1 * Wp1))).astype(COMPUTE_DTYPE)

    w1s = _stack_weights(w1.astype(jnp.float32) / math.sqrt(cin * 9),
                         1, 3, 3, cin_p, cin_p).astype(COMPUTE_DTYPE)
    b1p = jnp.pad(b1.astype(jnp.float32), (0, cin_p - cin)).reshape(cin_p, 1)
    off1 = [ky * Wp1 + kx for ky in range(3) for kx in range(3)]

    y = _tap_conv(x1, w1s, off1, l_out1, bias=b1p, act=True,
                  out_dtype=COMPUTE_DTYPE)                       # (N, cin_p, l_out1) bf16
    # drop padded channels / garbage border columns before re-padding
    y = y[:, :cin, :H * Wp1].reshape(N, cin, H, Wp1)[:, :, :, :W]

    # --- shared padded grid for both stride-2 convs --------------------------
    Ho = (H - 2) // 2 + 1
    Wo = (W - 2) // 2 + 1
    Hpad = _round_up(H + 4, 2)
    Wpad = _round_up(W + 4, 2)
    Hh, Wh = Hpad // 2, Wpad // 2
    l_out2 = _round_up(Ho * Wh, 128)

    # --- conv2: Blur(pad=(2,2)) folded into 3x3 s2 -> dense 6x6 s2 conv ------
    l_in2 = l_out2 + 2 * Wh + 2
    y_pad = jnp.pad(y, ((0, 0), (0, cin_p - cin), (2, Hpad - H - 2), (2, Wpad - W - 2)))
    x2 = _space_to_depth_lanes(y_pad, l_in2).astype(COMPUTE_DTYPE)   # (N, 4*cin_p, l_in2)

    h2 = _compose_blur_conv(w2, 1.0 / math.sqrt(cin * 9))            # (cout, cin, 6, 6)
    w2s = _stack_weights(h2, 4, 3, 3, cout_p, cin_p).astype(COMPUTE_DTYPE)
    b2p = jnp.pad(b2.astype(jnp.float32), (0, cout_p - cout)).reshape(cout_p, 1)
    off2 = [dy * Wh + dx for dy in range(3) for dx in range(3)]

    branch = _tap_conv(x2, w2s, off2, l_out2, bias=b2p, act=True,
                       out_dtype=jnp.float32)                        # f32 residual

    # --- skip: Blur(pad=(1,1)) folded into 1x1 s2 -> dense 4x4 s2 conv,
    #           fused with (branch + skip) / sqrt(2) ------------------------
    l_in3 = l_out2 + Wh + 1
    x_pad = jnp.pad(x, ((0, 0), (0, cin_p - cin), (1, Hpad - H - 1), (1, Wpad - W - 1)))
    x3 = _space_to_depth_lanes(x_pad, l_in3).astype(COMPUTE_DTYPE)

    hs = _compose_blur_conv(w_skip, 1.0 / math.sqrt(cin))             # (cout, cin, 4, 4)
    wss = _stack_weights(hs, 4, 2, 2, cout_p, cin_p).astype(COMPUTE_DTYPE)
    off3 = [dy * Wh + dx for dy in range(2) for dx in range(2)]

    out = _tap_conv(x3, wss, off3, l_out2, residual=branch,
                    out_scale=1.0 / math.sqrt(2.0), out_dtype=jnp.float32)

    out = out[:, :cout, :Ho * Wh].reshape(N, cout, Ho, Wh)[:, :, :, :Wo]
    return out.astype(x.dtype)


# ----------------------------------------------------------------------------
# Pure-JAX (XLA) reference mirroring the PyTorch ResBlock exactly
# ----------------------------------------------------------------------------
def res_block_ref(x, w1, b1, w2, b2, w_skip):
    filt = jnp.asarray(_BLUR_B)

    def blur(v, pad):
        C = v.shape[1]
        vp = jnp.pad(v, ((0, 0), (0, 0), (pad[0], pad[1]), (pad[0], pad[1])))
        kern = jnp.tile(filt[None, None], (C, 1, 1, 1))
        return lax.conv_general_dilated(
            vp, kern, window_strides=(1, 1), padding="VALID",
            feature_group_count=C,
            dimension_numbers=("NCHW", "OIHW", "NCHW"))

    def equal_conv(v, w, stride, padding):
        scale = 1.0 / math.sqrt(w.shape[1] * w.shape[2] * w.shape[3])
        return lax.conv_general_dilated(
            v, w * scale, window_strides=(stride, stride),
            padding=((padding, padding), (padding, padding)),
            dimension_numbers=("NCHW", "OIHW", "NCHW"))

    def fused_lrelu(v, b):
        v = v + b.reshape(1, -1, 1, 1)
        return jnp.where(v >= 0, v, LRELU_SLOPE * v) * LRELU_GAIN

    out = fused_lrelu(equal_conv(x, w1, 1, 1), b1)
    out = blur(out, (2, 2))
    out = fused_lrelu(equal_conv(out, w2, 2, 0), b2)
    skip = equal_conv(blur(x, (1, 1)), w_skip, 2, 0)
    return (out + skip) / math.sqrt(2.0)


if __name__ == "__main__":
    key = jax.random.PRNGKey(0)
    N, C_IN, C_OUT, H, W = 2, 4, 8, 16, 16
    k = jax.random.split(key, 6)
    x = jax.random.normal(k[0], (N, C_IN, H, W), dtype=jnp.float32)
    w1 = jax.random.normal(k[1], (C_IN, C_IN, 3, 3), dtype=jnp.float32)
    b1 = 0.1 * jax.random.normal(k[2], (C_IN,), dtype=jnp.float32)
    w2 = jax.random.normal(k[3], (C_OUT, C_IN, 3, 3), dtype=jnp.float32)
    b2 = 0.1 * jax.random.normal(k[4], (C_OUT,), dtype=jnp.float32)
    w_skip = jax.random.normal(k[5], (C_OUT, C_IN, 1, 1), dtype=jnp.float32)

    out = res_block_forward(x, w1, b1, w2, b2, w_skip)
    jax.block_until_ready(out)

    ref = res_block_ref(x, w1, b1, w2, b2, w_skip)
    assert out.shape == (N, C_OUT, H // 2, W // 2), out.shape
    assert out.dtype == x.dtype
    max_err = float(jnp.max(jnp.abs(out - ref)))
    ref_max = float(jnp.max(jnp.abs(ref)))
    # bf16 operands (f32 accumulation) -> loosened tolerance vs the f32 reference.
    assert max_err < 1e-2 + 4e-2 * ref_max, (
        f"mismatch vs reference: max_err={max_err}, ref_max={ref_max}")
    print("KERNEL_OK")
</pallas_src>

<mosaic_0001>
module attributes {stable_mosaic.version = 11 : i64} {
  func.func @kernel(%arg0: i32, %arg1: i32, %arg2: memref<1x16x422xbf16, #tpu.memory_space<vmem>>, %arg3: memref<9x16x16xbf16, #tpu.memory_space<vmem>>, %arg4: memref<16x1xf32, #tpu.memory_space<vmem>>, %arg5: memref<1x16x384xbf16, #tpu.memory_space<vmem>>) attributes {dimension_semantics = [#tpu.dimension_semantics<parallel>, #tpu.dimension_semantics<parallel>], iteration_bounds = array<i64: 2, 1>, scalar_prefetch = 0 : i64, scratch_operands = 0 : i64, tpu.core_type = #tpu.core_type<tc>, window_params = [{transform_indices = @transform_0, window_bounds = array<i64: 1, 16, 422>}, {transform_indices = @transform_1, window_bounds = array<i64: 9, 16, 16>}, {transform_indices = @transform_2, window_bounds = array<i64: 16, 1>}, {transform_indices = @transform_3, window_bounds = array<i64: 1, 16, 384>}]} {
    %c0 = arith.constant 0 : index
    %c0_0 = arith.constant 0 : index
    %c0_1 = arith.constant 0 : index
    %0 = vector.load %arg2[%c0, %c0_0, %c0_1] : memref<1x16x422xbf16, #tpu.memory_space<vmem>>, vector<1x16x384xbf16>
    %1 = vector.shape_cast %0 : vector<1x16x384xbf16> to vector<16x384xbf16>
    %c0_2 = arith.constant 0 : index
    %c0_3 = arith.constant 0 : index
    %c0_4 = arith.constant 0 : index
    %2 = vector.load %arg3[%c0_2, %c0_3, %c0_4] : memref<9x16x16xbf16, #tpu.memory_space<vmem>>, vector<1x16x16xbf16>
    %3 = vector.shape_cast %2 : vector<1x16x16xbf16> to vector<16x16xbf16>
    %cst = arith.constant dense<0.000000e+00> : vector<16x384xf32>
    %4 = tpu.matmul %3, %1, %cst {dimension_numbers = #tpu.dot_dimension_numbers<[1], [0], [0], [1], [0, 0, 1, 1], [], []>} : vector<16x16xbf16>, vector<16x384xbf16>, vector<16x384xf32> -> vector<16x384xf32>
    %c0_5 = arith.constant 0 : index
    %c0_6 = arith.constant 0 : index
    %c1 = arith.constant 1 : index
    %5 = vector.load %arg2[%c0_5, %c0_6, %c1] : memref<1x16x422xbf16, #tpu.memory_space<vmem>>, vector<1x16x384xbf16>
    %6 = vector.shape_cast %5 : vector<1x16x384xbf16> to vector<16x384xbf16>
    %c1_7 = arith.constant 1 : index
    %c0_8 = arith.constant 0 : index
    %c0_9 = arith.constant 0 : index
    %7 = vector.load %arg3[%c1_7, %c0_8, %c0_9] : memref<9x16x16xbf16, #tpu.memory_space<vmem>>, vector<1x16x16xbf16>
    %8 = vector.shape_cast %7 : vector<1x16x16xbf16> to vector<16x16xbf16>
    %cst_10 = arith.constant dense<0.000000e+00> : vector<16x384xf32>
    %9 = tpu.matmul %8, %6, %cst_10 {dimension_numbers = #tpu.dot_dimension_numbers<[1], [0], [0], [1], [0, 0, 1, 1], [], []>} : vector<16x16xbf16>, vector<16x384xbf16>, vector<16x384xf32> -> vector<16x384xf32>
    %10 = arith.addf %4, %9 : vector<16x384xf32>
    %c0_11 = arith.constant 0 : index
    %c0_12 = arith.constant 0 : index
    %c2 = arith.constant 2 : index
    %11 = vector.load %arg2[%c0_11, %c0_12, %c2] : memref<1x16x422xbf16, #tpu.memory_space<vmem>>, vector<1x16x384xbf16>
    %12 = vector.shape_cast %11 : vector<1x16x384xbf16> to vector<16x384xbf16>
    %c2_13 = arith.constant 2 : index
    %c0_14 = arith.constant 0 : index
    %c0_15 = arith.constant 0 : index
    %13 = vector.load %arg3[%c2_13, %c0_14, %c0_15] : memref<9x16x16xbf16, #tpu.memory_space<vmem>>, vector<1x16x16xbf16>
    %14 = vector.shape_cast %13 : vector<1x16x16xbf16> to vector<16x16xbf16>
    %cst_16 = arith.constant dense<0.000000e+00> : vector<16x384xf32>
    %15 = tpu.matmul %14, %12, %cst_16 {dimension_numbers = #tpu.dot_dimension_numbers<[1], [0], [0], [1], [0, 0, 1, 1], [], []>} : vector<16x16xbf16>, vector<16x384xbf16>, vector<16x384xf32> -> vector<16x384xf32>
    %16 = arith.addf %10, %15 : vector<16x384xf32>
    %c0_17 = arith.constant 0 : index
    %c0_18 = arith.constant 0 : index
    %c18 = arith.constant 18 : index
    %17 = vector.load %arg2[%c0_17, %c0_18, %c18] : memref<1x16x422xbf16, #tpu.memory_space<vmem>>, vector<1x16x384xbf16>
    %18 = vector.shape_cast %17 : vector<1x16x384xbf16> to vector<16x384xbf16>
    %c3 = arith.constant 3 : index
    %c0_19 = arith.constant 0 : index
    %c0_20 = arith.constant 0 : index
    %19 = vector.load %arg3[%c3, %c0_19, %c0_20] : memref<9x16x16xbf16, #tpu.memory_space<vmem>>, vector<1x16x16xbf16>
    %20 = vector.shape_cast %19 : vector<1x16x16xbf16> to vector<16x16xbf16>
    %cst_21 = arith.constant dense<0.000000e+00> : vector<16x384xf32>
    %21 = tpu.matmul %20, %18, %cst_21 {dimension_numbers = #tpu.dot_dimension_numbers<[1], [0], [0], [1], [0, 0, 1, 1], [], []>} : vector<16x16xbf16>, vector<16x384xbf16>, vector<16x384xf32> -> vector<16x384xf32>
    %22 = arith.addf %16, %21 : vector<16x384xf32>
    %c0_22 = arith.constant 0 : index
    %c0_23 = arith.constant 0 : index
    %c19 = arith.constant 19 : index
    %23 = vector.load %arg2[%c0_22, %c0_23, %c19] : memref<1x16x422xbf16, #tpu.memory_space<vmem>>, vector<1x16x384xbf16>
    %24 = vector.shape_cast %23 : vector<1x16x384xbf16> to vector<16x384xbf16>
    %c4 = arith.constant 4 : index
    %c0_24 = arith.constant 0 : index
    %c0_25 = arith.constant 0 : index
    %25 = vector.load %arg3[%c4, %c0_24, %c0_25] : memref<9x16x16xbf16, #tpu.memory_space<vmem>>, vector<1x16x16xbf16>
    %26 = vector.shape_cast %25 : vector<1x16x16xbf16> to vector<16x16xbf16>
    %cst_26 = arith.constant dense<0.000000e+00> : vector<16x384xf32>
    %27 = tpu.matmul %26, %24, %cst_26 {dimension_numbers = #tpu.dot_dimension_numbers<[1], [0], [0], [1], [0, 0, 1, 1], [], []>} : vector<16x16xbf16>, vector<16x384xbf16>, vector<16x384xf32> -> vector<16x384xf32>
    %28 = arith.addf %22, %27 : vector<16x384xf32>
    %c0_27 = arith.constant 0 : index
    %c0_28 = arith.constant 0 : index
    %c20 = arith.constant 20 : index
    %29 = vector.load %arg2[%c0_27, %c0_28, %c20] : memref<1x16x422xbf16, #tpu.memory_space<vmem>>, vector<1x16x384xbf16>
    %30 = vector.shape_cast %29 : vector<1x16x384xbf16> to vector<16x384xbf16>
    %c5 = arith.constant 5 : index
    %c0_29 = arith.constant 0 : index
    %c0_30 = arith.constant 0 : index
    %31 = vector.load %arg3[%c5, %c0_29, %c0_30] : memref<9x16x16xbf16, #tpu.memory_space<vmem>>, vector<1x16x16xbf16>
    %32 = vector.shape_cast %31 : vector<1x16x16xbf16> to vector<16x16xbf16>
    %cst_31 = arith.constant dense<0.000000e+00> : vector<16x384xf32>
    %33 = tpu.matmul %32, %30, %cst_31 {dimension_numbers = #tpu.dot_dimension_numbers<[1], [0], [0], [1], [0, 0, 1, 1], [], []>} : vector<16x16xbf16>, vector<16x384xbf16>, vector<16x384xf32> -> vector<16x384xf32>
    %34 = arith.addf %28, %33 : vector<16x384xf32>
    %c0_32 = arith.constant 0 : index
    %c0_33 = arith.constant 0 : index
    %c36 = arith.constant 36 : index
    %35 = vector.load %arg2[%c0_32, %c0_33, %c36] : memref<1x16x422xbf16, #tpu.memory_space<vmem>>, vector<1x16x384xbf16>
    %36 = vector.shape_cast %35 : vector<1x16x384xbf16> to vector<16x384xbf16>
    %c6 = arith.constant 6 : index
    %c0_34 = arith.constant 0 : index
    %c0_35 = arith.constant 0 : index
    %37 = vector.load %arg3[%c6, %c0_34, %c0_35] : memref<9x16x16xbf16, #tpu.memory_space<vmem>>, vector<1x16x16xbf16>
    %38 = vector.shape_cast %37 : vector<1x16x16xbf16> to vector<16x16xbf16>
    %cst_36 = arith.constant dense<0.000000e+00> : vector<16x384xf32>
    %39 = tpu.matmul %38, %36, %cst_36 {dimension_numbers = #tpu.dot_dimension_numbers<[1], [0], [0], [1], [0, 0, 1, 1], [], []>} : vector<16x16xbf16>, vector<16x384xbf16>, vector<16x384xf32> -> vector<16x384xf32>
    %40 = arith.addf %34, %39 : vector<16x384xf32>
    %c0_37 = arith.constant 0 : index
    %c0_38 = arith.constant 0 : index
    %c37 = arith.constant 37 : index
    %41 = vector.load %arg2[%c0_37, %c0_38, %c37] : memref<1x16x422xbf16, #tpu.memory_space<vmem>>, vector<1x16x384xbf16>
    %42 = vector.shape_cast %41 : vector<1x16x384xbf16> to vector<16x384xbf16>
    %c7 = arith.constant 7 : index
    %c0_39 = arith.constant 0 : index
    %c0_40 = arith.constant 0 : index
    %43 = vector.load %arg3[%c7, %c0_39, %c0_40] : memref<9x16x16xbf16, #tpu.memory_space<vmem>>, vector<1x16x16xbf16>
    %44 = vector.shape_cast %43 : vector<1x16x16xbf16> to vector<16x16xbf16>
    %cst_41 = arith.constant dense<0.000000e+00> : vector<16x384xf32>
    %45 = tpu.matmul %44, %42, %cst_41 {dimension_numbers = #tpu.dot_dimension_numbers<[1], [0], [0], [1], [0, 0, 1, 1], [], []>} : vector<16x16xbf16>, vector<16x384xbf16>, vector<16x384xf32> -> vector<16x384xf32>
    %46 = arith.addf %40, %45 : vector<16x384xf32>
    %c0_42 = arith.constant 0 : index
    %c0_43 = arith.constant 0 : index
    %c38 = arith.constant 38 : index
    %47 = vector.load %arg2[%c0_42, %c0_43, %c38] : memref<1x16x422xbf16, #tpu.memory_space<vmem>>, vector<1x16x384xbf16>
    %48 = vector.shape_cast %47 : vector<1x16x384xbf16> to vector<16x384xbf16>
    %c8 = arith.constant 8 : index
    %c0_44 = arith.constant 0 : index
    %c0_45 = arith.constant 0 : index
    %49 = vector.load %arg3[%c8, %c0_44, %c0_45] : memref<9x16x16xbf16, #tpu.memory_space<vmem>>, vector<1x16x16xbf16>
    %50 = vector.shape_cast %49 : vector<1x16x16xbf16> to vector<16x16xbf16>
    %cst_46 = arith.constant dense<0.000000e+00> : vector<16x384xf32>
    %51 = tpu.matmul %50, %48, %cst_46 {dimension_numbers = #tpu.dot_dimension_numbers<[1], [0], [0], [1], [0, 0, 1, 1], [], []>} : vector<16x16xbf16>, vector<16x384xbf16>, vector<16x384xf32> -> vector<16x384xf32>
    %52 = arith.addf %46, %51 : vector<16x384xf32>
    %c0_47 = arith.constant 0 : index
    %c0_48 = arith.constant 0 : index
    %53 = vector.load %arg4[%c0_47, %c0_48] : memref<16x1xf32, #tpu.memory_space<vmem>>, vector<16x1xf32>
    %54 = vector.broadcast %53 : vector<16x1xf32> to vector<16x384xf32>
    %55 = arith.addf %52, %54 : vector<16x384xf32>
    %cst_49 = arith.constant 0.000000e+00 : f32
    %56 = vector.broadcast %cst_49 : f32 to vector<16x384xf32>
    %57 = arith.cmpf oge, %55, %56 : vector<16x384xf32>
    %cst_50 = arith.constant 2.000000e-01 : f32
    %58 = vector.broadcast %cst_50 : f32 to vector<16x384xf32>
    %59 = arith.mulf %58, %55 : vector<16x384xf32>
    %60 = arith.select %57, %55, %59 : vector<16x384xi1>, vector<16x384xf32>
    %cst_51 = arith.constant 1.41421354 : f32
    %61 = vector.broadcast %cst_51 : f32 to vector<16x384xf32>
    %62 = arith.mulf %60, %61 : vector<16x384xf32>
    %63 = arith.truncf %62 : vector<16x384xf32> to vector<16x384xbf16>
    %c0_52 = arith.constant 0 : index
    %c0_53 = arith.constant 0 : index
    %c0_54 = arith.constant 0 : index
    %64 = vector.load %arg5[%c0_52, %c0_53, %c0_54] : memref<1x16x384xbf16, #tpu.memory_space<vmem>>, vector<1x16x384xbf16>
    %65 = vector.shape_cast %64 : vector<1x16x384xbf16> to vector<16x384xbf16>
    %66 = vector.shape_cast %63 : vector<16x384xbf16> to vector<1x16x384xbf16>
    tpu.vector_store %arg5[%c0_52, %c0_53, %c0_54], %66 {strides = array<i32>} : memref<1x16x384xbf16, #tpu.memory_space<vmem>>, vector<1x16x384xbf16>,
    return
  }
  func.func @transform_0(%arg0: i32, %arg1: i32) -> (i32, i32, i32) {
    %c0_i32 = arith.constant 0 : i32
    %c0_i32_0 = arith.constant 0 : i32
    %c0_i32_1 = arith.constant 0 : i32
    return %arg0, %c0_i32, %c0_i32_0 : i32, i32, i32
  }
  func.func @transform_1(%arg0: i32, %arg1: i32) -> (i32, i32, i32) {
    %c0_i32 = arith.constant 0 : i32
    %c0_i32_0 = arith.constant 0 : i32
    %c0_i32_1 = arith.constant 0 : i32
    return %c0_i32, %arg1, %c0_i32_0 : i32, i32, i32
  }
  func.func @transform_2(%arg0: i32, %arg1: i32) -> (i32, i32) {
    %c0_i32 = arith.constant 0 : i32
    %c0_i32_0 = arith.constant 0 : i32
    return %arg1, %c0_i32 : i32, i32
  }
  func.func @transform_3(%arg0: i32, %arg1: i32) -> (i32, i32, i32) {
    %c0_i32 = arith.constant 0 : i32
    %c0_i32_0 = arith.constant 0 : i32
    return %arg0, %arg1, %c0_i32 : i32, i32, i32
  }
}

module attributes {stable_mosaic.version = 11 : i64} {
  func.func @kernel(%arg0: i32, %arg1: i32, %arg2: memref<1x64x150xbf16, #tpu.memory_space<vmem>>, %arg3: memref<9x16x64xbf16, #tpu.memory_space<vmem>>, %arg4: memref<16x1xf32, #tpu.memory_space<vmem>>, %arg5: memref<1x16x128xf32, #tpu.memory_space<vmem>>) attributes {dimension_semantics = [#tpu.dimension_semantics<parallel>, #tpu.dimension_semantics<parallel>], iteration_bounds = array<i64: 2, 1>, scalar_prefetch = 0 : i64, scratch_operands = 0 : i64, tpu.core_type = #tpu.core_type<tc>, window_params = [{transform_indices = @transform_0, window_bounds = array<i64: 1, 64, 150>}, {transform_indices = @transform_1, window_bounds = array<i64: 9, 16, 64>}, {transform_indices = @transform_2, window_bounds = array<i64: 16, 1>}, {transform_indices = @transform_3, window_bounds = array<i64: 1, 16, 128>}]} {
    %c0 = arith.constant 0 : index
    %c0_0 = arith.constant 0 : index
    %c0_1 = arith.constant 0 : index
    %0 = vector.load %arg2[%c0, %c0_0, %c0_1] : memref<1x64x150xbf16, #tpu.memory_space<vmem>>, vector<1x64x128xbf16>
    %1 = vector.shape_cast %0 : vector<1x64x128xbf16> to vector<64x128xbf16>
    %c0_2 = arith.constant 0 : index
    %c0_3 = arith.constant 0 : index
    %c0_4 = arith.constant 0 : index
    %2 = vector.load %arg3[%c0_2, %c0_3, %c0_4] : memref<9x16x64xbf16, #tpu.memory_space<vmem>>, vector<1x16x64xbf16>
    %3 = vector.shape_cast %2 : vector<1x16x64xbf16> to vector<16x64xbf16>
    %cst = arith.constant dense<0.000000e+00> : vector<16x128xf32>
    %4 = tpu.matmul %3, %1, %cst {dimension_numbers = #tpu.dot_dimension_numbers<[1], [0], [0], [1], [0, 0, 1, 1], [], []>} : vector<16x64xbf16>, vector<64x128xbf16>, vector<16x128xf32> -> vector<16x128xf32>
    %c0_5 = arith.constant 0 : index
    %c0_6 = arith.constant 0 : index
    %c1 = arith.constant 1 : index
    %5 = vector.load %arg2[%c0_5, %c0_6, %c1] : memref<1x64x150xbf16, #tpu.memory_space<vmem>>, vector<1x64x128xbf16>
    %6 = vector.shape_cast %5 : vector<1x64x128xbf16> to vector<64x128xbf16>
    %c1_7 = arith.constant 1 : index
    %c0_8 = arith.constant 0 : index
    %c0_9 = arith.constant 0 : index
    %7 = vector.load %arg3[%c1_7, %c0_8, %c0_9] : memref<9x16x64xbf16, #tpu.memory_space<vmem>>, vector<1x16x64xbf16>
    %8 = vector.shape_cast %7 : vector<1x16x64xbf16> to vector<16x64xbf16>
    %cst_10 = arith.constant dense<0.000000e+00> : vector<16x128xf32>
    %9 = tpu.matmul %8, %6, %cst_10 {dimension_numbers = #tpu.dot_dimension_numbers<[1], [0], [0], [1], [0, 0, 1, 1], [], []>} : vector<16x64xbf16>, vector<64x128xbf16>, vector<16x128xf32> -> vector<16x128xf32>
    %10 = arith.addf %4, %9 : vector<16x128xf32>
    %c0_11 = arith.constant 0 : index
    %c0_12 = arith.constant 0 : index
    %c2 = arith.constant 2 : index
    %11 = vector.load %arg2[%c0_11, %c0_12, %c2] : memref<1x64x150xbf16, #tpu.memory_space<vmem>>, vector<1x64x128xbf16>
    %12 = vector.shape_cast %11 : vector<1x64x128xbf16> to vector<64x128xbf16>
    %c2_13 = arith.constant 2 : index
    %c0_14 = arith.constant 0 : index
    %c0_15 = arith.constant 0 : index
    %13 = vector.load %arg3[%c2_13, %c0_14, %c0_15] : memref<9x16x64xbf16, #tpu.memory_space<vmem>>, vector<1x16x64xbf16>
    %14 = vector.shape_cast %13 : vector<1x16x64xbf16> to vector<16x64xbf16>
    %cst_16 = arith.constant dense<0.000000e+00> : vector<16x128xf32>
    %15 = tpu.matmul %14, %12, %cst_16 {dimension_numbers = #tpu.dot_dimension_numbers<[1], [0], [0], [1], [0, 0, 1, 1], [], []>} : vector<16x64xbf16>, vector<64x128xbf16>, vector<16x128xf32> -> vector<16x128xf32>
    %16 = arith.addf %10, %15 : vector<16x128xf32>
    %c0_17 = arith.constant 0 : index
    %c0_18 = arith.constant 0 : index
    %c10 = arith.constant 10 : index
    %17 = vector.load %arg2[%c0_17, %c0_18, %c10] : memref<1x64x150xbf16, #tpu.memory_space<vmem>>, vector<1x64x128xbf16>
    %18 = vector.shape_cast %17 : vector<1x64x128xbf16> to vector<64x128xbf16>
    %c3 = arith.constant 3 : index
    %c0_19 = arith.constant 0 : index
    %c0_20 = arith.constant 0 : index
    %19 = vector.load %arg3[%c3, %c0_19, %c0_20] : memref<9x16x64xbf16, #tpu.memory_space<vmem>>, vector<1x16x64xbf16>
    %20 = vector.shape_cast %19 : vector<1x16x64xbf16> to vector<16x64xbf16>
    %cst_21 = arith.constant dense<0.000000e+00> : vector<16x128xf32>
    %21 = tpu.matmul %20, %18, %cst_21 {dimension_numbers = #tpu.dot_dimension_numbers<[1], [0], [0], [1], [0, 0, 1, 1], [], []>} : vector<16x64xbf16>, vector<64x128xbf16>, vector<16x128xf32> -> vector<16x128xf32>
    %22 = arith.addf %16, %21 : vector<16x128xf32>
    %c0_22 = arith.constant 0 : index
    %c0_23 = arith.constant 0 : index
    %c11 = arith.constant 11 : index
    %23 = vector.load %arg2[%c0_22, %c0_23, %c11] : memref<1x64x150xbf16, #tpu.memory_space<vmem>>, vector<1x64x128xbf16>
    %24 = vector.shape_cast %23 : vector<1x64x128xbf16> to vector<64x128xbf16>
    %c4 = arith.constant 4 : index
    %c0_24 = arith.constant 0 : index
    %c0_25 = arith.constant 0 : index
    %25 = vector.load %arg3[%c4, %c0_24, %c0_25] : memref<9x16x64xbf16, #tpu.memory_space<vmem>>, vector<1x16x64xbf16>
    %26 = vector.shape_cast %25 : vector<1x16x64xbf16> to vector<16x64xbf16>
    %cst_26 = arith.constant dense<0.000000e+00> : vector<16x128xf32>
    %27 = tpu.matmul %26, %24, %cst_26 {dimension_numbers = #tpu.dot_dimension_numbers<[1], [0], [0], [1], [0, 0, 1, 1], [], []>} : vector<16x64xbf16>, vector<64x128xbf16>, vector<16x128xf32> -> vector<16x128xf32>
    %28 = arith.addf %22, %27 : vector<16x128xf32>
    %c0_27 = arith.constant 0 : index
    %c0_28 = arith.constant 0 : index
    %c12 = arith.constant 12 : index
    %29 = vector.load %arg2[%c0_27, %c0_28, %c12] : memref<1x64x150xbf16, #tpu.memory_space<vmem>>, vector<1x64x128xbf16>
    %30 = vector.shape_cast %29 : vector<1x64x128xbf16> to vector<64x128xbf16>
    %c5 = arith.constant 5 : index
    %c0_29 = arith.constant 0 : index
    %c0_30 = arith.constant 0 : index
    %31 = vector.load %arg3[%c5, %c0_29, %c0_30] : memref<9x16x64xbf16, #tpu.memory_space<vmem>>, vector<1x16x64xbf16>
    %32 = vector.shape_cast %31 : vector<1x16x64xbf16> to vector<16x64xbf16>
    %cst_31 = arith.constant dense<0.000000e+00> : vector<16x128xf32>
    %33 = tpu.matmul %32, %30, %cst_31 {dimension_numbers = #tpu.dot_dimension_numbers<[1], [0], [0], [1], [0, 0, 1, 1], [], []>} : vector<16x64xbf16>, vector<64x128xbf16>, vector<16x128xf32> -> vector<16x128xf32>
    %34 = arith.addf %28, %33 : vector<16x128xf32>
    %c0_32 = arith.constant 0 : index
    %c0_33 = arith.constant 0 : index
    %c20 = arith.constant 20 : index
    %35 = vector.load %arg2[%c0_32, %c0_33, %c20] : memref<1x64x150xbf16, #tpu.memory_space<vmem>>, vector<1x64x128xbf16>
    %36 = vector.shape_cast %35 : vector<1x64x128xbf16> to vector<64x128xbf16>
    %c6 = arith.constant 6 : index
    %c0_34 = arith.constant 0 : index
    %c0_35 = arith.constant 0 : index
    %37 = vector.load %arg3[%c6, %c0_34, %c0_35] : memref<9x16x64xbf16, #tpu.memory_space<vmem>>, vector<1x16x64xbf16>
    %38 = vector.shape_cast %37 : vector<1x16x64xbf16> to vector<16x64xbf16>
    %cst_36 = arith.constant dense<0.000000e+00> : vector<16x128xf32>
    %39 = tpu.matmul %38, %36, %cst_36 {dimension_numbers = #tpu.dot_dimension_numbers<[1], [0], [0], [1], [0, 0, 1, 1], [], []>} : vector<16x64xbf16>, vector<64x128xbf16>, vector<16x128xf32> -> vector<16x128xf32>
    %40 = arith.addf %34, %39 : vector<16x128xf32>
    %c0_37 = arith.constant 0 : index
    %c0_38 = arith.constant 0 : index
    %c21 = arith.constant 21 : index
    %41 = vector.load %arg2[%c0_37, %c0_38, %c21] : memref<1x64x150xbf16, #tpu.memory_space<vmem>>, vector<1x64x128xbf16>
    %42 = vector.shape_cast %41 : vector<1x64x128xbf16> to vector<64x128xbf16>
    %c7 = arith.constant 7 : index
    %c0_39 = arith.constant 0 : index
    %c0_40 = arith.constant 0 : index
    %43 = vector.load %arg3[%c7, %c0_39, %c0_40] : memref<9x16x64xbf16, #tpu.memory_space<vmem>>, vector<1x16x64xbf16>
    %44 = vector.shape_cast %43 : vector<1x16x64xbf16> to vector<16x64xbf16>
    %cst_41 = arith.constant dense<0.000000e+00> : vector<16x128xf32>
    %45 = tpu.matmul %44, %42, %cst_41 {dimension_numbers = #tpu.dot_dimension_numbers<[1], [0], [0], [1], [0, 0, 1, 1], [], []>} : vector<16x64xbf16>, vector<64x128xbf16>, vector<16x128xf32> -> vector<16x128xf32>
    %46 = arith.addf %40, %45 : vector<16x128xf32>
    %c0_42 = arith.constant 0 : index
    %c0_43 = arith.constant 0 : index
    %c22 = arith.constant 22 : index
    %47 = vector.load %arg2[%c0_42, %c0_43, %c22] : memref<1x64x150xbf16, #tpu.memory_space<vmem>>, vector<1x64x128xbf16>
    %48 = vector.shape_cast %47 : vector<1x64x128xbf16> to vector<64x128xbf16>
    %c8 = arith.constant 8 : index
    %c0_44 = arith.constant 0 : index
    %c0_45 = arith.constant 0 : index
    %49 = vector.load %arg3[%c8, %c0_44, %c0_45] : memref<9x16x64xbf16, #tpu.memory_space<vmem>>, vector<1x16x64xbf16>
    %50 = vector.shape_cast %49 : vector<1x16x64xbf16> to vector<16x64xbf16>
    %cst_46 = arith.constant dense<0.000000e+00> : vector<16x128xf32>
    %51 = tpu.matmul %50, %48, %cst_46 {dimension_numbers = #tpu.dot_dimension_numbers<[1], [0], [0], [1], [0, 0, 1, 1], [], []>} : vector<16x64xbf16>, vector<64x128xbf16>, vector<16x128xf32> -> vector<16x128xf32>
    %52 = arith.addf %46, %51 : vector<16x128xf32>
    %c0_47 = arith.constant 0 : index
    %c0_48 = arith.constant 0 : index
    %53 = vector.load %arg4[%c0_47, %c0_48] : memref<16x1xf32, #tpu.memory_space<vmem>>, vector<16x1xf32>
    %54 = vector.broadcast %53 : vector<16x1xf32> to vector<16x128xf32>
    %55 = arith.addf %52, %54 : vector<16x128xf32>
    %cst_49 = arith.constant 0.000000e+00 : f32
    %56 = vector.broadcast %cst_49 : f32 to vector<16x128xf32>
    %57 = arith.cmpf oge, %55, %56 : vector<16x128xf32>
    %cst_50 = arith.constant 2.000000e-01 : f32
    %58 = vector.broadcast %cst_50 : f32 to vector<16x128xf32>
    %59 = arith.mulf %58, %55 : vector<16x128xf32>
    %60 = arith.select %57, %55, %59 : vector<16x128xi1>, vector<16x128xf32>
    %cst_51 = arith.constant 1.41421354 : f32
    %61 = vector.broadcast %cst_51 : f32 to vector<16x128xf32>
    %62 = arith.mulf %60, %61 : vector<16x128xf32>
    %c0_52 = arith.constant 0 : index
    %c0_53 = arith.constant 0 : index
    %c0_54 = arith.constant 0 : index
    %63 = vector.load %arg5[%c0_52, %c0_53, %c0_54] : memref<1x16x128xf32, #tpu.memory_space<vmem>>, vector<1x16x128xf32>
    %64 = vector.shape_cast %63 : vector<1x16x128xf32> to vector<16x128xf32>
    %65 = vector.shape_cast %62 : vector<16x128xf32> to vector<1x16x128xf32>
    tpu.vector_store %arg5[%c0_52, %c0_53, %c0_54], %65 {strides = array<i32>} : memref<1x16x128xf32, #tpu.memory_space<vmem>>, vector<1x16x128xf32>,
    return
  }
  func.func @transform_0(%arg0: i32, %arg1: i32) -> (i32, i32, i32) {
    %c0_i32 = arith.constant 0 : i32
    %c0_i32_0 = arith.constant 0 : i32
    %c0_i32_1 = arith.constant 0 : i32
    return %arg0, %c0_i32, %c0_i32_0 : i32, i32, i32
  }
  func.func @transform_1(%arg0: i32, %arg1: i32) -> (i32, i32, i32) {
    %c0_i32 = arith.constant 0 : i32
    %c0_i32_0 = arith.constant 0 : i32
    %c0_i32_1 = arith.constant 0 : i32
    return %c0_i32, %arg1, %c0_i32_0 : i32, i32, i32
  }
  func.func @transform_2(%arg0: i32, %arg1: i32) -> (i32, i32) {
    %c0_i32 = arith.constant 0 : i32
    %c0_i32_0 = arith.constant 0 : i32
    return %arg1, %c0_i32 : i32, i32
  }
  func.func @transform_3(%arg0: i32, %arg1: i32) -> (i32, i32, i32) {
    %c0_i32 = arith.constant 0 : i32
    %c0_i32_0 = arith.constant 0 : i32
    return %arg0, %arg1, %c0_i32 : i32, i32, i32
  }
}

module attributes {stable_mosaic.version = 11 : i64} {
  func.func @kernel(%arg0: i32, %arg1: i32, %arg2: memref<1x64x139xbf16, #tpu.memory_space<vmem>>, %arg3: memref<4x16x64xbf16, #tpu.memory_space<vmem>>, %arg4: memref<1x16x128xf32, #tpu.memory_space<vmem>>, %arg5: memref<1x16x128xf32, #tpu.memory_space<vmem>>) attributes {dimension_semantics = [#tpu.dimension_semantics<parallel>, #tpu.dimension_semantics<parallel>], iteration_bounds = array<i64: 2, 1>, scalar_prefetch = 0 : i64, scratch_operands = 0 : i64, tpu.core_type = #tpu.core_type<tc>, window_params = [{transform_indices = @transform_0, window_bounds = array<i64: 1, 64, 139>}, {transform_indices = @transform_1, window_bounds = array<i64: 4, 16, 64>}, {transform_indices = @transform_2, window_bounds = array<i64: 1, 16, 128>}, {transform_indices = @transform_3, window_bounds = array<i64: 1, 16, 128>}]} {
    %c0 = arith.constant 0 : index
    %c0_0 = arith.constant 0 : index
    %c0_1 = arith.constant 0 : index
    %0 = vector.load %arg2[%c0, %c0_0, %c0_1] : memref<1x64x139xbf16, #tpu.memory_space<vmem>>, vector<1x64x128xbf16>
    %1 = vector.shape_cast %0 : vector<1x64x128xbf16> to vector<64x128xbf16>
    %c0_2 = arith.constant 0 : index
    %c0_3 = arith.constant 0 : index
    %c0_4 = arith.constant 0 : index
    %2 = vector.load %arg3[%c0_2, %c0_3, %c0_4] : memref<4x16x64xbf16, #tpu.memory_space<vmem>>, vector<1x16x64xbf16>
    %3 = vector.shape_cast %2 : vector<1x16x64xbf16> to vector<16x64xbf16>
    %cst = arith.constant dense<0.000000e+00> : vector<16x128xf32>
    %4 = tpu.matmul %3, %1, %cst {dimension_numbers = #tpu.dot_dimension_numbers<[1], [0], [0], [1], [0, 0, 1, 1], [], []>} : vector<16x64xbf16>, vector<64x128xbf16>, vector<16x128xf32> -> vector<16x128xf32>
    %c0_5 = arith.constant 0 : index
    %c0_6 = arith.constant 0 : index
    %c1 = arith.constant 1 : index
    %5 = vector.load %arg2[%c0_5, %c0_6, %c1] : memref<1x64x139xbf16, #tpu.memory_space<vmem>>, vector<1x64x128xbf16>
    %6 = vector.shape_cast %5 : vector<1x64x128xbf16> to vector<64x128xbf16>
    %c1_7 = arith.constant 1 : index
    %c0_8 = arith.constant 0 : index
    %c0_9 = arith.constant 0 : index
    %7 = vector.load %arg3[%c1_7, %c0_8, %c0_9] : memref<4x16x64xbf16, #tpu.memory_space<vmem>>, vector<1x16x64xbf16>
    %8 = vector.shape_cast %7 : vector<1x16x64xbf16> to vector<16x64xbf16>
    %cst_10 = arith.constant dense<0.000000e+00> : vector<16x128xf32>
    %9 = tpu.matmul %8, %6, %cst_10 {dimension_numbers = #tpu.dot_dimension_numbers<[1], [0], [0], [1], [0, 0, 1, 1], [], []>} : vector<16x64xbf16>, vector<64x128xbf16>, vector<16x128xf32> -> vector<16x128xf32>
    %10 = arith.addf %4, %9 : vector<16x128xf32>
    %c0_11 = arith.constant 0 : index
    %c0_12 = arith.constant 0 : index
    %c10 = arith.constant 10 : index
    %11 = vector.load %arg2[%c0_11, %c0_12, %c10] : memref<1x64x139xbf16, #tpu.memory_space<vmem>>, vector<1x64x128xbf16>
    %12 = vector.shape_cast %11 : vector<1x64x128xbf16> to vector<64x128xbf16>
    %c2 = arith.constant 2 : index
    %c0_13 = arith.constant 0 : index
    %c0_14 = arith.constant 0 : index
    %13 = vector.load %arg3[%c2, %c0_13, %c0_14] : memref<4x16x64xbf16, #tpu.memory_space<vmem>>, vector<1x16x64xbf16>
    %14 = vector.shape_cast %13 : vector<1x16x64xbf16> to vector<16x64xbf16>
    %cst_15 = arith.constant dense<0.000000e+00> : vector<16x128xf32>
    %15 = tpu.matmul %14, %12, %cst_15 {dimension_numbers = #tpu.dot_dimension_numbers<[1], [0], [0], [1], [0, 0, 1, 1], [], []>} : vector<16x64xbf16>, vector<64x128xbf16>, vector<16x128xf32> -> vector<16x128xf32>
    %16 = arith.addf %10, %15 : vector<16x128xf32>
    %c0_16 = arith.constant 0 : index
    %c0_17 = arith.constant 0 : index
    %c11 = arith.constant 11 : index
    %17 = vector.load %arg2[%c0_16, %c0_17, %c11] : memref<1x64x139xbf16, #tpu.memory_space<vmem>>, vector<1x64x128xbf16>
    %18 = vector.shape_cast %17 : vector<1x64x128xbf16> to vector<64x128xbf16>
    %c3 = arith.constant 3 : index
    %c0_18 = arith.constant 0 : index
    %c0_19 = arith.constant 0 : index
    %19 = vector.load %arg3[%c3, %c0_18, %c0_19] : memref<4x16x64xbf16, #tpu.memory_space<vmem>>, vector<1x16x64xbf16>
    %20 = vector.shape_cast %19 : vector<1x16x64xbf16> to vector<16x64xbf16>
    %cst_20 = arith.constant dense<0.000000e+00> : vector<16x128xf32>
    %21 = tpu.matmul %20, %18, %cst_20 {dimension_numbers = #tpu.dot_dimension_numbers<[1], [0], [0], [1], [0, 0, 1, 1], [], []>} : vector<16x64xbf16>, vector<64x128xbf16>, vector<16x128xf32> -> vector<16x128xf32>
    %22 = arith.addf %16, %21 : vector<16x128xf32>
    %c0_21 = arith.constant 0 : index
    %c0_22 = arith.constant 0 : index
    %c0_23 = arith.constant 0 : index
    %23 = vector.load %arg4[%c0_21, %c0_22, %c0_23] : memref<1x16x128xf32, #tpu.memory_space<vmem>>, vector<1x16x128xf32>
    %24 = vector.shape_cast %23 : vector<1x16x128xf32> to vector<16x128xf32>
    %25 = arith.addf %22, %24 : vector<16x128xf32>
    %cst_24 = arith.constant 0.707106769 : f32
    %26 = vector.broadcast %cst_24 : f32 to vector<16x128xf32>
    %27 = arith.mulf %25, %26 : vector<16x128xf32>
    %c0_25 = arith.constant 0 : index
    %c0_26 = arith.constant 0 : index
    %c0_27 = arith.constant 0 : index
    %28 = vector.load %arg5[%c0_25, %c0_26, %c0_27] : memref<1x16x128xf32, #tpu.memory_space<vmem>>, vector<1x16x128xf32>
    %29 = vector.shape_cast %28 : vector<1x16x128xf32> to vector<16x128xf32>
    %30 = vector.shape_cast %27 : vector<16x128xf32> to vector<1x16x128xf32>
    tpu.vector_store %arg5[%c0_25, %c0_26, %c0_27], %30 {strides = array<i32>} : memref<1x16x128xf32, #tpu.memory_space<vmem>>, vector<1x16x128xf32>,
    return
  }
  func.func @transform_0(%arg0: i32, %arg1: i32) -> (i32, i32, i32) {
    %c0_i32 = arith.constant 0 : i32
    %c0_i32_0 = arith.constant 0 : i32
    %c0_i32_1 = arith.constant 0 : i32
    return %arg0, %c0_i32, %c0_i32_0 : i32, i32, i32
  }
  func.func @transform_1(%arg0: i32, %arg1: i32) -> (i32, i32, i32) {
    %c0_i32 = arith.constant 0 : i32
    %c0_i32_0 = arith.constant 0 : i32
    %c0_i32_1 = arith.constant 0 : i32
    return %c0_i32, %arg1, %c0_i32_0 : i32, i32, i32
  }
  func.func @transform_2(%arg0: i32, %arg1: i32) -> (i32, i32, i32) {
    %c0_i32 = arith.constant 0 : i32
    %c0_i32_0 = arith.constant 0 : i32
    return %arg0, %arg1, %c0_i32 : i32, i32, i32
  }
  func.func @transform_3(%arg0: i32, %arg1: i32) -> (i32, i32, i32) {
    %c0_i32 = arith.constant 0 : i32
    %c0_i32_0 = arith.constant 0 : i32
    return %arg0, %arg1, %c0_i32 : i32, i32, i32
  }
}

</mosaic_0001>

<llo_original>
// kernel: res_block_forward.3
$region0: #{res_block_forward.3}
  #allocation0 [shape = 'u32[]', space=smem, size = 0x4, offset = 0x4, fixed_abs, tag = 'smem constant byte address 0x4 - core index']
  #allocation1 [shape = 'u32[144,128]{1,0:T(1,128)}', space=vmem, size = 0x12000, scoped, tag = 'internal scratch']
  %s0 = inlined_call_operand.vmem [shape: bf16[2,16,422], index: 0, kind: input, shape index: {}]
  %s1 = inlined_call_operand.vmem [shape: bf16[9,16,16], index: 1, kind: input, shape index: {}]
  %s2 = inlined_call_operand.vmem [shape: f32[16,1], index: 2, kind: input, shape index: {}]
  %s3 = inlined_call_operand.vmem [shape: bf16[2,16,384], index: 3, kind: output, shape index: {}]
  %s4 = sld [smem:[#allocation0]]
  $region45: #{res_block_forward.3} parent=0
    _
  %s6 = ssub.s32 1, %s4
  %s7 = scalar_select 0, %s6, %s4
  loop: start=0, step=1, limit=4
  $region2: #{res_block_forward.3} parent=0 // loop_pre_header
    _
  $region3: #{res_block_forward.3} parent=0 // loop_header
    %s9 = sphi 0, %s13
    %p10 = scmp.ge.s32.totalorder %s9, 4
    %s16 = sphi 0, %s28
    %s17 = sphi 0, %s24
    %s18 = sphi 0, %s16
    %s19 = sphi 0, %s17
    %s20 = sphi 0, %s18
    %s21 = sphi 0, %s19
    %s31 = sphi 0, %s33
    %s34 = sphi 0, %s31
    %s35 = sphi 0, %s34
    %s51 = sphi 0, %s35
    %s57 = sphi 0, %s59
    %s60 = sphi 0, %s57
    %s61 = sphi 0, %s60
    %s77 = sphi 0, %s61
    %s83 = sphi 0, %s85
    %s86 = sphi 0, %s83
    %s87 = sphi 0, %s86
    %s103 = sphi 0, %s87
    %s111 = sphi 0, %s113
    %s114 = sphi 0, %s111
    %s115 = sphi 0, %s114
    %s131 = sphi 0, %s115
  $region4: #{res_block_forward.3} parent=0 // loop_header_branch
    %12 = sbr.rel (%p10) target = $region8
  $region5: #{res_block_forward.3} parent=0 // loop_body
    %s14 = ssub.s32 %s9, 1
    %s15 = ssub.s32 %s9, 2
    %s22 = sadd.s32 1, %s17
    %p23 = scmp.ge.s32.totalorder %s22, 1
    %s24 = scalar_select %p23, 0, %s22
    %s25 = sadd.s32 1, %s16
    %s26 = scalar_select %p23, %s25, %s16
    %p27 = scmp.ge.s32.totalorder %s26, 2
    %s28 = scalar_select %p27, 0, %s26
    %s29 = ssub.s32 %s16, %s28
    %p30 = scmp.eq.s32.totalorder %s29, 0
    %s32 = sadd.s32 %s31, 1
    %s33 = scalar_select %p30, %s31, %s32
    %p36 = pneg %p30
    %p37 = scmp.eq.s32.totalorder %s9, 1
    %p38 = por %p36, %p37
    %p39 = scmp.ne.s32.totalorder %s31, %s34
    %p40 = scmp.eq.s32.totalorder %s9, 0
    %p41 = por %p39, %p40
    %p42 = scmp.ne.s32.totalorder %s31, %s34
    %p43 = scmp.eq.s32.totalorder %s14, 1
    %p44 = por %p42, %p43
    %p45 = scmp.ne.s32.totalorder %s34, %s35
    %p46 = scmp.eq.s32.totalorder %s14, 0
    %p47 = por %p45, %p46
    %p48 = scmp.ne.s32.totalorder %s34, %s35
    %p49 = scmp.eq.s32.totalorder %s15, 1
    %p50 = por %p48, %p49
    %p52 = scmp.ne.s32.totalorder %s35, %s51
    %p53 = scmp.eq.s32.totalorder %s15, 0
    %p54 = por %p52, %p53
    %s55 = ssub.s32 %s17, %s24
    %p56 = scmp.eq.s32.totalorder %s55, 0
    %s58 = sadd.s32 %s57, 1
    %s59 = scalar_select %p56, %s57, %s58
    %p62 = pneg %p56
    %p63 = scmp.eq.s32.totalorder %s9, 1
    %p64 = por %p62, %p63
    %p65 = scmp.ne.s32.totalorder %s57, %s60
    %p66 = scmp.eq.s32.totalorder %s9, 0
    %p67 = por %p65, %p66
    %p68 = scmp.ne.s32.totalorder %s57, %s60
    %p69 = scmp.eq.s32.totalorder %s14, 1
    %p70 = por %p68, %p69
    %p71 = scmp.ne.s32.totalorder %s60, %s61
    %p72 = scmp.eq.s32.totalorder %s14, 0
    %p73 = por %p71, %p72
    %p74 = scmp.ne.s32.totalorder %s60, %s61
    %p75 = scmp.eq.s32.totalorder %s15, 1
    %p76 = por %p74, %p75
    %p78 = scmp.ne.s32.totalorder %s61, %s77
    %p79 = scmp.eq.s32.totalorder %s15, 0
    %p80 = por %p78, %p79
    %s81 = ssub.s32 %s17, %s24
    %p82 = scmp.eq.s32.totalorder %s81, 0
    %s84 = sadd.s32 %s83, 1
    %s85 = scalar_select %p82, %s83, %s84
    %p88 = pneg %p82
    %p89 = scmp.eq.s32.totalorder %s9, 1
    %p90 = por %p88, %p89
    %p91 = scmp.ne.s32.totalorder %s83, %s86
    %p92 = scmp.eq.s32.totalorder %s9, 0
    %p93 = por %p91, %p92
    %p94 = scmp.ne.s32.totalorder %s83, %s86
    %p95 = scmp.eq.s32.totalorder %s14, 1
    %p96 = por %p94, %p95
    %p97 = scmp.ne.s32.totalorder %s86, %s87
    %p98 = scmp.eq.s32.totalorder %s14, 0
    %p99 = por %p97, %p98
    %p100 = scmp.ne.s32.totalorder %s86, %s87
    %p101 = scmp.eq.s32.totalorder %s15, 1
    %p102 = por %p100, %p101
    %p104 = scmp.ne.s32.totalorder %s87, %s103
    %p105 = scmp.eq.s32.totalorder %s15, 0
    %p106 = por %p104, %p105
    %s107 = ssub.s32 %s16, %s28
    %s108 = ssub.s32 %s17, %s24
    %s109 = sor.u32 %s107, %s108
    %p110 = scmp.eq.s32.totalorder %s109, 0
    %s112 = sadd.s32 %s111, 1
    %s113 = scalar_select %p110, %s111, %s112
    %p116 = pneg %p110
    %p117 = scmp.eq.s32.totalorder %s9, 1
    %p118 = por %p116, %p117
    %p119 = scmp.ne.s32.totalorder %s111, %s114
    %p120 = scmp.eq.s32.totalorder %s9, 0
    %p121 = por %p119, %p120
    %p122 = scmp.ne.s32.totalorder %s111, %s114
    %p123 = scmp.eq.s32.totalorder %s14, 1
    %p124 = por %p122, %p123
    %p125 = scmp.ne.s32.totalorder %s114, %s115
    %p126 = scmp.eq.s32.totalorder %s14, 0
    %p127 = por %p125, %p126
    %p128 = scmp.ne.s32.totalorder %s114, %s115
    %p129 = scmp.eq.s32.totalorder %s15, 1
    %p130 = por %p128, %p129
    %p132 = scmp.ne.s32.totalorder %s115, %s131
    %p133 = scmp.eq.s32.totalorder %s15, 0
    %p134 = por %p132, %p133
    %p135 = scmp.le.s32.totalorder 1, %s9
    %p136 = scmp.lt.s32.totalorder %s9, 3
    %p137 = pnand %p135, %p136
    %p138 = pneg %p137
    // Predicated region
    $region9: #{res_block_forward.3} parent=5 // pred_check
      _
    $region10: #{res_block_forward.3} parent=5 // pred_check_branch
      %140 = sbr.rel (%p137) target = $region12
    $region11: #{res_block_forward.3} parent=5 // pred_region
      %s141 = ssub.s32 %s9, 1
      // Predicated region
      $region13: #{res_block_forward.3} parent=11 // pred_check
        %p142 = pneg %p73
      $region14: #{res_block_forward.3} parent=11 // pred_check_branch
        %144 = sbr.rel (%p142) target = $region16
      $region15: #{res_block_forward.3} parent=11 // pred_region
        %s145 = smul.u32 2, %s19
        %p146 = scmp.lt.s32.totalorder %s145, 1
        %s147 = scalar_select %p146, %s145, 1
        %s148 = smul.addr %s147, 4
        %s149 = scalar_lea.vmem %s1, %s148
        %s150 = smul.u32 2, %s19
      $region16: #{res_block_forward.3} parent=11 // pred_fallthru
        _
      // Predicated region
      $region17: #{res_block_forward.3} parent=11 // pred_check
        %p151 = pneg %p99
      $region18: #{res_block_forward.3} parent=11 // pred_check_branch
        %153 = sbr.rel (%p151) target = $region20
      $region19: #{res_block_forward.3} parent=11 // pred_region
        %s154 = smul.u32 2, %s19
        %p155 = scmp.lt.s32.totalorder %s154, 1
        %s156 = scalar_select %p155, %s154, 1
        %s157 = smul.addr %s156, 8
        %s158 = scalar_lea.vmem %s2, %s157
        %s159 = smul.u32 2, %s19
      $region20: #{res_block_forward.3} parent=11 // pred_fallthru
        _
    $region12: #{res_block_forward.3} parent=5 // pred_fallthru
      _
    %p160 = scmp.lt.s32.totalorder %s9, 2
    // Predicated region
    $region21: #{res_block_forward.3} parent=5 // pred_check
      %p161 = pneg %p160
    $region22: #{res_block_forward.3} parent=5 // pred_check_branch
      %163 = sbr.rel (%p161) target = $region24
    $region23: #{res_block_forward.3} parent=5 // pred_region
      // Predicated region
      $region25: #{res_block_forward.3} parent=23 // pred_check
        %p164 = pneg %p41
      $region26: #{res_block_forward.3} parent=23 // pred_check_branch
        %166 = sbr.rel (%p164) target = $region28
      $region27: #{res_block_forward.3} parent=23 // pred_region
        %p167 = scmp.lt.s32.totalorder %s16, 1
        %s168 = scalar_select %p167, %s16, 1
        %s169 = smul.addr %s168, 8
        %s170 = smul.addr %s169, 4
        %s171 = scalar_lea.vmem %s0, %s170
      $region28: #{res_block_forward.3} parent=23 // pred_fallthru
        _
    $region24: #{res_block_forward.3} parent=5 // pred_fallthru
      _
    %p172 = scmp.le.s32.totalorder 1, %s9
    %p173 = scmp.lt.s32.totalorder %s9, 3
    %p174 = pnand %p172, %p173
    %p175 = pneg %p174
    // Predicated region
    $region29: #{res_block_forward.3} parent=5 // pred_check
      _
    $region30: #{res_block_forward.3} parent=5 // pred_check_branch
      %177 = sbr.rel (%p174) target = $region32
    $region31: #{res_block_forward.3} parent=5 // pred_region
      %s178 = ssub.s32 %s9, 1
      %p179 = scmp.lt.s32.totalorder %s18, 1
      %s180 = scalar_select %p179, %s18, 1
      %s181 = smul.addr %s180, 8
      %s182 = smul.addr %s181, 4
      %s183 = scalar_lea.vmem %s0, %s182
      %p184 = pneg %p47
      %p185 = pneg %p44
      %s186 = smul.u32 2, %s19
      %p187 = scmp.lt.s32.totalorder %s186, 1
      %s188 = scalar_select %p187, %s186, 1
      %s189 = smul.addr %s188, 4
      %s190 = scalar_lea.vmem %s1, %s189
      %p191 = pneg %p73
      %p192 = pneg %p70
      %s193 = smul.u32 2, %s19
      %p194 = scmp.lt.s32.totalorder %s193, 1
      %s195 = scalar_select %p194, %s193, 1
      %s196 = smul.addr %s195, 8
      %s197 = scalar_lea.vmem %s2, %s196
      %p198 = pneg %p99
      %p199 = pneg %p96
      %p200 = pneg %p127
      %p201 = pneg %p124
      %s202 = smul.u32 2, %s19
      %p203 = scmp.lt.s32.totalorder %s18, 1
      %s204 = scalar_select %p203, %s18, 1
      %p205 = scmp.lt.s32.totalorder %s202, 1
      %s206 = scalar_select %p205, %s202, 1
      %s207 = smul.addr %s206, 3
      %s208 = smul.addr %s204, 6
      %s209 = sadd.s32 %s207, %s208
      %s210 = smul.addr %s209, 4
      %s211 = scalar_lea.vmem %s3, %s210
      %p212 = scmp.lt.s32.totalorder %s18, 1
      %s213 = scalar_select %p212, %s18, 1
      %s214 = smul.addr %s213, 8
      %s215 = smul.addr %s214, 4
      %s216 = scalar_lea.vmem %s0, %s215
      %s217 = smul.u32 2, %s19
      %p218 = scmp.lt.s32.totalorder %s217, 1
      %s219 = scalar_select %p218, %s217, 1
      %s220 = smul.addr %s219, 4
      %s221 = scalar_lea.vmem %s1, %s220
      %s222 = smul.u32 2, %s19
      %s223 = smul.u32 2, %s19
      %p224 = scmp.lt.s32.totalorder %s223, 1
      %s225 = scalar_select %p224, %s223, 1
      %s226 = smul.addr %s225, 8
      %s227 = scalar_lea.vmem %s2, %s226
      %s228 = smul.u32 2, %s19
      %s229 = smul.u32 2, %s19
      %p230 = scmp.lt.s32.totalorder %s18, 1
      %s231 = scalar_select %p230, %s18, 1
      %p232 = scmp.lt.s32.totalorder %s229, 1
      %s233 = scalar_select %p232, %s229, 1
      %s234 = smul.addr %s233, 3
      %s235 = smul.addr %s231, 6
      %s236 = sadd.s32 %s234, %s235
      %s237 = smul.addr %s236, 4
      %s238 = scalar_lea.vmem %s3, %s237
      %s239 = smul.u32 2, %s19
      %v241 = vld [vmem:[%s216] sm:$0xff]
      %v242 = vld [vmem:[%s216 + $0x8] sm:$0xf]
      %v243 = vld [vmem:[%s216 + $0x10] sm:$0xff]
      %v244 = vld [vmem:[%s216 + $0x18] sm:$0xf]
      %v245 = vld [vmem:[%s221] sm:$0xf]
      %v246 = vld [vmem:[%s221 + $0x4] sm:$0xf]
      %v247 = vld [vmem:[%s216 + $0x8] sm:$0xff]
      %v248 = vld [vmem:[%s216 + $0x18] sm:$0xff]
      %s249 = scalar_lea.vmem %s221, 8
      %v250 = vld [vmem:[%s249] sm:$0xf]
      %v251 = vld [vmem:[%s249 + $0x4] sm:$0xf]
      %v254 = vunpack.c.l.b16 %v250
      %v255 = vunpack.c.l.b16 %v251
      %v256 = vpack.c.b16 %v255, %v254
      %v261 = vunpack.c.l.b16 %v241
      %v262 = vunpack.c.h.b16 %v241
      %v263 = vunpack.c.l.b16 %v247
      %v264 = vunpack.c.h.b16 %v247
      %v265 = vunpack.c.l.b16 %v243
      %v266 = vunpack.c.h.b16 %v243
      %v267 = vunpack.c.l.b16 %v248
      %v268 = vunpack.c.h.b16 %v248
      %v269 = vpack.c.b16 %v265, %v261
      %v270 = vpack.c.b16 %v266, %v262
      %v271 = vpack.c.b16 %v267, %v263
      %v272 = vpack.c.b16 %v268, %v264
      %273 = vrot.lane.b32.xlu0 %v269, 127
      %v274 = vpop.permute.xlu0 %273
      %275 = vrot.lane.b32.xlu0 %v270, 127
      %v276 = vpop.permute.xlu0 %275
      %277 = vrot.lane.b32.xlu0 %v271, 127
      %v278 = vpop.permute.xlu0 %277
      %279 = vrot.lane.b32.xlu0 %v272, 127
      %v280 = vpop.permute.xlu0 %279
      %vm281 = vcmask 1039360
      %v282 = vsel %vm281, %v274, %v276
      %v283 = vsel %vm281, %v276, %v278
      %v284 = vsel %vm281, %v278, %v280
      %vm288 = vcmask 130048
      %v290 = vsel %vm288, %v256, 0
      %292 = vmatprep.subr.bf16.mxu0 0
      %293 = vmatpush1.bf16.msra.mxu0 0
      %294 = vmatprep.subr.bf16.mxu0 0
      %295 = vmatpush1.bf16.msra.mxu0 0
      %296 = vmatprep.subr.bf16.mxu0 0
      %297 = vmatpush1.bf16.msra.mxu0 0
      %298 = vmatprep.subr.bf16.mxu0 0
      %299 = vmatpush1.bf16.msra.mxu0 0
      %300 = vmatprep.subr.bf16.mxu0 0
      %301 = vmatpush1.bf16.msra.mxu0 0
      %302 = vmatprep.subr.bf16.mxu0 0
      %303 = vmatpush1.bf16.msra.mxu0 0
      %304 = vmatprep.subr.bf16.mxu0 0
      %305 = vmatpush1.bf16.msra.mxu0 0
      %306 = vmatprep.subr.bf16.mxu0 %v283
      %307 = vmatpush1.bf16.msra.mxu0 %v282
      %308 = vmatprep.subr.bf16.mxu0 0
      %309 = vmatpush2.bf16.msra.mxu0 0
      %310 = vmatprep.subr.bf16.mxu0 0
      %311 = vmatpush2.bf16.msra.mxu0 0
      %312 = vmatprep.subr.bf16.mxu0 0
      %313 = vmatpush2.bf16.msra.mxu0 0
      %314 = vmatprep.subr.bf16.mxu0 0
      %315 = vmatpush2.bf16.msra.mxu0 0
      %316 = vmatprep.subr.bf16.mxu0 0
      %317 = vmatpush2.bf16.msra.mxu0 0
      %318 = vmatprep.subr.bf16.mxu0 0
      %319 = vmatpush2.bf16.msra.mxu0 0
      %320 = vmatprep.subr.bf16.mxu0 0
      %321 = vmatpush2.bf16.msra.mxu0 0
      %322 = vmatprep.subr.bf16.mxu0 0
      %323 = vmatpush2.bf16.msra.mxu0 0
      %324 = vmatprep.mubr.bf16.mxu0 0
      %325 = vmatmul.mubr.bf16.gmra.mxu0 %v290
      %v326 = vpop.f32.mrf.mxu0
      %v327 = vadd.f32 0.0, %v326
      %v328 = vpop.f32.mrf.mxu0
      %v329 = vadd.f32 0.0, %v328
      %v330 = vpop.f32.mrf.mxu0
      %v331 = vadd.f32 0.0, %v330
      %v332 = vpop.f32.mrf.mxu0
      %v333 = vadd.f32 0.0, %v332
      %334 = vdwg.mxu0
      %335 = vmatprep.subr.bf16.mxu0 0
      %336 = vmatpush1.bf16.msra.mxu0 0
      %337 = vmatprep.subr.bf16.mxu0 0
      %338 = vmatpush1.bf16.msra.mxu0 0
      %339 = vmatprep.subr.bf16.mxu0 0
      %340 = vmatpush1.bf16.msra.mxu0 0
      %341 = vmatprep.subr.bf16.mxu0 0
      %342 = vmatpush1.bf16.msra.mxu0 0
      %343 = vmatprep.subr.bf16.mxu0 0
      %344 = vmatpush1.bf16.msra.mxu0 0
      %345 = vmatprep.subr.bf16.mxu0 0
      %346 = vmatpush1.bf16.msra.mxu0 0
      %347 = vmatprep.subr.bf16.mxu0 0
      %348 = vmatpush1.bf16.msra.mxu0 0
      %349 = vmatprep.subr.bf16.mxu0 0
      %350 = vmatpush1.bf16.msra.mxu0 %v284
      %351 = vmatprep.subr.bf16.mxu0 0
      %352 = vmatpush2.bf16.msra.mxu0 0
      %353 = vmatprep.subr.bf16.mxu0 0
      %354 = vmatpush2.bf16.msra.mxu0 0
      %355 = vmatprep.subr.bf16.mxu0 0
      %356 = vmatpush2.bf16.msra.mxu0 0
      %357 = vmatprep.subr.bf16.mxu0 0
      %358 = vmatpush2.bf16.msra.mxu0 0
      %359 = vmatprep.subr.bf16.mxu0 0
      %360 = vmatpush2.bf16.msra.mxu0 0
      %361 = vmatprep.subr.bf16.mxu0 0
      %362 = vmatpush2.bf16.msra.mxu0 0
      %363 = vmatprep.subr.bf16.mxu0 0
      %364 = vmatpush2.bf16.msra.mxu0 0
      %365 = vmatprep.subr.bf16.mxu0 0
      %366 = vmatpush2.bf16.msra.mxu0 0
      %367 = vmatprep.mubr.bf16.mxu0 0
      %368 = vmatmul.mubr.bf16.gmra.mxu0 %v290
      %v369 = vpop.f32.mrf.mxu0
      %v370 = vadd.f32 0.0, %v369
      %v371 = vpop.f32.mrf.mxu0
      %v372 = vpop.f32.mrf.mxu0
      %v373 = vadd.f32 0.0, %v372
      %v374 = vpop.f32.mrf.mxu0
      %375 = vdwg.mxu0
      %v378 = vunpack.c.l.b16 %v245
      %v379 = vunpack.c.l.b16 %v246
      %v380 = vpack.c.b16 %v379, %v378
      %v383 = vunpack.c.l.b16 %v242
      %v384 = vunpack.c.l.b16 %v244
      %v385 = vpack.c.b16 %v384, %v383
      %v390 = vsel %vm288, %v380, 0
      %392 = vmatprep.subr.bf16.mxu0 0
      %393 = vmatpush1.bf16.msra.mxu0 0
      %394 = vmatprep.subr.bf16.mxu0 0
      %395 = vmatpush1.bf16.msra.mxu0 0
      %396 = vmatprep.subr.bf16.mxu0 0
      %397 = vmatpush1.bf16.msra.mxu0 0
      %398 = vmatprep.subr.bf16.mxu0 0
      %399 = vmatpush1.bf16.msra.mxu0 0
      %400 = vmatprep.subr.bf16.mxu0 0
      %401 = vmatpush1.bf16.msra.mxu0 0
      %402 = vmatprep.subr.bf16.mxu0 0
      %403 = vmatpush1.bf16.msra.mxu0 0
      %404 = vmatprep.subr.bf16.mxu0 0
      %405 = vmatpush1.bf16.msra.mxu0 0
      %406 = vmatprep.subr.bf16.mxu0 %v270
      %407 = vmatpush1.bf16.msra.mxu0 %v269
      %408 = vmatprep.subr.bf16.mxu0 0
      %409 = vmatpush2.bf16.msra.mxu0 0
      %410 = vmatprep.subr.bf16.mxu0 0
      %411 = vmatpush2.bf16.msra.mxu0 0
      %412 = vmatprep.subr.bf16.mxu0 0
      %413 = vmatpush2.bf16.msra.mxu0 0
      %414 = vmatprep.subr.bf16.mxu0 0
      %415 = vmatpush2.bf16.msra.mxu0 0
      %416 = vmatprep.subr.bf16.mxu0 0
      %417 = vmatpush2.bf16.msra.mxu0 0
      %418 = vmatprep.subr.bf16.mxu0 0
      %419 = vmatpush2.bf16.msra.mxu0 0
      %420 = vmatprep.subr.bf16.mxu0 0
      %421 = vmatpush2.bf16.msra.mxu0 0
      %422 = vmatprep.subr.bf16.mxu0 0
      %423 = vmatpush2.bf16.msra.mxu0 0
      %424 = vmatprep.mubr.bf16.mxu0 0
      %425 = vmatmul.mubr.bf16.gmra.mxu0 %v390
      %v426 = vpop.f32.mrf.mxu0
      %v427 = vadd.f32 %v327, %v426
      %v428 = vpop.f32.mrf.mxu0
      %v429 = vadd.f32 %v329, %v428
      %v430 = vpop.f32.mrf.mxu0
      %v431 = vadd.f32 %v331, %v430
      %v432 = vpop.f32.mrf.mxu0
      %v433 = vadd.f32 %v333, %v432
      %434 = vdwg.mxu0
      %435 = vmatprep.subr.bf16.mxu0 0
      %436 = vmatpush1.bf16.msra.mxu0 0
      %437 = vmatprep.subr.bf16.mxu0 0
      %438 = vmatpush1.bf16.msra.mxu0 0
      %439 = vmatprep.subr.bf16.mxu0 0
      %440 = vmatpush1.bf16.msra.mxu0 0
      %441 = vmatprep.subr.bf16.mxu0 0
      %442 = vmatpush1.bf16.msra.mxu0 0
      %443 = vmatprep.subr.bf16.mxu0 0
      %444 = vmatpush1.bf16.msra.mxu0 0
      %445 = vmatprep.subr.bf16.mxu0 0
      %446 = vmatpush1.bf16.msra.mxu0 0
      %447 = vmatprep.subr.bf16.mxu0 0
      %448 = vmatpush1.bf16.msra.mxu0 0
      %449 = vmatprep.subr.bf16.mxu0 0
      %450 = vmatpush1.bf16.msra.mxu0 %v385
      %451 = vmatprep.subr.bf16.mxu0 0
      %452 = vmatpush2.bf16.msra.mxu0 0
      %453 = vmatprep.subr.bf16.mxu0 0
      %454 = vmatpush2.bf16.msra.mxu0 0
      %455 = vmatprep.subr.bf16.mxu0 0
      %456 = vmatpush2.bf16.msra.mxu0 0
      %457 = vmatprep.subr.bf16.mxu0 0
      %458 = vmatpush2.bf16.msra.mxu0 0
      %459 = vmatprep.subr.bf16.mxu0 0
      %460 = vmatpush2.bf16.msra.mxu0 0
      %461 = vmatprep.subr.bf16.mxu0 0
      %462 = vmatpush2.bf16.msra.mxu0 0
      %463 = vmatprep.subr.bf16.mxu0 0
      %464 = vmatpush2.bf16.msra.mxu0 0
      %465 = vmatprep.subr.bf16.mxu0 0
      %466 = vmatpush2.bf16.msra.mxu0 0
      %467 = vmatprep.mubr.bf16.mxu0 0
      %468 = vmatmul.mubr.bf16.gmra.mxu0 %v390
      %v469 = vpop.f32.mrf.mxu0
      %v470 = vadd.f32 %v370, %v469
      %v471 = vpop.f32.mrf.mxu0
      %v472 = vpop.f32.mrf.mxu0
      %v473 = vadd.f32 %v373, %v472
      %v474 = vpop.f32.mrf.mxu0
      %475 = vdwg.mxu0
      %s476 = scalar_lea.vmem %s221, 16
      %v477 = vld [vmem:[%s476] sm:$0xf]
      %v478 = vld [vmem:[%s476 + $0x4] sm:$0xf]
      %v481 = vunpack.c.l.b16 %v477
      %v482 = vunpack.c.l.b16 %v478
      %v483 = vpack.c.b16 %v482, %v481
      %484 = vrot.lane.b32.xlu0 %v269, 126
      %v485 = vpop.permute.xlu0 %484
      %486 = vrot.lane.b32.xlu0 %v270, 126
      %v487 = vpop.permute.xlu0 %486
      %488 = vrot.lane.b32.xlu0 %v271, 126
      %v489 = vpop.permute.xlu0 %488
      %490 = vrot.lane.b32.xlu0 %v272, 126
      %v491 = vpop.permute.xlu0 %490
      %vm492 = vcmask 1031168
      %v493 = vsel %vm492, %v485, %v487
      %v494 = vsel %vm492, %v487, %v489
      %v495 = vsel %vm492, %v489, %v491
      %v500 = vsel %vm288, %v483, 0
      %502 = vmatprep.subr.bf16.mxu0 0
      %503 = vmatpush1.bf16.msra.mxu0 0
      %504 = vmatprep.subr.bf16.mxu0 0
      %505 = vmatpush1.bf16.msra.mxu0 0
      %506 = vmatprep.subr.bf16.mxu0 0
      %507 = vmatpush1.bf16.msra.mxu0 0
      %508 = vmatprep.subr.bf16.mxu0 0
      %509 = vmatpush1.bf16.msra.mxu0 0
      %510 = vmatprep.subr.bf16.mxu0 0
      %511 = vmatpush1.bf16.msra.mxu0 0
      %512 = vmatprep.subr.bf16.mxu0 0
      %513 = vmatpush1.bf16.msra.mxu0 0
      %514 = vmatprep.subr.bf16.mxu0 0
      %515 = vmatpush1.bf16.msra.mxu0 0
      %516 = vmatprep.subr.bf16.mxu0 %v494
      %517 = vmatpush1.bf16.msra.mxu0 %v493
      %518 = vmatprep.subr.bf16.mxu0 0
      %519 = vmatpush2.bf16.msra.mxu0 0
      %520 = vmatprep.subr.bf16.mxu0 0
      %521 = vmatpush2.bf16.msra.mxu0 0
      %522 = vmatprep.subr.bf16.mxu0 0
      %523 = vmatpush2.bf16.msra.mxu0 0
      %524 = vmatprep.subr.bf16.mxu0 0
      %525 = vmatpush2.bf16.msra.mxu0 0
      %526 = vmatprep.subr.bf16.mxu0 0
      %527 = vmatpush2.bf16.msra.mxu0 0
      %528 = vmatprep.subr.bf16.mxu0 0
      %529 = vmatpush2.bf16.msra.mxu0 0
      %530 = vmatprep.subr.bf16.mxu0 0
      %531 = vmatpush2.bf16.msra.mxu0 0
      %532 = vmatprep.subr.bf16.mxu0 0
      %533 = vmatpush2.bf16.msra.mxu0 0
      %534 = vmatprep.mubr.bf16.mxu0 0
      %535 = vmatmul.mubr.bf16.gmra.mxu0 %v500
      %v536 = vpop.f32.mrf.mxu0
      %v537 = vadd.f32 0.0, %v536
      %v538 = vpop.f32.mrf.mxu0
      %v539 = vadd.f32 0.0, %v538
      %v540 = vpop.f32.mrf.mxu0
      %v541 = vadd.f32 0.0, %v540
      %v542 = vpop.f32.mrf.mxu0
      %v543 = vadd.f32 0.0, %v542
      %544 = vdwg.mxu0
      %545 = vmatprep.subr.bf16.mxu0 0
      %546 = vmatpush1.bf16.msra.mxu0 0
      %547 = vmatprep.subr.bf16.mxu0 0
      %548 = vmatpush1.bf16.msra.mxu0 0
      %549 = vmatprep.subr.bf16.mxu0 0
      %550 = vmatpush1.bf16.msra.mxu0 0
      %551 = vmatprep.subr.bf16.mxu0 0
      %552 = vmatpush1.bf16.msra.mxu0 0
      %553 = vmatprep.subr.bf16.mxu0 0
      %554 = vmatpush1.bf16.msra.mxu0 0
      %555 = vmatprep.subr.bf16.mxu0 0
      %556 = vmatpush1.bf16.msra.mxu0 0
      %557 = vmatprep.subr.bf16.mxu0 0
      %558 = vmatpush1.bf16.msra.mxu0 0
      %559 = vmatprep.subr.bf16.mxu0 0
      %560 = vmatpush1.bf16.msra.mxu0 %v495
      %561 = vmatprep.subr.bf16.mxu0 0
      %562 = vmatpush2.bf16.msra.mxu0 0
      %563 = vmatprep.subr.bf16.mxu0 0
      %564 = vmatpush2.bf16.msra.mxu0 0
      %565 = vmatprep.subr.bf16.mxu0 0
      %566 = vmatpush2.bf16.msra.mxu0 0
      %567 = vmatprep.subr.bf16.mxu0 0
      %568 = vmatpush2.bf16.msra.mxu0 0
      %569 = vmatprep.subr.bf16.mxu0 0
      %570 = vmatpush2.bf16.msra.mxu0 0
      %571 = vmatprep.subr.bf16.mxu0 0
      %572 = vmatpush2.bf16.msra.mxu0 0
      %573 = vmatprep.subr.bf16.mxu0 0
      %574 = vmatpush2.bf16.msra.mxu0 0
      %575 = vmatprep.subr.bf16.mxu0 0
      %576 = vmatpush2.bf16.msra.mxu0 0
      %577 = vmatprep.mubr.bf16.mxu0 0
      %578 = vmatmul.mubr.bf16.gmra.mxu0 %v500
      %v579 = vpop.f32.mrf.mxu0
      %v580 = vadd.f32 0.0, %v579
      %v581 = vpop.f32.mrf.mxu0
      %v582 = vpop.f32.mrf.mxu0
      %v583 = vadd.f32 0.0, %v582
      %v584 = vpop.f32.mrf.mxu0
      %585 = vdwg.mxu0
      %v586 = vadd.f32 %v427, %v537
      %v587 = vadd.f32 %v429, %v539
      %v588 = vadd.f32 %v470, %v580
      %v589 = vadd.f32 %v431, %v541
      %v590 = vadd.f32 %v433, %v543
      %v591 = vadd.f32 %v473, %v583
      %s592 = scalar_lea.vmem %s221, 24
      %v593 = vld [vmem:[%s592] sm:$0xf]
      %v594 = vld [vmem:[%s592 + $0x4] sm:$0xf]
      %v597 = vunpack.c.l.b16 %v593
      %v598 = vunpack.c.l.b16 %v594
      %v599 = vpack.c.b16 %v598, %v597
      %600 = vrot.lane.b32.xlu0 %v269, 110
      %v601 = vpop.permute.xlu0 %600
      %602 = vrot.lane.b32.xlu0 %v270, 110
      %v603 = vpop.permute.xlu0 %602
      %604 = vrot.lane.b32.xlu0 %v271, 110
      %v605 = vpop.permute.xlu0 %604
      %606 = vrot.lane.b32.xlu0 %v272, 110
      %v607 = vpop.permute.xlu0 %606
      %vm608 = vcmask 900096
      %v609 = vsel %vm608, %v601, %v603
      %v610 = vsel %vm608, %v603, %v605
      %v611 = vsel %vm608, %v605, %v607
      %v616 = vsel %vm288, %v599, 0
      %618 = vmatprep.subr.bf16.mxu0 0
      %619 = vmatpush1.bf16.msra.mxu0 0
      %620 = vmatprep.subr.bf16.mxu0 0
      %621 = vmatpush1.bf16.msra.mxu0 0
      %622 = vmatprep.subr.bf16.mxu0 0
      %623 = vmatpush1.bf16.msra.mxu0 0
      %624 = vmatprep.subr.bf16.mxu0 0
      %625 = vmatpush1.bf16.msra.mxu0 0
      %626 = vmatprep.subr.bf16.mxu0 0
      %627 = vmatpush1.bf16.msra.mxu0 0
      %628 = vmatprep.subr.bf16.mxu0 0
      %629 = vmatpush1.bf16.msra.mxu0 0
      %630 = vmatprep.subr.bf16.mxu0 0
      %631 = vmatpush1.bf16.msra.mxu0 0
      %632 = vmatprep.subr.bf16.mxu0 %v610
      %633 = vmatpush1.bf16.msra.mxu0 %v609
      %634 = vmatprep.subr.bf16.mxu0 0
      %635 = vmatpush2.bf16.msra.mxu0 0
      %636 = vmatprep.subr.bf16.mxu0 0
      %637 = vmatpush2.bf16.msra.mxu0 0
      %638 = vmatprep.subr.bf16.mxu0 0
      %639 = vmatpush2.bf16.msra.mxu0 0
      %640 = vmatprep.subr.bf16.mxu0 0
      %641 = vmatpush2.bf16.msra.mxu0 0
      %642 = vmatprep.subr.bf16.mxu0 0
      %643 = vmatpush2.bf16.msra.mxu0 0
      %644 = vmatprep.subr.bf16.mxu0 0
      %645 = vmatpush2.bf16.msra.mxu0 0
      %646 = vmatprep.subr.bf16.mxu0 0
      %647 = vmatpush2.bf16.msra.mxu0 0
      %648 = vmatprep.subr.bf16.mxu0 0
      %649 = vmatpush2.bf16.msra.mxu0 0
      %650 = vmatprep.mubr.bf16.mxu0 0
      %651 = vmatmul.mubr.bf16.gmra.mxu0 %v616
      %v652 = vpop.f32.mrf.mxu0
      %v653 = vadd.f32 0.0, %v652
      %v654 = vpop.f32.mrf.mxu0
      %v655 = vadd.f32 0.0, %v654
      %v656 = vpop.f32.mrf.mxu0
      %v657 = vadd.f32 0.0, %v656
      %v658 = vpop.f32.mrf.mxu0
      %v659 = vadd.f32 0.0, %v658
      %660 = vdwg.mxu0
      %661 = vmatprep.subr.bf16.mxu0 0
      %662 = vmatpush1.bf16.msra.mxu0 0
      %663 = vmatprep.subr.bf16.mxu0 0
      %664 = vmatpush1.bf16.msra.mxu0 0
      %665 = vmatprep.subr.bf16.mxu0 0
      %666 = vmatpush1.bf16.msra.mxu0 0
      %667 = vmatprep.subr.bf16.mxu0 0
      %668 = vmatpush1.bf16.msra.mxu0 0
      %669 = vmatprep.subr.bf16.mxu0 0
      %670 = vmatpush1.bf16.msra.mxu0 0
      %671 = vmatprep.subr.bf16.mxu0 0
      %672 = vmatpush1.bf16.msra.mxu0 0
      %673 = vmatprep.subr.bf16.mxu0 0
      %674 = vmatpush1.bf16.msra.mxu0 0
      %675 = vmatprep.subr.bf16.mxu0 0
      %676 = vmatpush1.bf16.msra.mxu0 %v611
      %677 = vmatprep.subr.bf16.mxu0 0
      %678 = vmatpush2.bf16.msra.mxu0 0
      %679 = vmatprep.subr.bf16.mxu0 0
      %680 = vmatpush2.bf16.msra.mxu0 0
      %681 = vmatprep.subr.bf16.mxu0 0
      %682 = vmatpush2.bf16.msra.mxu0 0
      %683 = vmatprep.subr.bf16.mxu0 0
      %684 = vmatpush2.bf16.msra.mxu0 0
      %685 = vmatprep.subr.bf16.mxu0 0
      %686 = vmatpush2.bf16.msra.mxu0 0
      %687 = vmatprep.subr.bf16.mxu0 0
      %688 = vmatpush2.bf16.msra.mxu0 0
      %689 = vmatprep.subr.bf16.mxu0 0
      %690 = vmatpush2.bf16.msra.mxu0 0
      %691 = vmatprep.subr.bf16.mxu0 0
      %692 = vmatpush2.bf16.msra.mxu0 0
      %693 = vmatprep.mubr.bf16.mxu0 0
      %694 = vmatmul.mubr.bf16.gmra.mxu0 %v616
      %v695 = vpop.f32.mrf.mxu0
      %v696 = vadd.f32 0.0, %v695
      %v697 = vpop.f32.mrf.mxu0
      %v698 = vpop.f32.mrf.mxu0
      %v699 = vadd.f32 0.0, %v698
      %v700 = vpop.f32.mrf.mxu0
      %701 = vdwg.mxu0
      %v702 = vadd.f32 %v586, %v653
      %v703 = vadd.f32 %v587, %v655
      %v704 = vadd.f32 %v588, %v696
      %v705 = vadd.f32 %v589, %v657
      %v706 = vadd.f32 %v590, %v659
      %v707 = vadd.f32 %v591, %v699
      %s708 = scalar_lea.vmem %s221, 32
      %v709 = vld [vmem:[%s708] sm:$0xf]
      %v710 = vld [vmem:[%s708 + $0x4] sm:$0xf]
      %v713 = vunpack.c.l.b16 %v709
      %v714 = vunpack.c.l.b16 %v710
      %v715 = vpack.c.b16 %v714, %v713
      %716 = vrot.lane.b32.xlu0 %v269, 109
      %v717 = vpop.permute.xlu0 %716
      %718 = vrot.lane.b32.xlu0 %v270, 109
      %v719 = vpop.permute.xlu0 %718
      %720 = vrot.lane.b32.xlu0 %v271, 109
      %v721 = vpop.permute.xlu0 %720
      %722 = vrot.lane.b32.xlu0 %v272, 109
      %v723 = vpop.permute.xlu0 %722
      %vm724 = vcmask 891904
      %v725 = vsel %vm724, %v717, %v719
      %v726 = vsel %vm724, %v719, %v721
      %v727 = vsel %vm724, %v721, %v723
      %v732 = vsel %vm288, %v715, 0
      %734 = vmatprep.subr.bf16.mxu0 0
      %735 = vmatpush1.bf16.msra.mxu0 0
      %736 = vmatprep.subr.bf16.mxu0 0
      %737 = vmatpush1.bf16.msra.mxu0 0
      %738 = vmatprep.subr.bf16.mxu0 0
      %739 = vmatpush1.bf16.msra.mxu0 0
      %740 = vmatprep.subr.bf16.mxu0 0
      %741 = vmatpush1.bf16.msra.mxu0 0
      %742 = vmatprep.subr.bf16.mxu0 0
      %743 = vmatpush1.bf16.msra.mxu0 0
      %744 = vmatprep.subr.bf16.mxu0 0
      %745 = vmatpush1.bf16.msra.mxu0 0
      %746 = vmatprep.subr.bf16.mxu0 0
      %747 = vmatpush1.bf16.msra.mxu0 0
      %748 = vmatprep.subr.bf16.mxu0 %v726
      %749 = vmatpush1.bf16.msra.mxu0 %v725
      %750 = vmatprep.subr.bf16.mxu0 0
      %751 = vmatpush2.bf16.msra.mxu0 0
      %752 = vmatprep.subr.bf16.mxu0 0
      %753 = vmatpush2.bf16.msra.mxu0 0
      %754 = vmatprep.subr.bf16.mxu0 0
      %755 = vmatpush2.bf16.msra.mxu0 0
      %756 = vmatprep.subr.bf16.mxu0 0
      %757 = vmatpush2.bf16.msra.mxu0 0
      %758 = vmatprep.subr.bf16.mxu0 0
      %759 = vmatpush2.bf16.msra.mxu0 0
      %760 = vmatprep.subr.bf16.mxu0 0
      %761 = vmatpush2.bf16.msra.mxu0 0
      %762 = vmatprep.subr.bf16.mxu0 0
      %763 = vmatpush2.bf16.msra.mxu0 0
      %764 = vmatprep.subr.bf16.mxu0 0
      %765 = vmatpush2.bf16.msra.mxu0 0
      %766 = vmatprep.mubr.bf16.mxu0 0
      %767 = vmatmul.mubr.bf16.gmra.mxu0 %v732
      %v768 = vpop.f32.mrf.mxu0
      %v769 = vadd.f32 0.0, %v768
      %v770 = vpop.f32.mrf.mxu0
      %v771 = vadd.f32 0.0, %v770
      %v772 = vpop.f32.mrf.mxu0
      %v773 = vadd.f32 0.0, %v772
      %v774 = vpop.f32.mrf.mxu0
      %v775 = vadd.f32 0.0, %v774
      %776 = vdwg.mxu0
      %777 = vmatprep.subr.bf16.mxu0 0
      %778 = vmatpush1.bf16.msra.mxu0 0
      %779 = vmatprep.subr.bf16.mxu0 0
      %780 = vmatpush1.bf16.msra.mxu0 0
      %781 = vmatprep.subr.bf16.mxu0 0
      %782 = vmatpush1.bf16.msra.mxu0 0
      %783 = vmatprep.subr.bf16.mxu0 0
      %784 = vmatpush1.bf16.msra.mxu0 0
      %785 = vmatprep.subr.bf16.mxu0 0
      %786 = vmatpush1.bf16.msra.mxu0 0
      %787 = vmatprep.subr.bf16.mxu0 0
      %788 = vmatpush1.bf16.msra.mxu0 0
      %789 = vmatprep.subr.bf16.mxu0 0
      %790 = vmatpush1.bf16.msra.mxu0 0
      %791 = vmatprep.subr.bf16.mxu0 0
      %792 = vmatpush1.bf16.msra.mxu0 %v727
      %793 = vmatprep.subr.bf16.mxu0 0
      %794 = vmatpush2.bf16.msra.mxu0 0
      %795 = vmatprep.subr.bf16.mxu0 0
      %796 = vmatpush2.bf16.msra.mxu0 0
      %797 = vmatprep.subr.bf16.mxu0 0
      %798 = vmatpush2.bf16.msra.mxu0 0
      %799 = vmatprep.subr.bf16.mxu0 0
      %800 = vmatpush2.bf16.msra.mxu0 0
      %801 = vmatprep.subr.bf16.mxu0 0
      %802 = vmatpush2.bf16.msra.mxu0 0
      %803 = vmatprep.subr.bf16.mxu0 0
      %804 = vmatpush2.bf16.msra.mxu0 0
      %805 = vmatprep.subr.bf16.mxu0 0
      %806 = vmatpush2.bf16.msra.mxu0 0
      %807 = vmatprep.subr.bf16.mxu0 0
      %808 = vmatpush2.bf16.msra.mxu0 0
      %809 = vmatprep.mubr.bf16.mxu0 0
      %810 = vmatmul.mubr.bf16.gmra.mxu0 %v732
      %v811 = vpop.f32.mrf.mxu0
      %v812 = vadd.f32 0.0, %v811
      %v813 = vpop.f32.mrf.mxu0
      %v814 = vpop.f32.mrf.mxu0
      %v815 = vadd.f32 0.0, %v814
      %v816 = vpop.f32.mrf.mxu0
      %817 = vdwg.mxu0
      %v818 = vadd.f32 %v702, %v769
      %v819 = vadd.f32 %v703, %v771
      %v820 = vadd.f32 %v704, %v812
      %v821 = vadd.f32 %v705, %v773
      %v822 = vadd.f32 %v706, %v775
      %v823 = vadd.f32 %v707, %v815
      %s824 = scalar_lea.vmem %s221, 40
      %v825 = vld [vmem:[%s824] sm:$0xf]
      %v826 = vld [vmem:[%s824 + $0x4] sm:$0xf]
      %v829 = vunpack.c.l.b16 %v825
      %v830 = vunpack.c.l.b16 %v826
      %v831 = vpack.c.b16 %v830, %v829
      %832 = vrot.lane.b32.xlu0 %v269, 108
      %v833 = vpop.permute.xlu0 %832
      %834 = vrot.lane.b32.xlu0 %v270, 108
      %v835 = vpop.permute.xlu0 %834
      %836 = vrot.lane.b32.xlu0 %v271, 108
      %v837 = vpop.permute.xlu0 %836
      %838 = vrot.lane.b32.xlu0 %v272, 108
      %v839 = vpop.permute.xlu0 %838
      %vm840 = vcmask 883712
      %v841 = vsel %vm840, %v833, %v835
      %v842 = vsel %vm840, %v835, %v837
      %v843 = vsel %vm840, %v837, %v839
      %v848 = vsel %vm288, %v831, 0
      %850 = vmatprep.subr.bf16.mxu0 0
      %851 = vmatpush1.bf16.msra.mxu0 0
      %852 = vmatprep.subr.bf16.mxu0 0
      %853 = vmatpush1.bf16.msra.mxu0 0
      %854 = vmatprep.subr.bf16.mxu0 0
      %855 = vmatpush1.bf16.msra.mxu0 0
      %856 = vmatprep.subr.bf16.mxu0 0
      %857 = vmatpush1.bf16.msra.mxu0 0
      %858 = vmatprep.subr.bf16.mxu0 0
      %859 = vmatpush1.bf16.msra.mxu0 0
      %860 = vmatprep.subr.bf16.mxu0 0
      %861 = vmatpush1.bf16.msra.mxu0 0
      %862 = vmatprep.subr.bf16.mxu0 0
      %863 = vmatpush1.bf16.msra.mxu0 0
      %864 = vmatprep.subr.bf16.mxu0 %v842
      %865 = vmatpush1.bf16.msra.mxu0 %v841
      %866 = vmatprep.subr.bf16.mxu0 0
      %867 = vmatpush2.bf16.msra.mxu0 0
      %868 = vmatprep.subr.bf16.mxu0 0
      %869 = vmatpush2.bf16.msra.mxu0 0
      %870 = vmatprep.subr.bf16.mxu0 0
      %871 = vmatpush2.bf16.msra.mxu0 0
      %872 = vmatprep.subr.bf16.mxu0 0
      %873 = vmatpush2.bf16.msra.mxu0 0
      %874 = vmatprep.subr.bf16.mxu0 0
      %875 = vmatpush2.bf16.msra.mxu0 0
      %876 = vmatprep.subr.bf16.mxu0 0
      %877 = vmatpush2.bf16.msra.mxu0 0
      %878 = vmatprep.subr.bf16.mxu0 0
      %879 = vmatpush2.bf16.msra.mxu0 0
      %880 = vmatprep.subr.bf16.mxu0 0
      %881 = vmatpush2.bf16.msra.mxu0 0
      %882 = vmatprep.mubr.bf16.mxu0 0
      %883 = vmatmul.mubr.bf16.gmra.mxu0 %v848
      %v884 = vpop.f32.mrf.mxu0
      %v885 = vadd.f32 0.0, %v884
      %v886 = vpop.f32.mrf.mxu0
      %v887 = vadd.f32 0.0, %v886
      %v888 = vpop.f32.mrf.mxu0
      %v889 = vadd.f32 0.0, %v888
      %v890 = vpop.f32.mrf.mxu0
      %v891 = vadd.f32 0.0, %v890
      %892 = vdwg.mxu0
      %893 = vmatprep.subr.bf16.mxu0 0
      %894 = vmatpush1.bf16.msra.mxu0 0
      %895 = vmatprep.subr.bf16.mxu0 0
      %896 = vmatpush1.bf16.msra.mxu0 0
      %897 = vmatprep.subr.bf16.mxu0 0
      %898 = vmatpush1.bf16.msra.mxu0 0
      %899 = vmatprep.subr.bf16.mxu0 0
      %900 = vmatpush1.bf16.msra.mxu0 0
      %901 = vmatprep.subr.bf16.mxu0 0
      %902 = vmatpush1.bf16.msra.mxu0 0
      %903 = vmatprep.subr.bf16.mxu0 0
      %904 = vmatpush1.bf16.msra.mxu0 0
      %905 = vmatprep.subr.bf16.mxu0 0
      %906 = vmatpush1.bf16.msra.mxu0 0
      %907 = vmatprep.subr.bf16.mxu0 0
      %908 = vmatpush1.bf16.msra.mxu0 %v843
      %909 = vmatprep.subr.bf16.mxu0 0
      %910 = vmatpush2.bf16.msra.mxu0 0
      %911 = vmatprep.subr.bf16.mxu0 0
      %912 = vmatpush2.bf16.msra.mxu0 0
      %913 = vmatprep.subr.bf16.mxu0 0
      %914 = vmatpush2.bf16.msra.mxu0 0
      %915 = vmatprep.subr.bf16.mxu0 0
      %916 = vmatpush2.bf16.msra.mxu0 0
      %917 = vmatprep.subr.bf16.mxu0 0
      %918 = vmatpush2.bf16.msra.mxu0 0
      %919 = vmatprep.subr.bf16.mxu0 0
      %920 = vmatpush2.bf16.msra.mxu0 0
      %921 = vmatprep.subr.bf16.mxu0 0
      %922 = vmatpush2.bf16.msra.mxu0 0
      %923 = vmatprep.subr.bf16.mxu0 0
      %924 = vmatpush2.bf16.msra.mxu0 0
      %925 = vmatprep.mubr.bf16.mxu0 0
      %926 = vmatmul.mubr.bf16.gmra.mxu0 %v848
      %v927 = vpop.f32.mrf.mxu0
      %v928 = vadd.f32 0.0, %v927
      %v929 = vpop.f32.mrf.mxu0
      %v930 = vpop.f32.mrf.mxu0
      %v931 = vadd.f32 0.0, %v930
      %v932 = vpop.f32.mrf.mxu0
      %933 = vdwg.mxu0
      %v934 = vadd.f32 %v818, %v885
      %v935 = vadd.f32 %v819, %v887
      %v936 = vadd.f32 %v820, %v928
      %v937 = vadd.f32 %v821, %v889
      %v938 = vadd.f32 %v822, %v891
      %v939 = vadd.f32 %v823, %v931
      %s940 = scalar_lea.vmem %s221, 48
      %v941 = vld [vmem:[%s940] sm:$0xf]
      %v942 = vld [vmem:[%s940 + $0x4] sm:$0xf]
      %v945 = vunpack.c.l.b16 %v941
      %v946 = vunpack.c.l.b16 %v942
      %v947 = vpack.c.b16 %v946, %v945
      %948 = vrot.lane.b32.xlu0 %v269, 92
      %v949 = vpop.permute.xlu0 %948
      %950 = vrot.lane.b32.xlu0 %v270, 92
      %v951 = vpop.permute.xlu0 %950
      %952 = vrot.lane.b32.xlu0 %v271, 92
      %v953 = vpop.permute.xlu0 %952
      %954 = vrot.lane.b32.xlu0 %v272, 92
      %v955 = vpop.permute.xlu0 %954
      %vm956 = vcmask 752640
      %v957 = vsel %vm956, %v949, %v951
      %v958 = vsel %vm956, %v951, %v953
      %v959 = vsel %vm956, %v953, %v955
      %v964 = vsel %vm288, %v947, 0
      %966 = vmatprep.subr.bf16.mxu0 0
      %967 = vmatpush1.bf16.msra.mxu0 0
      %968 = vmatprep.subr.bf16.mxu0 0
      %969 = vmatpush1.bf16.msra.mxu0 0
      %970 = vmatprep.subr.bf16.mxu0 0
      %971 = vmatpush1.bf16.msra.mxu0 0
      %972 = vmatprep.subr.bf16.mxu0 0
      %973 = vmatpush1.bf16.msra.mxu0 0
      %974 = vmatprep.subr.bf16.mxu0 0
      %975 = vmatpush1.bf16.msra.mxu0 0
      %976 = vmatprep.subr.bf16.mxu0 0
      %977 = vmatpush1.bf16.msra.mxu0 0
      %978 = vmatprep.subr.bf16.mxu0 0
      %979 = vmatpush1.bf16.msra.mxu0 0
      %980 = vmatprep.subr.bf16.mxu0 %v958
      %981 = vmatpush1.bf16.msra.mxu0 %v957
      %982 = vmatprep.subr.bf16.mxu0 0
      %983 = vmatpush2.bf16.msra.mxu0 0
      %984 = vmatprep.subr.bf16.mxu0 0
      %985 = vmatpush2.bf16.msra.mxu0 0
      %986 = vmatprep.subr.bf16.mxu0 0
      %987 = vmatpush2.bf16.msra.mxu0 0
      %988 = vmatprep.subr.bf16.mxu0 0
      %989 = vmatpush2.bf16.msra.mxu0 0
      %990 = vmatprep.subr.bf16.mxu0 0
      %991 = vmatpush2.bf16.msra.mxu0 0
      %992 = vmatprep.subr.bf16.mxu0 0
      %993 = vmatpush2.bf16.msra.mxu0 0
      %994 = vmatprep.subr.bf16.mxu0 0
      %995 = vmatpush2.bf16.msra.mxu0 0
      %996 = vmatprep.subr.bf16.mxu0 0
      %997 = vmatpush2.bf16.msra.mxu0 0
      %998 = vmatprep.mubr.bf16.mxu0 0
      %999 = vmatmul.mubr.bf16.gmra.mxu0 %v964
      %v1000 = vpop.f32.mrf.mxu0
      %v1001 = vadd.f32 0.0, %v1000
      %v1002 = vpop.f32.mrf.mxu0
      %v1003 = vadd.f32 0.0, %v1002
      %v1004 = vpop.f32.mrf.mxu0
      %v1005 = vadd.f32 0.0, %v1004
      %v1006 = vpop.f32.mrf.mxu0
      %v1007 = vadd.f32 0.0, %v1006
      %1008 = vdwg.mxu0
      %1009 = vmatprep.subr.bf16.mxu0 0
      %1010 = vmatpush1.bf16.msra.mxu0 0
      %1011 = vmatprep.subr.bf16.mxu0 0
      %1012 = vmatpush1.bf16.msra.mxu0 0
      %1013 = vmatprep.subr.bf16.mxu0 0
      %1014 = vmatpush1.bf16.msra.mxu0 0
      %1015 = vmatprep.subr.bf16.mxu0 0
      %1016 = vmatpush1.bf16.msra.mxu0 0
      %1017 = vmatprep.subr.bf16.mxu0 0
      %1018 = vmatpush1.bf16.msra.mxu0 0
      %1019 = vmatprep.subr.bf16.mxu0 0
      %1020 = vmatpush1.bf16.msra.mxu0 0
      %1021 = vmatprep.subr.bf16.mxu0 0
      %1022 = vmatpush1.bf16.msra.mxu0 0
      %1023 = vmatprep.subr.bf16.mxu0 0
      %1024 = vmatpush1.bf16.msra.mxu0 %v959
      %1025 = vmatprep.subr.bf16.mxu0 0
      %1026 = vmatpush2.bf16.msra.mxu0 0
      %1027 = vmatprep.subr.bf16.mxu0 0
      %1028 = vmatpush2.bf16.msra.mxu0 0
      %1029 = vmatprep.subr.bf16.mxu0 0
      %1030 = vmatpush2.bf16.msra.mxu0 0
      %1031 = vmatprep.subr.bf16.mxu0 0
      %1032 = vmatpush2.bf16.msra.mxu0 0
      %1033 = vmatprep.subr.bf16.mxu0 0
      %1034 = vmatpush2.bf16.msra.mxu0 0
      %1035 = vmatprep.subr.bf16.mxu0 0
      %1036 = vmatpush2.bf16.msra.mxu0 0
      %1037 = vmatprep.subr.bf16.mxu0 0
      %1038 = vmatpush2.bf16.msra.mxu0 0
      %1039 = vmatprep.subr.bf16.mxu0 0
      %1040 = vmatpush2.bf16.msra.mxu0 0
      %1041 = vmatprep.mubr.bf16.mxu0 0
      %1042 = vmatmul.mubr.bf16.gmra.mxu0 %v964
      %v1043 = vpop.f32.mrf.mxu0
      %v1044 = vadd.f32 0.0, %v1043
      %v1045 = vpop.f32.mrf.mxu0
      %v1046 = vpop.f32.mrf.mxu0
      %v1047 = vadd.f32 0.0, %v1046
      %v1048 = vpop.f32.mrf.mxu0
      %1049 = vdwg.mxu0
      %v1050 = vadd.f32 %v934, %v1001
      %v1051 = vadd.f32 %v935, %v1003
      %v1052 = vadd.f32 %v936, %v1044
      %v1053 = vadd.f32 %v937, %v1005
      %v1054 = vadd.f32 %v938, %v1007
      %v1055 = vadd.f32 %v939, %v1047
      %s1056 = scalar_lea.vmem %s221, 56
      %v1057 = vld [vmem:[%s1056] sm:$0xf]
      %v1058 = vld [vmem:[%s1056 + $0x4] sm:$0xf]
      %v1061 = vunpack.c.l.b16 %v1057
      %v1062 = vunpack.c.l.b16 %v1058
      %v1063 = vpack.c.b16 %v1062, %v1061
      %1064 = vrot.lane.b32.xlu0 %v269, 91
      %v1065 = vpop.permute.xlu0 %1064
      %1066 = vrot.lane.b32.xlu0 %v270, 91
      %v1067 = vpop.permute.xlu0 %1066
      %1068 = vrot.lane.b32.xlu0 %v271, 91
      %v1069 = vpop.permute.xlu0 %1068
      %1070 = vrot.lane.b32.xlu0 %v272, 91
      %v1071 = vpop.permute.xlu0 %1070
      %vm1072 = vcmask 744448
      %v1073 = vsel %vm1072, %v1065, %v1067
      %v1074 = vsel %vm1072, %v1067, %v1069
      %v1075 = vsel %vm1072, %v1069, %v1071
      %v1080 = vsel %vm288, %v1063, 0
      %1082 = vmatprep.subr.bf16.mxu0 0
      %1083 = vmatpush1.bf16.msra.mxu0 0
      %1084 = vmatprep.subr.bf16.mxu0 0
      %1085 = vmatpush1.bf16.msra.mxu0 0
      %1086 = vmatprep.subr.bf16.mxu0 0
      %1087 = vmatpush1.bf16.msra.mxu0 0
      %1088 = vmatprep.subr.bf16.mxu0 0
      %1089 = vmatpush1.bf16.msra.mxu0 0
      %1090 = vmatprep.subr.bf16.mxu0 0
      %1091 = vmatpush1.bf16.msra.mxu0 0
      %1092 = vmatprep.subr.bf16.mxu0 0
      %1093 = vmatpush1.bf16.msra.mxu0 0
      %1094 = vmatprep.subr.bf16.mxu0 0
      %1095 = vmatpush1.bf16.msra.mxu0 0
      %1096 = vmatprep.subr.bf16.mxu0 %v1074
      %1097 = vmatpush1.bf16.msra.mxu0 %v1073
      %1098 = vmatprep.subr.bf16.mxu0 0
      %1099 = vmatpush2.bf16.msra.mxu0 0
      %1100 = vmatprep.subr.bf16.mxu0 0
      %1101 = vmatpush2.bf16.msra.mxu0 0
      %1102 = vmatprep.subr.bf16.mxu0 0
      %1103 = vmatpush2.bf16.msra.mxu0 0
      %1104 = vmatprep.subr.bf16.mxu0 0
      %1105 = vmatpush2.bf16.msra.mxu0 0
      %1106 = vmatprep.subr.bf16.mxu0 0
      %1107 = vmatpush2.bf16.msra.mxu0 0
      %1108 = vmatprep.subr.bf16.mxu0 0
      %1109 = vmatpush2.bf16.msra.mxu0 0
      %1110 = vmatprep.subr.bf16.mxu0 0
      %1111 = vmatpush2.bf16.msra.mxu0 0
      %1112 = vmatprep.subr.bf16.mxu0 0
      %1113 = vmatpush2.bf16.msra.mxu0 0
      %1114 = vmatprep.mubr.bf16.mxu0 0
      %1115 = vmatmul.mubr.bf16.gmra.mxu0 %v1080
      %v1116 = vpop.f32.mrf.mxu0
      %v1117 = vadd.f32 0.0, %v1116
      %v1118 = vpop.f32.mrf.mxu0
      %v1119 = vadd.f32 0.0, %v1118
      %v1120 = vpop.f32.mrf.mxu0
      %v1121 = vadd.f32 0.0, %v1120
      %v1122 = vpop.f32.mrf.mxu0
      %v1123 = vadd.f32 0.0, %v1122
      %1124 = vdwg.mxu0
      %1125 = vmatprep.subr.bf16.mxu0 0
      %1126 = vmatpush1.bf16.msra.mxu0 0
      %1127 = vmatprep.subr.bf16.mxu0 0
      %1128 = vmatpush1.bf16.msra.mxu0 0
      %1129 = vmatprep.subr.bf16.mxu0 0
      %1130 = vmatpush1.bf16.msra.mxu0 0
      %1131 = vmatprep.subr.bf16.mxu0 0
      %1132 = vmatpush1.bf16.msra.mxu0 0
      %1133 = vmatprep.subr.bf16.mxu0 0
      %1134 = vmatpush1.bf16.msra.mxu0 0
      %1135 = vmatprep.subr.bf16.mxu0 0
      %1136 = vmatpush1.bf16.msra.mxu0 0
      %1137 = vmatprep.subr.bf16.mxu0 0
      %1138 = vmatpush1.bf16.msra.mxu0 0
      %1139 = vmatprep.subr.bf16.mxu0 0
      %1140 = vmatpush1.bf16.msra.mxu0 %v1075
      %1141 = vmatprep.subr.bf16.mxu0 0
      %1142 = vmatpush2.bf16.msra.mxu0 0
      %1143 = vmatprep.subr.bf16.mxu0 0
      %1144 = vmatpush2.bf16.msra.mxu0 0
      %1145 = vmatprep.subr.bf16.mxu0 0
      %1146 = vmatpush2.bf16.msra.mxu0 0
      %1147 = vmatprep.subr.bf16.mxu0 0
      %1148 = vmatpush2.bf16.msra.mxu0 0
      %1149 = vmatprep.subr.bf16.mxu0 0
      %1150 = vmatpush2.bf16.msra.mxu0 0
      %1151 = vmatprep.subr.bf16.mxu0 0
      %1152 = vmatpush2.bf16.msra.mxu0 0
      %1153 = vmatprep.subr.bf16.mxu0 0
      %1154 = vmatpush2.bf16.msra.mxu0 0
      %1155 = vmatprep.subr.bf16.mxu0 0
      %1156 = vmatpush2.bf16.msra.mxu0 0
      %1157 = vmatprep.mubr.bf16.mxu0 0
      %1158 = vmatmul.mubr.bf16.gmra.mxu0 %v1080
      %v1159 = vpop.f32.mrf.mxu0
      %v1160 = vadd.f32 0.0, %v1159
      %v1161 = vpop.f32.mrf.mxu0
      %v1162 = vpop.f32.mrf.mxu0
      %v1163 = vadd.f32 0.0, %v1162
      %v1164 = vpop.f32.mrf.mxu0
      %1165 = vdwg.mxu0
      %v1166 = vadd.f32 %v1050, %v1117
      %v1167 = vadd.f32 %v1051, %v1119
      %v1168 = vadd.f32 %v1052, %v1160
      %v1169 = vadd.f32 %v1053, %v1121
      %v1170 = vadd.f32 %v1054, %v1123
      %v1171 = vadd.f32 %v1055, %v1163
      %s1172 = scalar_lea.vmem %s221, 64
      %v1173 = vld [vmem:[%s1172] sm:$0xf]
      %v1174 = vld [vmem:[%s1172 + $0x4] sm:$0xf]
      %v1177 = vunpack.c.l.b16 %v1173
      %v1178 = vunpack.c.l.b16 %v1174
      %v1179 = vpack.c.b16 %v1178, %v1177
      %1180 = vrot.lane.b32.xlu0 %v269, 90
      %v1181 = vpop.permute.xlu0 %1180
      %1182 = vrot.lane.b32.xlu0 %v270, 90
      %v1183 = vpop.permute.xlu0 %1182
      %1184 = vrot.lane.b32.xlu0 %v271, 90
      %v1185 = vpop.permute.xlu0 %1184
      %1186 = vrot.lane.b32.xlu0 %v272, 90
      %v1187 = vpop.permute.xlu0 %1186
      %vm1188 = vcmask 736256
      %v1189 = vsel %vm1188, %v1181, %v1183
      %v1190 = vsel %vm1188, %v1183, %v1185
      %v1191 = vsel %vm1188, %v1185, %v1187
      %v1196 = vsel %vm288, %v1179, 0
      %1198 = vmatprep.subr.bf16.mxu0 0
      %1199 = vmatpush1.bf16.msra.mxu0 0
      %1200 = vmatprep.subr.bf16.mxu0 0
      %1201 = vmatpush1.bf16.msra.mxu0 0
      %1202 = vmatprep.subr.bf16.mxu0 0
      %1203 = vmatpush1.bf16.msra.mxu0 0
      %1204 = vmatprep.subr.bf16.mxu0 0
      %1205 = vmatpush1.bf16.msra.mxu0 0
      %1206 = vmatprep.subr.bf16.mxu0 0
      %1207 = vmatpush1.bf16.msra.mxu0 0
      %1208 = vmatprep.subr.bf16.mxu0 0
      %1209 = vmatpush1.bf16.msra.mxu0 0
      %1210 = vmatprep.subr.bf16.mxu0 0
      %1211 = vmatpush1.bf16.msra.mxu0 0
      %1212 = vmatprep.subr.bf16.mxu0 %v1190
      %1213 = vmatpush1.bf16.msra.mxu0 %v1189
      %1214 = vmatprep.subr.bf16.mxu0 0
      %1215 = vmatpush2.bf16.msra.mxu0 0
      %1216 = vmatprep.subr.bf16.mxu0 0
      %1217 = vmatpush2.bf16.msra.mxu0 0
      %1218 = vmatprep.subr.bf16.mxu0 0
      %1219 = vmatpush2.bf16.msra.mxu0 0
      %1220 = vmatprep.subr.bf16.mxu0 0
      %1221 = vmatpush2.bf16.msra.mxu0 0
      %1222 = vmatprep.subr.bf16.mxu0 0
      %1223 = vmatpush2.bf16.msra.mxu0 0
      %1224 = vmatprep.subr.bf16.mxu0 0
      %1225 = vmatpush2.bf16.msra.mxu0 0
      %1226 = vmatprep.subr.bf16.mxu0 0
      %1227 = vmatpush2.bf16.msra.mxu0 0
      %1228 = vmatprep.subr.bf16.mxu0 0
      %1229 = vmatpush2.bf16.msra.mxu0 0
      %1230 = vmatprep.mubr.bf16.mxu0 0
      %1231 = vmatmul.mubr.bf16.gmra.mxu0 %v1196
      %v1232 = vpop.f32.mrf.mxu0
      %v1233 = vadd.f32 0.0, %v1232
      %v1234 = vpop.f32.mrf.mxu0
      %v1235 = vadd.f32 0.0, %v1234
      %v1236 = vpop.f32.mrf.mxu0
      %v1237 = vadd.f32 0.0, %v1236
      %v1238 = vpop.f32.mrf.mxu0
      %v1239 = vadd.f32 0.0, %v1238
      %1240 = vdwg.mxu0
      %1241 = vmatprep.subr.bf16.mxu0 0
      %1242 = vmatpush1.bf16.msra.mxu0 0
      %1243 = vmatprep.subr.bf16.mxu0 0
      %1244 = vmatpush1.bf16.msra.mxu0 0
      %1245 = vmatprep.subr.bf16.mxu0 0
      %1246 = vmatpush1.bf16.msra.mxu0 0
      %1247 = vmatprep.subr.bf16.mxu0 0
      %1248 = vmatpush1.bf16.msra.mxu0 0
      %1249 = vmatprep.subr.bf16.mxu0 0
      %1250 = vmatpush1.bf16.msra.mxu0 0
      %1251 = vmatprep.subr.bf16.mxu0 0
      %1252 = vmatpush1.bf16.msra.mxu0 0
      %1253 = vmatprep.subr.bf16.mxu0 0
      %1254 = vmatpush1.bf16.msra.mxu0 0
      %1255 = vmatprep.subr.bf16.mxu0 0
      %1256 = vmatpush1.bf16.msra.mxu0 %v1191
      %1257 = vmatprep.subr.bf16.mxu0 0
      %1258 = vmatpush2.bf16.msra.mxu0 0
      %1259 = vmatprep.subr.bf16.mxu0 0
      %1260 = vmatpush2.bf16.msra.mxu0 0
      %1261 = vmatprep.subr.bf16.mxu0 0
      %1262 = vmatpush2.bf16.msra.mxu0 0
      %1263 = vmatprep.subr.bf16.mxu0 0
      %1264 = vmatpush2.bf16.msra.mxu0 0
      %1265 = vmatprep.subr.bf16.mxu0 0
      %1266 = vmatpush2.bf16.msra.mxu0 0
      %1267 = vmatprep.subr.bf16.mxu0 0
      %1268 = vmatpush2.bf16.msra.mxu0 0
      %1269 = vmatprep.subr.bf16.mxu0 0
      %1270 = vmatpush2.bf16.msra.mxu0 0
      %1271 = vmatprep.subr.bf16.mxu0 0
      %1272 = vmatpush2.bf16.msra.mxu0 0
      %1273 = vmatprep.mubr.bf16.mxu0 0
      %1274 = vmatmul.mubr.bf16.gmra.mxu0 %v1196
      %v1275 = vpop.f32.mrf.mxu0
      %v1276 = vadd.f32 0.0, %v1275
      %v1277 = vpop.f32.mrf.mxu0
      %v1278 = vpop.f32.mrf.mxu0
      %v1279 = vadd.f32 0.0, %v1278
      %v1280 = vpop.f32.mrf.mxu0
      %1281 = vdwg.mxu0
      %v1282 = vadd.f32 %v1166, %v1233
      %v1283 = vadd.f32 %v1167, %v1235
      %v1284 = vadd.f32 %v1168, %v1276
      %v1285 = vadd.f32 %v1169, %v1237
      %v1286 = vadd.f32 %v1170, %v1239
      %v1287 = vadd.f32 %v1171, %v1279
      %v1288 = vld [vmem:[%s227] sm:$0xff]
      %v1289 = vld [vmem:[%s227 + $0x8] sm:$0xff]
      %1291 = vset.pattern.permute.xlu0 0
      %1292 = vperm.xlu0 %1291, %v1288
      %v1293 = vpop.permute.xlu0 %1292
      %1296 = vset.pattern.permute.xlu0 0
      %1297 = vperm.xlu0 %1296, %v1289
      %v1298 = vpop.permute.xlu0 %1297
      %v1300 = vadd.f32 %v1282, %v1293
      %v1301 = vadd.f32 %v1283, %v1293
      %v1302 = vadd.f32 %v1284, %v1293
      %v1303 = vadd.f32 %v1285, %v1298
      %v1304 = vadd.f32 %v1286, %v1298
      %v1305 = vadd.f32 %v1287, %v1298
      %vm1306 = vcmp.ge.f32.partialorder %v1300, 0.0
      %vm1307 = vcmp.ge.f32.partialorder %v1301, 0.0
      %vm1308 = vcmp.ge.f32.partialorder %v1302, 0.0
      %vm1309 = vcmp.ge.f32.partialorder %v1303, 0.0
      %vm1310 = vcmp.ge.f32.partialorder %v1304, 0.0
      %vm1311 = vcmp.ge.f32.partialorder %v1305, 0.0
      %v1312 = vmul.f32 %v1300, 0.2
      %v1313 = vmul.f32 %v1301, 0.2
      %v1314 = vmul.f32 %v1302, 0.2
      %v1315 = vmul.f32 %v1303, 0.2
      %v1316 = vmul.f32 %v1304, 0.2
      %v1317 = vmul.f32 %v1305, 0.2
      %v1318 = vsel %vm1306, %v1300, %v1312
      %v1319 = vsel %vm1307, %v1301, %v1313
      %v1320 = vsel %vm1308, %v1302, %v1314
      %v1321 = vsel %vm1309, %v1303, %v1315
      %v1322 = vsel %vm1310, %v1304, %v1316
      %v1323 = vsel %vm1311, %v1305, %v1317
      %v1324 = vmul.f32 %v1318, 1.4142135
      %v1325 = vmul.f32 %v1319, 1.4142135
      %v1326 = vmul.f32 %v1320, 1.4142135
      %v1327 = vmul.f32 %v1321, 1.4142135
      %v1328 = vmul.f32 %v1322, 1.4142135
      %v1329 = vmul.f32 %v1323, 1.4142135
      %v1330 = vpack.c.bf16 %v1327, %v1324
      %v1331 = vpack.c.bf16 %v1328, %v1325
      %v1332 = vpack.c.bf16 %v1329, %v1326
      %v1336 = vunpack.c.l.b16 %v1330
      %v1337 = vunpack.c.l.b16 %v1331
      %v1338 = vunpack.c.l.b16 %v1332
      %v1339 = vunpack.c.h.b16 %v1330
      %v1340 = vunpack.c.h.b16 %v1331
      %v1341 = vunpack.c.h.b16 %v1332
      %v1342 = vpack.c.b16 %v1337, %v1336
      %v1343 = vpack.c.b16 %v1338, %v1338
      %v1344 = vpack.c.b16 %v1340, %v1339
      %v1345 = vpack.c.b16 %v1341, %v1341
      %1350 = vst [vmem:[%s238] sm:$0xff] %v1342
      %1351 = vst [vmem:[%s238 + $0x8] sm:$0xf] %v1343
      %1352 = vst [vmem:[%s238 + $0xc] sm:$0xff] %v1344
      %1353 = vst [vmem:[%s238 + $0x14] sm:$0xf] %v1345
      %s1354 = smul.u32 2, %s19
      %p1355 = scmp.lt.s32.totalorder %s18, 1
      %s1356 = scalar_select %p1355, %s18, 1
      %p1357 = scmp.lt.s32.totalorder %s1354, 1
      %s1358 = scalar_select %p1357, %s1354, 1
      %s1359 = smul.addr %s1358, 3
      %s1360 = smul.addr %s1356, 6
      %s1361 = sadd.s32 %s1359, %s1360
      %s1362 = smul.addr %s1361, 4
      %s1363 = scalar_lea.vmem %s3, %s1362
      // Predicated region
      $region33: #{res_block_forward.3} parent=31 // pred_check
        %p1364 = pneg %p124
      $region34: #{res_block_forward.3} parent=31 // pred_check_branch
        %1366 = sbr.rel (%p1364) target = $region36
      $region35: #{res_block_forward.3} parent=31 // pred_region
        %s1367 = smul.u32 2, %s19
      $region36: #{res_block_forward.3} parent=31 // pred_fallthru
        _
    $region32: #{res_block_forward.3} parent=5 // pred_fallthru
      _
    %p1368 = scmp.le.s32.totalorder 2, %s9
    // Predicated region
    $region37: #{res_block_forward.3} parent=5 // pred_check
      %p1369 = pneg %p1368
    $region38: #{res_block_forward.3} parent=5 // pred_check_branch
      %1371 = sbr.rel (%p1369) target = $region40
    $region39: #{res_block_forward.3} parent=5 // pred_region
      %s1372 = ssub.s32 %s9, 2
      // Predicated region
      $region41: #{res_block_forward.3} parent=39 // pred_check
        %p1373 = pneg %p130
      $region42: #{res_block_forward.3} parent=39 // pred_check_branch
        %1375 = sbr.rel (%p1373) target = $region44
      $region43: #{res_block_forward.3} parent=39 // pred_region
        %s1376 = smul.u32 2, %s21
        %p1377 = scmp.lt.s32.totalorder %s20, 1
        %s1378 = scalar_select %p1377, %s20, 1
        %p1379 = scmp.lt.s32.totalorder %s1376, 1
        %s1380 = scalar_select %p1379, %s1376, 1
        %s1381 = smul.addr %s1380, 3
        %s1382 = smul.addr %s1378, 6
        %s1383 = sadd.s32 %s1381, %s1382
        %s1384 = smul.addr %s1383, 4
        %s1385 = scalar_lea.vmem %s3, %s1384
      $region44: #{res_block_forward.3} parent=39 // pred_fallthru
        _
    $region40: #{res_block_forward.3} parent=5 // pred_fallthru
      _
  $region6: #{res_block_forward.3} parent=0 // loop_footer
    %s13 = sadd.s32 1, %s9
  $region7: #{res_block_forward.3} parent=0 // loop_footer_branch
    %8 = sbr.rel target = $region3
  $region8: #{res_block_forward.3} parent=0 // loop_exit
    _

// kernel: res_block_forward.4
$region0: #{res_block_forward.4}
  #allocation0 [shape = 'u32[]', space=smem, size = 0x4, offset = 0x4, fixed_abs, tag = 'smem constant byte address 0x4 - core index']
  #allocation1 [shape = 'u32[144,128]{1,0:T(1,128)}', space=vmem, size = 0x12000, scoped, tag = 'internal scratch']
  %s0 = inlined_call_operand.vmem [shape: bf16[2,64,150], index: 0, kind: input, shape index: {}]
  %s1 = inlined_call_operand.vmem [shape: bf16[9,16,64], index: 1, kind: input, shape index: {}]
  %s2 = inlined_call_operand.vmem [shape: f32[16,1], index: 2, kind: input, shape index: {}]
  %s3 = inlined_call_operand.vmem [shape: f32[2,16,128], index: 3, kind: output, shape index: {}]
  %s4 = sld [smem:[#allocation0]]
  $region45: #{res_block_forward.4} parent=0
    _
  %s6 = ssub.s32 1, %s4
  %s7 = scalar_select 0, %s6, %s4
  loop: start=0, step=1, limit=4
  $region2: #{res_block_forward.4} parent=0 // loop_pre_header
    _
  $region3: #{res_block_forward.4} parent=0 // loop_header
    %s9 = sphi 0, %s13
    %p10 = scmp.ge.s32.totalorder %s9, 4
    %s16 = sphi 0, %s28
    %s17 = sphi 0, %s24
    %s18 = sphi 0, %s16
    %s19 = sphi 0, %s17
    %s20 = sphi 0, %s18
    %s21 = sphi 0, %s19
    %s31 = sphi 0, %s33
    %s34 = sphi 0, %s31
    %s35 = sphi 0, %s34
    %s51 = sphi 0, %s35
    %s57 = sphi 0, %s59
    %s60 = sphi 0, %s57
    %s61 = sphi 0, %s60
    %s77 = sphi 0, %s61
    %s83 = sphi 0, %s85
    %s86 = sphi 0, %s83
    %s87 = sphi 0, %s86
    %s103 = sphi 0, %s87
    %s111 = sphi 0, %s113
    %s114 = sphi 0, %s111
    %s115 = sphi 0, %s114
    %s131 = sphi 0, %s115
  $region4: #{res_block_forward.4} parent=0 // loop_header_branch
    %12 = sbr.rel (%p10) target = $region8
  $region5: #{res_block_forward.4} parent=0 // loop_body
    %s14 = ssub.s32 %s9, 1
    %s15 = ssub.s32 %s9, 2
    %s22 = sadd.s32 1, %s17
    %p23 = scmp.ge.s32.totalorder %s22, 1
    %s24 = scalar_select %p23, 0, %s22
    %s25 = sadd.s32 1, %s16
    %s26 = scalar_select %p23, %s25, %s16
    %p27 = scmp.ge.s32.totalorder %s26, 2
    %s28 = scalar_select %p27, 0, %s26
    %s29 = ssub.s32 %s16, %s28
    %p30 = scmp.eq.s32.totalorder %s29, 0
    %s32 = sadd.s32 %s31, 1
    %s33 = scalar_select %p30, %s31, %s32
    %p36 = pneg %p30
    %p37 = scmp.eq.s32.totalorder %s9, 1
    %p38 = por %p36, %p37
    %p39 = scmp.ne.s32.totalorder %s31, %s34
    %p40 = scmp.eq.s32.totalorder %s9, 0
    %p41 = por %p39, %p40
    %p42 = scmp.ne.s32.totalorder %s31, %s34
    %p43 = scmp.eq.s32.totalorder %s14, 1
    %p44 = por %p42, %p43
    %p45 = scmp.ne.s32.totalorder %s34, %s35
    %p46 = scmp.eq.s32.totalorder %s14, 0
    %p47 = por %p45, %p46
    %p48 = scmp.ne.s32.totalorder %s34, %s35
    %p49 = scmp.eq.s32.totalorder %s15, 1
    %p50 = por %p48, %p49
    %p52 = scmp.ne.s32.totalorder %s35, %s51
    %p53 = scmp.eq.s32.totalorder %s15, 0
    %p54 = por %p52, %p53
    %s55 = ssub.s32 %s17, %s24
    %p56 = scmp.eq.s32.totalorder %s55, 0
    %s58 = sadd.s32 %s57, 1
    %s59 = scalar_select %p56, %s57, %s58
    %p62 = pneg %p56
    %p63 = scmp.eq.s32.totalorder %s9, 1
    %p64 = por %p62, %p63
    %p65 = scmp.ne.s32.totalorder %s57, %s60
    %p66 = scmp.eq.s32.totalorder %s9, 0
    %p67 = por %p65, %p66
    %p68 = scmp.ne.s32.totalorder %s57, %s60
    %p69 = scmp.eq.s32.totalorder %s14, 1
    %p70 = por %p68, %p69
    %p71 = scmp.ne.s32.totalorder %s60, %s61
    %p72 = scmp.eq.s32.totalorder %s14, 0
    %p73 = por %p71, %p72
    %p74 = scmp.ne.s32.totalorder %s60, %s61
    %p75 = scmp.eq.s32.totalorder %s15, 1
    %p76 = por %p74, %p75
    %p78 = scmp.ne.s32.totalorder %s61, %s77
    %p79 = scmp.eq.s32.totalorder %s15, 0
    %p80 = por %p78, %p79
    %s81 = ssub.s32 %s17, %s24
    %p82 = scmp.eq.s32.totalorder %s81, 0
    %s84 = sadd.s32 %s83, 1
    %s85 = scalar_select %p82, %s83, %s84
    %p88 = pneg %p82
    %p89 = scmp.eq.s32.totalorder %s9, 1
    %p90 = por %p88, %p89
    %p91 = scmp.ne.s32.totalorder %s83, %s86
    %p92 = scmp.eq.s32.totalorder %s9, 0
    %p93 = por %p91, %p92
    %p94 = scmp.ne.s32.totalorder %s83, %s86
    %p95 = scmp.eq.s32.totalorder %s14, 1
    %p96 = por %p94, %p95
    %p97 = scmp.ne.s32.totalorder %s86, %s87
    %p98 = scmp.eq.s32.totalorder %s14, 0
    %p99 = por %p97, %p98
    %p100 = scmp.ne.s32.totalorder %s86, %s87
    %p101 = scmp.eq.s32.totalorder %s15, 1
    %p102 = por %p100, %p101
    %p104 = scmp.ne.s32.totalorder %s87, %s103
    %p105 = scmp.eq.s32.totalorder %s15, 0
    %p106 = por %p104, %p105
    %s107 = ssub.s32 %s16, %s28
    %s108 = ssub.s32 %s17, %s24
    %s109 = sor.u32 %s107, %s108
    %p110 = scmp.eq.s32.totalorder %s109, 0
    %s112 = sadd.s32 %s111, 1
    %s113 = scalar_select %p110, %s111, %s112
    %p116 = pneg %p110
    %p117 = scmp.eq.s32.totalorder %s9, 1
    %p118 = por %p116, %p117
    %p119 = scmp.ne.s32.totalorder %s111, %s114
    %p120 = scmp.eq.s32.totalorder %s9, 0
    %p121 = por %p119, %p120
    %p122 = scmp.ne.s32.totalorder %s111, %s114
    %p123 = scmp.eq.s32.totalorder %s14, 1
    %p124 = por %p122, %p123
    %p125 = scmp.ne.s32.totalorder %s114, %s115
    %p126 = scmp.eq.s32.totalorder %s14, 0
    %p127 = por %p125, %p126
    %p128 = scmp.ne.s32.totalorder %s114, %s115
    %p129 = scmp.eq.s32.totalorder %s15, 1
    %p130 = por %p128, %p129
    %p132 = scmp.ne.s32.totalorder %s115, %s131
    %p133 = scmp.eq.s32.totalorder %s15, 0
    %p134 = por %p132, %p133
    %p135 = scmp.le.s32.totalorder 1, %s9
    %p136 = scmp.lt.s32.totalorder %s9, 3
    %p137 = pnand %p135, %p136
    %p138 = pneg %p137
    // Predicated region
    $region9: #{res_block_forward.4} parent=5 // pred_check
      _
    $region10: #{res_block_forward.4} parent=5 // pred_check_branch
      %140 = sbr.rel (%p137) target = $region12
    $region11: #{res_block_forward.4} parent=5 // pred_region
      %s141 = ssub.s32 %s9, 1
      // Predicated region
      $region13: #{res_block_forward.4} parent=11 // pred_check
        %p142 = pneg %p73
      $region14: #{res_block_forward.4} parent=11 // pred_check_branch
        %144 = sbr.rel (%p142) target = $region16
      $region15: #{res_block_forward.4} parent=11 // pred_region
        %s145 = smul.u32 2, %s19
        %p146 = scmp.lt.s32.totalorder %s145, 1
        %s147 = scalar_select %p146, %s145, 1
        %s148 = smul.addr %s147, 4
        %s149 = scalar_lea.vmem %s1, %s148
        %s150 = smul.u32 2, %s19
      $region16: #{res_block_forward.4} parent=11 // pred_fallthru
        _
      // Predicated region
      $region17: #{res_block_forward.4} parent=11 // pred_check
        %p151 = pneg %p99
      $region18: #{res_block_forward.4} parent=11 // pred_check_branch
        %153 = sbr.rel (%p151) target = $region20
      $region19: #{res_block_forward.4} parent=11 // pred_region
        %s154 = smul.u32 2, %s19
        %p155 = scmp.lt.s32.totalorder %s154, 1
        %s156 = scalar_select %p155, %s154, 1
        %s157 = smul.addr %s156, 8
        %s158 = scalar_lea.vmem %s2, %s157
        %s159 = smul.u32 2, %s19
      $region20: #{res_block_forward.4} parent=11 // pred_fallthru
        _
    $region12: #{res_block_forward.4} parent=5 // pred_fallthru
      _
    %p160 = scmp.lt.s32.totalorder %s9, 2
    // Predicated region
    $region21: #{res_block_forward.4} parent=5 // pred_check
      %p161 = pneg %p160
    $region22: #{res_block_forward.4} parent=5 // pred_check_branch
      %163 = sbr.rel (%p161) target = $region24
    $region23: #{res_block_forward.4} parent=5 // pred_region
      // Predicated region
      $region25: #{res_block_forward.4} parent=23 // pred_check
        %p164 = pneg %p41
      $region26: #{res_block_forward.4} parent=23 // pred_check_branch
        %166 = sbr.rel (%p164) target = $region28
      $region27: #{res_block_forward.4} parent=23 // pred_region
        %p167 = scmp.lt.s32.totalorder %s16, 1
        %s168 = scalar_select %p167, %s16, 1
        %s169 = smul.addr %s168, 16
        %s170 = smul.addr %s169, 4
        %s171 = scalar_lea.vmem %s0, %s170
      $region28: #{res_block_forward.4} parent=23 // pred_fallthru
        _
    $region24: #{res_block_forward.4} parent=5 // pred_fallthru
      _
    %p172 = scmp.le.s32.totalorder 1, %s9
    %p173 = scmp.lt.s32.totalorder %s9, 3
    %p174 = pnand %p172, %p173
    %p175 = pneg %p174
    // Predicated region
    $region29: #{res_block_forward.4} parent=5 // pred_check
      _
    $region30: #{res_block_forward.4} parent=5 // pred_check_branch
      %177 = sbr.rel (%p174) target = $region32
    $region31: #{res_block_forward.4} parent=5 // pred_region
      %s178 = ssub.s32 %s9, 1
      %p179 = scmp.lt.s32.totalorder %s18, 1
      %s180 = scalar_select %p179, %s18, 1
      %s181 = smul.addr %s180, 16
      %s182 = smul.addr %s181, 4
      %s183 = scalar_lea.vmem %s0, %s182
      %p184 = pneg %p47
      %p185 = pneg %p44
      %s186 = smul.u32 2, %s19
      %p187 = scmp.lt.s32.totalorder %s186, 1
      %s188 = scalar_select %p187, %s186, 1
      %s189 = smul.addr %s188, 4
      %s190 = scalar_lea.vmem %s1, %s189
      %p191 = pneg %p73
      %p192 = pneg %p70
      %s193 = smul.u32 2, %s19
      %p194 = scmp.lt.s32.totalorder %s193, 1
      %s195 = scalar_select %p194, %s193, 1
      %s196 = smul.addr %s195, 8
      %s197 = scalar_lea.vmem %s2, %s196
      %p198 = pneg %p99
      %p199 = pneg %p96
      %p200 = pneg %p127
      %p201 = pneg %p124
      %s202 = smul.u32 2, %s19
      %p203 = scmp.lt.s32.totalorder %s18, 1
      %s204 = scalar_select %p203, %s18, 1
      %p205 = scmp.lt.s32.totalorder %s202, 1
      %s206 = scalar_select %p205, %s202, 1
      %s207 = smul.addr %s204, 2
      %s208 = sadd.s32 %s206, %s207
      %s209 = smul.addr %s208, 8
      %s210 = scalar_lea.vmem %s3, %s209
      %p211 = scmp.lt.s32.totalorder %s18, 1
      %s212 = scalar_select %p211, %s18, 1
      %s213 = smul.addr %s212, 16
      %s214 = smul.addr %s213, 4
      %s215 = scalar_lea.vmem %s0, %s214
      %s216 = smul.u32 2, %s19
      %p217 = scmp.lt.s32.totalorder %s216, 1
      %s218 = scalar_select %p217, %s216, 1
      %s219 = smul.addr %s218, 4
      %s220 = scalar_lea.vmem %s1, %s219
      %s221 = smul.u32 2, %s19
      %s222 = smul.u32 2, %s19
      %p223 = scmp.lt.s32.totalorder %s222, 1
      %s224 = scalar_select %p223, %s222, 1
      %s225 = smul.addr %s224, 8
      %s226 = scalar_lea.vmem %s2, %s225
      %s227 = smul.u32 2, %s19
      %s228 = smul.u32 2, %s19
      %p229 = scmp.lt.s32.totalorder %s18, 1
      %s230 = scalar_select %p229, %s18, 1
      %p231 = scmp.lt.s32.totalorder %s228, 1
      %s232 = scalar_select %p231, %s228, 1
      %s233 = smul.addr %s230, 2
      %s234 = sadd.s32 %s232, %s233
      %s235 = smul.addr %s234, 8
      %s236 = scalar_lea.vmem %s3, %s235
      %s237 = smul.u32 2, %s19
      %v239 = vld [vmem:[%s215] sm:$0xf]
      %v240 = vld [vmem:[%s215 + $0x8] sm:$0xf]
      %v241 = vld [vmem:[%s215 + $0x10] sm:$0xf]
      %v242 = vld [vmem:[%s215 + $0x18] sm:$0xf]
      %v243 = vld [vmem:[%s215 + $0x20] sm:$0xf]
      %v244 = vld [vmem:[%s215 + $0x28] sm:$0xf]
      %v245 = vld [vmem:[%s215 + $0x30] sm:$0xf]
      %v246 = vld [vmem:[%s215 + $0x38] sm:$0xf]
      %v247 = vld [vmem:[%s220] sm:$0xf]
      %v248 = vld [vmem:[%s220 + $0x4] sm:$0xf]
      %v249 = vld [vmem:[%s215] sm:$0xff]
      %v250 = vld [vmem:[%s215 + $0x8] sm:$0xff]
      %v251 = vld [vmem:[%s215 + $0x10] sm:$0xff]
      %v252 = vld [vmem:[%s215 + $0x18] sm:$0xff]
      %v253 = vld [vmem:[%s215 + $0x20] sm:$0xff]
      %v254 = vld [vmem:[%s215 + $0x28] sm:$0xff]
      %v255 = vld [vmem:[%s215 + $0x30] sm:$0xff]
      %v256 = vld [vmem:[%s215 + $0x38] sm:$0xff]
      %s257 = scalar_lea.vmem %s220, 8
      %v258 = vld [vmem:[%s257] sm:$0xf]
      %v259 = vld [vmem:[%s257 + $0x4] sm:$0xf]
      %v262 = vunpack.c.l.b16 %v258
      %v263 = vunpack.c.l.b16 %v259
      %v264 = vpack.c.b16 %v263, %v262
      %v273 = vunpack.c.l.b16 %v249
      %v274 = vunpack.c.h.b16 %v249
      %v275 = vunpack.c.l.b16 %v250
      %v276 = vunpack.c.h.b16 %v250
      %v277 = vunpack.c.l.b16 %v251
      %v278 = vunpack.c.h.b16 %v251
      %v279 = vunpack.c.l.b16 %v252
      %v280 = vunpack.c.h.b16 %v252
      %v281 = vunpack.c.l.b16 %v253
      %v282 = vunpack.c.h.b16 %v253
      %v283 = vunpack.c.l.b16 %v254
      %v284 = vunpack.c.h.b16 %v254
      %v285 = vunpack.c.l.b16 %v255
      %v286 = vunpack.c.h.b16 %v255
      %v287 = vunpack.c.l.b16 %v256
      %v288 = vunpack.c.h.b16 %v256
      %v289 = vpack.c.b16 %v275, %v273
      %v290 = vpack.c.b16 %v276, %v274
      %v291 = vpack.c.b16 %v279, %v277
      %v292 = vpack.c.b16 %v280, %v278
      %v293 = vpack.c.b16 %v283, %v281
      %v294 = vpack.c.b16 %v284, %v282
      %v295 = vpack.c.b16 %v287, %v285
      %v296 = vpack.c.b16 %v288, %v286
      %297 = vrot.lane.b32.xlu0 %v289, 127
      %v298 = vpop.permute.xlu0 %297
      %299 = vrot.lane.b32.xlu0 %v290, 127
      %v300 = vpop.permute.xlu0 %299
      %301 = vrot.lane.b32.xlu0 %v291, 127
      %v302 = vpop.permute.xlu0 %301
      %303 = vrot.lane.b32.xlu0 %v292, 127
      %v304 = vpop.permute.xlu0 %303
      %305 = vrot.lane.b32.xlu0 %v293, 127
      %v306 = vpop.permute.xlu0 %305
      %307 = vrot.lane.b32.xlu0 %v294, 127
      %v308 = vpop.permute.xlu0 %307
      %309 = vrot.lane.b32.xlu0 %v295, 127
      %v310 = vpop.permute.xlu0 %309
      %311 = vrot.lane.b32.xlu0 %v296, 127
      %v312 = vpop.permute.xlu0 %311
      %vm313 = vcmask 1039360
      %v314 = vsel %vm313, %v298, %v300
      %v315 = vsel %vm313, %v302, %v304
      %v316 = vsel %vm313, %v306, %v308
      %v317 = vsel %vm313, %v310, %v312
      %vm322 = vcmask 523264
      %v324 = vsel %vm322, %v264, 0
      %326 = vmatprep.subr.bf16.mxu0 0
      %327 = vmatpush1.bf16.msra.mxu0 0
      %328 = vmatprep.subr.bf16.mxu0 0
      %329 = vmatpush1.bf16.msra.mxu0 0
      %330 = vmatprep.subr.bf16.mxu0 0
      %331 = vmatpush1.bf16.msra.mxu0 0
      %332 = vmatprep.subr.bf16.mxu0 0
      %333 = vmatpush1.bf16.msra.mxu0 0
      %334 = vmatprep.subr.bf16.mxu0 0
      %335 = vmatpush1.bf16.msra.mxu0 %v317
      %336 = vmatprep.subr.bf16.mxu0 0
      %337 = vmatpush1.bf16.msra.mxu0 %v316
      %338 = vmatprep.subr.bf16.mxu0 0
      %339 = vmatpush1.bf16.msra.mxu0 %v315
      %340 = vmatprep.subr.bf16.mxu0 0
      %341 = vmatpush1.bf16.msra.mxu0 %v314
      %342 = vmatprep.subr.bf16.mxu0 0
      %343 = vmatpush2.bf16.msra.mxu0 0
      %344 = vmatprep.subr.bf16.mxu0 0
      %345 = vmatpush2.bf16.msra.mxu0 0
      %346 = vmatprep.subr.bf16.mxu0 0
      %347 = vmatpush2.bf16.msra.mxu0 0
      %348 = vmatprep.subr.bf16.mxu0 0
      %349 = vmatpush2.bf16.msra.mxu0 0
      %350 = vmatprep.subr.bf16.mxu0 0
      %351 = vmatpush2.bf16.msra.mxu0 0
      %352 = vmatprep.subr.bf16.mxu0 0
      %353 = vmatpush2.bf16.msra.mxu0 0
      %354 = vmatprep.subr.bf16.mxu0 0
      %355 = vmatpush2.bf16.msra.mxu0 0
      %356 = vmatprep.subr.bf16.mxu0 0
      %357 = vmatpush2.bf16.msra.mxu0 0
      %358 = vmatprep.mubr.bf16.mxu0 0
      %359 = vmatmul.mubr.bf16.gmra.mxu0 %v324
      %v360 = vpop.f32.mrf.mxu0
      %v361 = vadd.f32 0.0, %v360
      %v362 = vpop.f32.mrf.mxu0
      %v363 = vpop.f32.mrf.mxu0
      %v364 = vadd.f32 0.0, %v363
      %v365 = vpop.f32.mrf.mxu0
      %366 = vdwg.mxu0
      %v369 = vunpack.c.l.b16 %v247
      %v370 = vunpack.c.l.b16 %v248
      %v371 = vpack.c.b16 %v370, %v369
      %v380 = vunpack.c.l.b16 %v239
      %v381 = vunpack.c.l.b16 %v240
      %v382 = vunpack.c.l.b16 %v241
      %v383 = vunpack.c.l.b16 %v242
      %v384 = vunpack.c.l.b16 %v243
      %v385 = vunpack.c.l.b16 %v244
      %v386 = vunpack.c.l.b16 %v245
      %v387 = vunpack.c.l.b16 %v246
      %v388 = vpack.c.b16 %v381, %v380
      %v389 = vpack.c.b16 %v383, %v382
      %v390 = vpack.c.b16 %v385, %v384
      %v391 = vpack.c.b16 %v387, %v386
      %v397 = vsel %vm322, %v371, 0
      %399 = vmatprep.subr.bf16.mxu0 0
      %400 = vmatpush1.bf16.msra.mxu0 0
      %401 = vmatprep.subr.bf16.mxu0 0
      %402 = vmatpush1.bf16.msra.mxu0 0
      %403 = vmatprep.subr.bf16.mxu0 0
      %404 = vmatpush1.bf16.msra.mxu0 0
      %405 = vmatprep.subr.bf16.mxu0 0
      %406 = vmatpush1.bf16.msra.mxu0 0
      %407 = vmatprep.subr.bf16.mxu0 0
      %408 = vmatpush1.bf16.msra.mxu0 %v391
      %409 = vmatprep.subr.bf16.mxu0 0
      %410 = vmatpush1.bf16.msra.mxu0 %v390
      %411 = vmatprep.subr.bf16.mxu0 0
      %412 = vmatpush1.bf16.msra.mxu0 %v389
      %413 = vmatprep.subr.bf16.mxu0 0
      %414 = vmatpush1.bf16.msra.mxu0 %v388
      %415 = vmatprep.subr.bf16.mxu0 0
      %416 = vmatpush2.bf16.msra.mxu0 0
      %417 = vmatprep.subr.bf16.mxu0 0
      %418 = vmatpush2.bf16.msra.mxu0 0
      %419 = vmatprep.subr.bf16.mxu0 0
      %420 = vmatpush2.bf16.msra.mxu0 0
      %421 = vmatprep.subr.bf16.mxu0 0
      %422 = vmatpush2.bf16.msra.mxu0 0
      %423 = vmatprep.subr.bf16.mxu0 0
      %424 = vmatpush2.bf16.msra.mxu0 0
      %425 = vmatprep.subr.bf16.mxu0 0
      %426 = vmatpush2.bf16.msra.mxu0 0
      %427 = vmatprep.subr.bf16.mxu0 0
      %428 = vmatpush2.bf16.msra.mxu0 0
      %429 = vmatprep.subr.bf16.mxu0 0
      %430 = vmatpush2.bf16.msra.mxu0 0
      %431 = vmatprep.mubr.bf16.mxu0 0
      %432 = vmatmul.mubr.bf16.gmra.mxu0 %v397
      %v433 = vpop.f32.mrf.mxu0
      %v434 = vadd.f32 %v361, %v433
      %v435 = vpop.f32.mrf.mxu0
      %v436 = vpop.f32.mrf.mxu0
      %v437 = vadd.f32 %v364, %v436
      %v438 = vpop.f32.mrf.mxu0
      %439 = vdwg.mxu0
      %s440 = scalar_lea.vmem %s220, 16
      %v441 = vld [vmem:[%s440] sm:$0xf]
      %v442 = vld [vmem:[%s440 + $0x4] sm:$0xf]
      %v445 = vunpack.c.l.b16 %v441
      %v446 = vunpack.c.l.b16 %v442
      %v447 = vpack.c.b16 %v446, %v445
      %448 = vrot.lane.b32.xlu0 %v289, 126
      %v449 = vpop.permute.xlu0 %448
      %450 = vrot.lane.b32.xlu0 %v290, 126
      %v451 = vpop.permute.xlu0 %450
      %452 = vrot.lane.b32.xlu0 %v291, 126
      %v453 = vpop.permute.xlu0 %452
      %454 = vrot.lane.b32.xlu0 %v292, 126
      %v455 = vpop.permute.xlu0 %454
      %456 = vrot.lane.b32.xlu0 %v293, 126
      %v457 = vpop.permute.xlu0 %456
      %458 = vrot.lane.b32.xlu0 %v294, 126
      %v459 = vpop.permute.xlu0 %458
      %460 = vrot.lane.b32.xlu0 %v295, 126
      %v461 = vpop.permute.xlu0 %460
      %462 = vrot.lane.b32.xlu0 %v296, 126
      %v463 = vpop.permute.xlu0 %462
      %vm464 = vcmask 1031168
      %v465 = vsel %vm464, %v449, %v451
      %v466 = vsel %vm464, %v453, %v455
      %v467 = vsel %vm464, %v457, %v459
      %v468 = vsel %vm464, %v461, %v463
      %v474 = vsel %vm322, %v447, 0
      %476 = vmatprep.subr.bf16.mxu0 0
      %477 = vmatpush1.bf16.msra.mxu0 0
      %478 = vmatprep.subr.bf16.mxu0 0
      %479 = vmatpush1.bf16.msra.mxu0 0
      %480 = vmatprep.subr.bf16.mxu0 0
      %481 = vmatpush1.bf16.msra.mxu0 0
      %482 = vmatprep.subr.bf16.mxu0 0
      %483 = vmatpush1.bf16.msra.mxu0 0
      %484 = vmatprep.subr.bf16.mxu0 0
      %485 = vmatpush1.bf16.msra.mxu0 %v468
      %486 = vmatprep.subr.bf16.mxu0 0
      %487 = vmatpush1.bf16.msra.mxu0 %v467
      %488 = vmatprep.subr.bf16.mxu0 0
      %489 = vmatpush1.bf16.msra.mxu0 %v466
      %490 = vmatprep.subr.bf16.mxu0 0
      %491 = vmatpush1.bf16.msra.mxu0 %v465
      %492 = vmatprep.subr.bf16.mxu0 0
      %493 = vmatpush2.bf16.msra.mxu0 0
      %494 = vmatprep.subr.bf16.mxu0 0
      %495 = vmatpush2.bf16.msra.mxu0 0
      %496 = vmatprep.subr.bf16.mxu0 0
      %497 = vmatpush2.bf16.msra.mxu0 0
      %498 = vmatprep.subr.bf16.mxu0 0
      %499 = vmatpush2.bf16.msra.mxu0 0
      %500 = vmatprep.subr.bf16.mxu0 0
      %501 = vmatpush2.bf16.msra.mxu0 0
      %502 = vmatprep.subr.bf16.mxu0 0
      %503 = vmatpush2.bf16.msra.mxu0 0
      %504 = vmatprep.subr.bf16.mxu0 0
      %505 = vmatpush2.bf16.msra.mxu0 0
      %506 = vmatprep.subr.bf16.mxu0 0
      %507 = vmatpush2.bf16.msra.mxu0 0
      %508 = vmatprep.mubr.bf16.mxu0 0
      %509 = vmatmul.mubr.bf16.gmra.mxu0 %v474
      %v510 = vpop.f32.mrf.mxu0
      %v511 = vadd.f32 0.0, %v510
      %v512 = vpop.f32.mrf.mxu0
      %v513 = vpop.f32.mrf.mxu0
      %v514 = vadd.f32 0.0, %v513
      %v515 = vpop.f32.mrf.mxu0
      %516 = vdwg.mxu0
      %v517 = vadd.f32 %v434, %v511
      %v518 = vadd.f32 %v437, %v514
      %s519 = scalar_lea.vmem %s220, 24
      %v520 = vld [vmem:[%s519] sm:$0xf]
      %v521 = vld [vmem:[%s519 + $0x4] sm:$0xf]
      %v524 = vunpack.c.l.b16 %v520
      %v525 = vunpack.c.l.b16 %v521
      %v526 = vpack.c.b16 %v525, %v524
      %527 = vrot.lane.b32.xlu0 %v289, 118
      %v528 = vpop.permute.xlu0 %527
      %529 = vrot.lane.b32.xlu0 %v290, 118
      %v530 = vpop.permute.xlu0 %529
      %531 = vrot.lane.b32.xlu0 %v291, 118
      %v532 = vpop.permute.xlu0 %531
      %533 = vrot.lane.b32.xlu0 %v292, 118
      %v534 = vpop.permute.xlu0 %533
      %535 = vrot.lane.b32.xlu0 %v293, 118
      %v536 = vpop.permute.xlu0 %535
      %537 = vrot.lane.b32.xlu0 %v294, 118
      %v538 = vpop.permute.xlu0 %537
      %539 = vrot.lane.b32.xlu0 %v295, 118
      %v540 = vpop.permute.xlu0 %539
      %541 = vrot.lane.b32.xlu0 %v296, 118
      %v542 = vpop.permute.xlu0 %541
      %vm543 = vcmask 965632
      %v544 = vsel %vm543, %v528, %v530
      %v545 = vsel %vm543, %v532, %v534
      %v546 = vsel %vm543, %v536, %v538
      %v547 = vsel %vm543, %v540, %v542
      %v553 = vsel %vm322, %v526, 0
      %555 = vmatprep.subr.bf16.mxu0 0
      %556 = vmatpush1.bf16.msra.mxu0 0
      %557 = vmatprep.subr.bf16.mxu0 0
      %558 = vmatpush1.bf16.msra.mxu0 0
      %559 = vmatprep.subr.bf16.mxu0 0
      %560 = vmatpush1.bf16.msra.mxu0 0
      %561 = vmatprep.subr.bf16.mxu0 0
      %562 = vmatpush1.bf16.msra.mxu0 0
      %563 = vmatprep.subr.bf16.mxu0 0
      %564 = vmatpush1.bf16.msra.mxu0 %v547
      %565 = vmatprep.subr.bf16.mxu0 0
      %566 = vmatpush1.bf16.msra.mxu0 %v546
      %567 = vmatprep.subr.bf16.mxu0 0
      %568 = vmatpush1.bf16.msra.mxu0 %v545
      %569 = vmatprep.subr.bf16.mxu0 0
      %570 = vmatpush1.bf16.msra.mxu0 %v544
      %571 = vmatprep.subr.bf16.mxu0 0
      %572 = vmatpush2.bf16.msra.mxu0 0
      %573 = vmatprep.subr.bf16.mxu0 0
      %574 = vmatpush2.bf16.msra.mxu0 0
      %575 = vmatprep.subr.bf16.mxu0 0
      %576 = vmatpush2.bf16.msra.mxu0 0
      %577 = vmatprep.subr.bf16.mxu0 0
      %578 = vmatpush2.bf16.msra.mxu0 0
      %579 = vmatprep.subr.bf16.mxu0 0
      %580 = vmatpush2.bf16.msra.mxu0 0
      %581 = vmatprep.subr.bf16.mxu0 0
      %582 = vmatpush2.bf16.msra.mxu0 0
      %583 = vmatprep.subr.bf16.mxu0 0
      %584 = vmatpush2.bf16.msra.mxu0 0
      %585 = vmatprep.subr.bf16.mxu0 0
      %586 = vmatpush2.bf16.msra.mxu0 0
      %587 = vmatprep.mubr.bf16.mxu0 0
      %588 = vmatmul.mubr.bf16.gmra.mxu0 %v553
      %v589 = vpop.f32.mrf.mxu0
      %v590 = vadd.f32 0.0, %v589
      %v591 = vpop.f32.mrf.mxu0
      %v592 = vpop.f32.mrf.mxu0
      %v593 = vadd.f32 0.0, %v592
      %v594 = vpop.f32.mrf.mxu0
      %595 = vdwg.mxu0
      %v596 = vadd.f32 %v517, %v590
      %v597 = vadd.f32 %v518, %v593
      %s598 = scalar_lea.vmem %s220, 32
      %v599 = vld [vmem:[%s598] sm:$0xf]
      %v600 = vld [vmem:[%s598 + $0x4] sm:$0xf]
      %v603 = vunpack.c.l.b16 %v599
      %v604 = vunpack.c.l.b16 %v600
      %v605 = vpack.c.b16 %v604, %v603
      %606 = vrot.lane.b32.xlu0 %v289, 117
      %v607 = vpop.permute.xlu0 %606
      %608 = vrot.lane.b32.xlu0 %v290, 117
      %v609 = vpop.permute.xlu0 %608
      %610 = vrot.lane.b32.xlu0 %v291, 117
      %v611 = vpop.permute.xlu0 %610
      %612 = vrot.lane.b32.xlu0 %v292, 117
      %v613 = vpop.permute.xlu0 %612
      %614 = vrot.lane.b32.xlu0 %v293, 117
      %v615 = vpop.permute.xlu0 %614
      %616 = vrot.lane.b32.xlu0 %v294, 117
      %v617 = vpop.permute.xlu0 %616
      %618 = vrot.lane.b32.xlu0 %v295, 117
      %v619 = vpop.permute.xlu0 %618
      %620 = vrot.lane.b32.xlu0 %v296, 117
      %v621 = vpop.permute.xlu0 %620
      %vm622 = vcmask 957440
      %v623 = vsel %vm622, %v607, %v609
      %v624 = vsel %vm622, %v611, %v613
      %v625 = vsel %vm622, %v615, %v617
      %v626 = vsel %vm622, %v619, %v621
      %v632 = vsel %vm322, %v605, 0
      %634 = vmatprep.subr.bf16.mxu0 0
      %635 = vmatpush1.bf16.msra.mxu0 0
      %636 = vmatprep.subr.bf16.mxu0 0
      %637 = vmatpush1.bf16.msra.mxu0 0
      %638 = vmatprep.subr.bf16.mxu0 0
      %639 = vmatpush1.bf16.msra.mxu0 0
      %640 = vmatprep.subr.bf16.mxu0 0
      %641 = vmatpush1.bf16.msra.mxu0 0
      %642 = vmatprep.subr.bf16.mxu0 0
      %643 = vmatpush1.bf16.msra.mxu0 %v626
      %644 = vmatprep.subr.bf16.mxu0 0
      %645 = vmatpush1.bf16.msra.mxu0 %v625
      %646 = vmatprep.subr.bf16.mxu0 0
      %647 = vmatpush1.bf16.msra.mxu0 %v624
      %648 = vmatprep.subr.bf16.mxu0 0
      %649 = vmatpush1.bf16.msra.mxu0 %v623
      %650 = vmatprep.subr.bf16.mxu0 0
      %651 = vmatpush2.bf16.msra.mxu0 0
      %652 = vmatprep.subr.bf16.mxu0 0
      %653 = vmatpush2.bf16.msra.mxu0 0
      %654 = vmatprep.subr.bf16.mxu0 0
      %655 = vmatpush2.bf16.msra.mxu0 0
      %656 = vmatprep.subr.bf16.mxu0 0
      %657 = vmatpush2.bf16.msra.mxu0 0
      %658 = vmatprep.subr.bf16.mxu0 0
      %659 = vmatpush2.bf16.msra.mxu0 0
      %660 = vmatprep.subr.bf16.mxu0 0
      %661 = vmatpush2.bf16.msra.mxu0 0
      %662 = vmatprep.subr.bf16.mxu0 0
      %663 = vmatpush2.bf16.msra.mxu0 0
      %664 = vmatprep.subr.bf16.mxu0 0
      %665 = vmatpush2.bf16.msra.mxu0 0
      %666 = vmatprep.mubr.bf16.mxu0 0
      %667 = vmatmul.mubr.bf16.gmra.mxu0 %v632
      %v668 = vpop.f32.mrf.mxu0
      %v669 = vadd.f32 0.0, %v668
      %v670 = vpop.f32.mrf.mxu0
      %v671 = vpop.f32.mrf.mxu0
      %v672 = vadd.f32 0.0, %v671
      %v673 = vpop.f32.mrf.mxu0
      %674 = vdwg.mxu0
      %v675 = vadd.f32 %v596, %v669
      %v676 = vadd.f32 %v597, %v672
      %s677 = scalar_lea.vmem %s220, 40
      %v678 = vld [vmem:[%s677] sm:$0xf]
      %v679 = vld [vmem:[%s677 + $0x4] sm:$0xf]
      %v682 = vunpack.c.l.b16 %v678
      %v683 = vunpack.c.l.b16 %v679
      %v684 = vpack.c.b16 %v683, %v682
      %685 = vrot.lane.b32.xlu0 %v289, 116
      %v686 = vpop.permute.xlu0 %685
      %687 = vrot.lane.b32.xlu0 %v290, 116
      %v688 = vpop.permute.xlu0 %687
      %689 = vrot.lane.b32.xlu0 %v291, 116
      %v690 = vpop.permute.xlu0 %689
      %691 = vrot.lane.b32.xlu0 %v292, 116
      %v692 = vpop.permute.xlu0 %691
      %693 = vrot.lane.b32.xlu0 %v293, 116
      %v694 = vpop.permute.xlu0 %693
      %695 = vrot.lane.b32.xlu0 %v294, 116
      %v696 = vpop.permute.xlu0 %695
      %697 = vrot.lane.b32.xlu0 %v295, 116
      %v698 = vpop.permute.xlu0 %697
      %699 = vrot.lane.b32.xlu0 %v296, 116
      %v700 = vpop.permute.xlu0 %699
      %vm701 = vcmask 949248
      %v702 = vsel %vm701, %v686, %v688
      %v703 = vsel %vm701, %v690, %v692
      %v704 = vsel %vm701, %v694, %v696
      %v705 = vsel %vm701, %v698, %v700
      %v711 = vsel %vm322, %v684, 0
      %713 = vmatprep.subr.bf16.mxu0 0
      %714 = vmatpush1.bf16.msra.mxu0 0
      %715 = vmatprep.subr.bf16.mxu0 0
      %716 = vmatpush1.bf16.msra.mxu0 0
      %717 = vmatprep.subr.bf16.mxu0 0
      %718 = vmatpush1.bf16.msra.mxu0 0
      %719 = vmatprep.subr.bf16.mxu0 0
      %720 = vmatpush1.bf16.msra.mxu0 0
      %721 = vmatprep.subr.bf16.mxu0 0
      %722 = vmatpush1.bf16.msra.mxu0 %v705
      %723 = vmatprep.subr.bf16.mxu0 0
      %724 = vmatpush1.bf16.msra.mxu0 %v704
      %725 = vmatprep.subr.bf16.mxu0 0
      %726 = vmatpush1.bf16.msra.mxu0 %v703
      %727 = vmatprep.subr.bf16.mxu0 0
      %728 = vmatpush1.bf16.msra.mxu0 %v702
      %729 = vmatprep.subr.bf16.mxu0 0
      %730 = vmatpush2.bf16.msra.mxu0 0
      %731 = vmatprep.subr.bf16.mxu0 0
      %732 = vmatpush2.bf16.msra.mxu0 0
      %733 = vmatprep.subr.bf16.mxu0 0
      %734 = vmatpush2.bf16.msra.mxu0 0
      %735 = vmatprep.subr.bf16.mxu0 0
      %736 = vmatpush2.bf16.msra.mxu0 0
      %737 = vmatprep.subr.bf16.mxu0 0
      %738 = vmatpush2.bf16.msra.mxu0 0
      %739 = vmatprep.subr.bf16.mxu0 0
      %740 = vmatpush2.bf16.msra.mxu0 0
      %741 = vmatprep.subr.bf16.mxu0 0
      %742 = vmatpush2.bf16.msra.mxu0 0
      %743 = vmatprep.subr.bf16.mxu0 0
      %744 = vmatpush2.bf16.msra.mxu0 0
      %745 = vmatprep.mubr.bf16.mxu0 0
      %746 = vmatmul.mubr.bf16.gmra.mxu0 %v711
      %v747 = vpop.f32.mrf.mxu0
      %v748 = vadd.f32 0.0, %v747
      %v749 = vpop.f32.mrf.mxu0
      %v750 = vpop.f32.mrf.mxu0
      %v751 = vadd.f32 0.0, %v750
      %v752 = vpop.f32.mrf.mxu0
      %753 = vdwg.mxu0
      %v754 = vadd.f32 %v675, %v748
      %v755 = vadd.f32 %v676, %v751
      %s756 = scalar_lea.vmem %s220, 48
      %v757 = vld [vmem:[%s756] sm:$0xf]
      %v758 = vld [vmem:[%s756 + $0x4] sm:$0xf]
      %v761 = vunpack.c.l.b16 %v757
      %v762 = vunpack.c.l.b16 %v758
      %v763 = vpack.c.b16 %v762, %v761
      %764 = vrot.lane.b32.xlu0 %v289, 108
      %v765 = vpop.permute.xlu0 %764
      %766 = vrot.lane.b32.xlu0 %v290, 108
      %v767 = vpop.permute.xlu0 %766
      %768 = vrot.lane.b32.xlu0 %v291, 108
      %v769 = vpop.permute.xlu0 %768
      %770 = vrot.lane.b32.xlu0 %v292, 108
      %v771 = vpop.permute.xlu0 %770
      %772 = vrot.lane.b32.xlu0 %v293, 108
      %v773 = vpop.permute.xlu0 %772
      %774 = vrot.lane.b32.xlu0 %v294, 108
      %v775 = vpop.permute.xlu0 %774
      %776 = vrot.lane.b32.xlu0 %v295, 108
      %v777 = vpop.permute.xlu0 %776
      %778 = vrot.lane.b32.xlu0 %v296, 108
      %v779 = vpop.permute.xlu0 %778
      %vm780 = vcmask 883712
      %v781 = vsel %vm780, %v765, %v767
      %v782 = vsel %vm780, %v769, %v771
      %v783 = vsel %vm780, %v773, %v775
      %v784 = vsel %vm780, %v777, %v779
      %v790 = vsel %vm322, %v763, 0
      %792 = vmatprep.subr.bf16.mxu0 0
      %793 = vmatpush1.bf16.msra.mxu0 0
      %794 = vmatprep.subr.bf16.mxu0 0
      %795 = vmatpush1.bf16.msra.mxu0 0
      %796 = vmatprep.subr.bf16.mxu0 0
      %797 = vmatpush1.bf16.msra.mxu0 0
      %798 = vmatprep.subr.bf16.mxu0 0
      %799 = vmatpush1.bf16.msra.mxu0 0
      %800 = vmatprep.subr.bf16.mxu0 0
      %801 = vmatpush1.bf16.msra.mxu0 %v784
      %802 = vmatprep.subr.bf16.mxu0 0
      %803 = vmatpush1.bf16.msra.mxu0 %v783
      %804 = vmatprep.subr.bf16.mxu0 0
      %805 = vmatpush1.bf16.msra.mxu0 %v782
      %806 = vmatprep.subr.bf16.mxu0 0
      %807 = vmatpush1.bf16.msra.mxu0 %v781
      %808 = vmatprep.subr.bf16.mxu0 0
      %809 = vmatpush2.bf16.msra.mxu0 0
      %810 = vmatprep.subr.bf16.mxu0 0
      %811 = vmatpush2.bf16.msra.mxu0 0
      %812 = vmatprep.subr.bf16.mxu0 0
      %813 = vmatpush2.bf16.msra.mxu0 0
      %814 = vmatprep.subr.bf16.mxu0 0
      %815 = vmatpush2.bf16.msra.mxu0 0
      %816 = vmatprep.subr.bf16.mxu0 0
      %817 = vmatpush2.bf16.msra.mxu0 0
      %818 = vmatprep.subr.bf16.mxu0 0
      %819 = vmatpush2.bf16.msra.mxu0 0
      %820 = vmatprep.subr.bf16.mxu0 0
      %821 = vmatpush2.bf16.msra.mxu0 0
      %822 = vmatprep.subr.bf16.mxu0 0
      %823 = vmatpush2.bf16.msra.mxu0 0
      %824 = vmatprep.mubr.bf16.mxu0 0
      %825 = vmatmul.mubr.bf16.gmra.mxu0 %v790
      %v826 = vpop.f32.mrf.mxu0
      %v827 = vadd.f32 0.0, %v826
      %v828 = vpop.f32.mrf.mxu0
      %v829 = vpop.f32.mrf.mxu0
      %v830 = vadd.f32 0.0, %v829
      %v831 = vpop.f32.mrf.mxu0
      %832 = vdwg.mxu0
      %v833 = vadd.f32 %v754, %v827
      %v834 = vadd.f32 %v755, %v830
      %s835 = scalar_lea.vmem %s220, 56
      %v836 = vld [vmem:[%s835] sm:$0xf]
      %v837 = vld [vmem:[%s835 + $0x4] sm:$0xf]
      %v840 = vunpack.c.l.b16 %v836
      %v841 = vunpack.c.l.b16 %v837
      %v842 = vpack.c.b16 %v841, %v840
      %843 = vrot.lane.b32.xlu0 %v289, 107
      %v844 = vpop.permute.xlu0 %843
      %845 = vrot.lane.b32.xlu0 %v290, 107
      %v846 = vpop.permute.xlu0 %845
      %847 = vrot.lane.b32.xlu0 %v291, 107
      %v848 = vpop.permute.xlu0 %847
      %849 = vrot.lane.b32.xlu0 %v292, 107
      %v850 = vpop.permute.xlu0 %849
      %851 = vrot.lane.b32.xlu0 %v293, 107
      %v852 = vpop.permute.xlu0 %851
      %853 = vrot.lane.b32.xlu0 %v294, 107
      %v854 = vpop.permute.xlu0 %853
      %855 = vrot.lane.b32.xlu0 %v295, 107
      %v856 = vpop.permute.xlu0 %855
      %857 = vrot.lane.b32.xlu0 %v296, 107
      %v858 = vpop.permute.xlu0 %857
      %vm859 = vcmask 875520
      %v860 = vsel %vm859, %v844, %v846
      %v861 = vsel %vm859, %v848, %v850
      %v862 = vsel %vm859, %v852, %v854
      %v863 = vsel %vm859, %v856, %v858
      %v869 = vsel %vm322, %v842, 0
      %871 = vmatprep.subr.bf16.mxu0 0
      %872 = vmatpush1.bf16.msra.mxu0 0
      %873 = vmatprep.subr.bf16.mxu0 0
      %874 = vmatpush1.bf16.msra.mxu0 0
      %875 = vmatprep.subr.bf16.mxu0 0
      %876 = vmatpush1.bf16.msra.mxu0 0
      %877 = vmatprep.subr.bf16.mxu0 0
      %878 = vmatpush1.bf16.msra.mxu0 0
      %879 = vmatprep.subr.bf16.mxu0 0
      %880 = vmatpush1.bf16.msra.mxu0 %v863
      %881 = vmatprep.subr.bf16.mxu0 0
      %882 = vmatpush1.bf16.msra.mxu0 %v862
      %883 = vmatprep.subr.bf16.mxu0 0
      %884 = vmatpush1.bf16.msra.mxu0 %v861
      %885 = vmatprep.subr.bf16.mxu0 0
      %886 = vmatpush1.bf16.msra.mxu0 %v860
      %887 = vmatprep.subr.bf16.mxu0 0
      %888 = vmatpush2.bf16.msra.mxu0 0
      %889 = vmatprep.subr.bf16.mxu0 0
      %890 = vmatpush2.bf16.msra.mxu0 0
      %891 = vmatprep.subr.bf16.mxu0 0
      %892 = vmatpush2.bf16.msra.mxu0 0
      %893 = vmatprep.subr.bf16.mxu0 0
      %894 = vmatpush2.bf16.msra.mxu0 0
      %895 = vmatprep.subr.bf16.mxu0 0
      %896 = vmatpush2.bf16.msra.mxu0 0
      %897 = vmatprep.subr.bf16.mxu0 0
      %898 = vmatpush2.bf16.msra.mxu0 0
      %899 = vmatprep.subr.bf16.mxu0 0
      %900 = vmatpush2.bf16.msra.mxu0 0
      %901 = vmatprep.subr.bf16.mxu0 0
      %902 = vmatpush2.bf16.msra.mxu0 0
      %903 = vmatprep.mubr.bf16.mxu0 0
      %904 = vmatmul.mubr.bf16.gmra.mxu0 %v869
      %v905 = vpop.f32.mrf.mxu0
      %v906 = vadd.f32 0.0, %v905
      %v907 = vpop.f32.mrf.mxu0
      %v908 = vpop.f32.mrf.mxu0
      %v909 = vadd.f32 0.0, %v908
      %v910 = vpop.f32.mrf.mxu0
      %911 = vdwg.mxu0
      %v912 = vadd.f32 %v833, %v906
      %v913 = vadd.f32 %v834, %v909
      %s914 = scalar_lea.vmem %s220, 64
      %v915 = vld [vmem:[%s914] sm:$0xf]
      %v916 = vld [vmem:[%s914 + $0x4] sm:$0xf]
      %v919 = vunpack.c.l.b16 %v915
      %v920 = vunpack.c.l.b16 %v916
      %v921 = vpack.c.b16 %v920, %v919
      %922 = vrot.lane.b32.xlu0 %v289, 106
      %v923 = vpop.permute.xlu0 %922
      %924 = vrot.lane.b32.xlu0 %v290, 106
      %v925 = vpop.permute.xlu0 %924
      %926 = vrot.lane.b32.xlu0 %v291, 106
      %v927 = vpop.permute.xlu0 %926
      %928 = vrot.lane.b32.xlu0 %v292, 106
      %v929 = vpop.permute.xlu0 %928
      %930 = vrot.lane.b32.xlu0 %v293, 106
      %v931 = vpop.permute.xlu0 %930
      %932 = vrot.lane.b32.xlu0 %v294, 106
      %v933 = vpop.permute.xlu0 %932
      %934 = vrot.lane.b32.xlu0 %v295, 106
      %v935 = vpop.permute.xlu0 %934
      %936 = vrot.lane.b32.xlu0 %v296, 106
      %v937 = vpop.permute.xlu0 %936
      %vm938 = vcmask 867328
      %v939 = vsel %vm938, %v923, %v925
      %v940 = vsel %vm938, %v927, %v929
      %v941 = vsel %vm938, %v931, %v933
      %v942 = vsel %vm938, %v935, %v937
      %v948 = vsel %vm322, %v921, 0
      %950 = vmatprep.subr.bf16.mxu0 0
      %951 = vmatpush1.bf16.msra.mxu0 0
      %952 = vmatprep.subr.bf16.mxu0 0
      %953 = vmatpush1.bf16.msra.mxu0 0
      %954 = vmatprep.subr.bf16.mxu0 0
      %955 = vmatpush1.bf16.msra.mxu0 0
      %956 = vmatprep.subr.bf16.mxu0 0
      %957 = vmatpush1.bf16.msra.mxu0 0
      %958 = vmatprep.subr.bf16.mxu0 0
      %959 = vmatpush1.bf16.msra.mxu0 %v942
      %960 = vmatprep.subr.bf16.mxu0 0
      %961 = vmatpush1.bf16.msra.mxu0 %v941
      %962 = vmatprep.subr.bf16.mxu0 0
      %963 = vmatpush1.bf16.msra.mxu0 %v940
      %964 = vmatprep.subr.bf16.mxu0 0
      %965 = vmatpush1.bf16.msra.mxu0 %v939
      %966 = vmatprep.subr.bf16.mxu0 0
      %967 = vmatpush2.bf16.msra.mxu0 0
      %968 = vmatprep.subr.bf16.mxu0 0
      %969 = vmatpush2.bf16.msra.mxu0 0
      %970 = vmatprep.subr.bf16.mxu0 0
      %971 = vmatpush2.bf16.msra.mxu0 0
      %972 = vmatprep.subr.bf16.mxu0 0
      %973 = vmatpush2.bf16.msra.mxu0 0
      %974 = vmatprep.subr.bf16.mxu0 0
      %975 = vmatpush2.bf16.msra.mxu0 0
      %976 = vmatprep.subr.bf16.mxu0 0
      %977 = vmatpush2.bf16.msra.mxu0 0
      %978 = vmatprep.subr.bf16.mxu0 0
      %979 = vmatpush2.bf16.msra.mxu0 0
      %980 = vmatprep.subr.bf16.mxu0 0
      %981 = vmatpush2.bf16.msra.mxu0 0
      %982 = vmatprep.mubr.bf16.mxu0 0
      %983 = vmatmul.mubr.bf16.gmra.mxu0 %v948
      %v984 = vpop.f32.mrf.mxu0
      %v985 = vadd.f32 0.0, %v984
      %v986 = vpop.f32.mrf.mxu0
      %v987 = vpop.f32.mrf.mxu0
      %v988 = vadd.f32 0.0, %v987
      %v989 = vpop.f32.mrf.mxu0
      %990 = vdwg.mxu0
      %v991 = vadd.f32 %v912, %v985
      %v992 = vadd.f32 %v913, %v988
      %v993 = vld [vmem:[%s226] sm:$0xff]
      %v994 = vld [vmem:[%s226 + $0x8] sm:$0xff]
      %996 = vset.pattern.permute.xlu0 0
      %997 = vperm.xlu0 %996, %v993
      %v998 = vpop.permute.xlu0 %997
      %1001 = vset.pattern.permute.xlu0 0
      %1002 = vperm.xlu0 %1001, %v994
      %v1003 = vpop.permute.xlu0 %1002
      %v1005 = vadd.f32 %v991, %v998
      %v1006 = vadd.f32 %v992, %v1003
      %vm1007 = vcmp.ge.f32.partialorder %v1005, 0.0
      %vm1008 = vcmp.ge.f32.partialorder %v1006, 0.0
      %v1009 = vmul.f32 %v1005, 0.2
      %v1010 = vmul.f32 %v1006, 0.2
      %v1011 = vsel %vm1007, %v1005, %v1009
      %v1012 = vsel %vm1008, %v1006, %v1010
      %v1013 = vmul.f32 %v1011, 1.4142135
      %v1014 = vmul.f32 %v1012, 1.4142135
      %1015 = vst [vmem:[%s236] sm:$0xff] %v1013
      %1016 = vst [vmem:[%s236 + $0x8] sm:$0xff] %v1014
      %s1017 = smul.u32 2, %s19
      %p1018 = scmp.lt.s32.totalorder %s18, 1
      %s1019 = scalar_select %p1018, %s18, 1
      %p1020 = scmp.lt.s32.totalorder %s1017, 1
      %s1021 = scalar_select %p1020, %s1017, 1
      %s1022 = smul.addr %s1019, 2
      %s1023 = sadd.s32 %s1021, %s1022
      %s1024 = smul.addr %s1023, 8
      %s1025 = scalar_lea.vmem %s3, %s1024
      // Predicated region
      $region33: #{res_block_forward.4} parent=31 // pred_check
        %p1026 = pneg %p124
      $region34: #{res_block_forward.4} parent=31 // pred_check_branch
        %1028 = sbr.rel (%p1026) target = $region36
      $region35: #{res_block_forward.4} parent=31 // pred_region
        %s1029 = smul.u32 2, %s19
      $region36: #{res_block_forward.4} parent=31 // pred_fallthru
        _
    $region32: #{res_block_forward.4} parent=5 // pred_fallthru
      _
    %p1030 = scmp.le.s32.totalorder 2, %s9
    // Predicated region
    $region37: #{res_block_forward.4} parent=5 // pred_check
      %p1031 = pneg %p1030
    $region38: #{res_block_forward.4} parent=5 // pred_check_branch
      %1033 = sbr.rel (%p1031) target = $region40
    $region39: #{res_block_forward.4} parent=5 // pred_region
      %s1034 = ssub.s32 %s9, 2
      // Predicated region
      $region41: #{res_block_forward.4} parent=39 // pred_check
        %p1035 = pneg %p130
      $region42: #{res_block_forward.4} parent=39 // pred_check_branch
        %1037 = sbr.rel (%p1035) target = $region44
      $region43: #{res_block_forward.4} parent=39 // pred_region
        %s1038 = smul.u32 2, %s21
        %p1039 = scmp.lt.s32.totalorder %s20, 1
        %s1040 = scalar_select %p1039, %s20, 1
        %p1041 = scmp.lt.s32.totalorder %s1038, 1
        %s1042 = scalar_select %p1041, %s1038, 1
        %s1043 = smul.addr %s1040, 2
        %s1044 = sadd.s32 %s1042, %s1043
        %s1045 = smul.addr %s1044, 8
        %s1046 = scalar_lea.vmem %s3, %s1045
      $region44: #{res_block_forward.4} parent=39 // pred_fallthru
        _
    $region40: #{res_block_forward.4} parent=5 // pred_fallthru
      _
  $region6: #{res_block_forward.4} parent=0 // loop_footer
    %s13 = sadd.s32 1, %s9
  $region7: #{res_block_forward.4} parent=0 // loop_footer_branch
    %8 = sbr.rel target = $region3
  $region8: #{res_block_forward.4} parent=0 // loop_exit
    _

// kernel: res_block_forward.5
$region0: #{res_block_forward.5}
  #allocation0 [shape = 'u32[]', space=smem, size = 0x4, offset = 0x4, fixed_abs, tag = 'smem constant byte address 0x4 - core index']
  #allocation1 [shape = 'u32[144,128]{1,0:T(1,128)}', space=vmem, size = 0x12000, scoped, tag = 'internal scratch']
  %s0 = inlined_call_operand.vmem [shape: bf16[2,64,139], index: 0, kind: input, shape index: {}]
  %s1 = inlined_call_operand.vmem [shape: bf16[4,16,64], index: 1, kind: input, shape index: {}]
  %s2 = inlined_call_operand.vmem [shape: f32[2,16,128], index: 2, kind: input, shape index: {}]
  %s3 = inlined_call_operand.vmem [shape: f32[2,16,128], index: 3, kind: output, shape index: {}]
  %s4 = sld [smem:[#allocation0]]
  $region45: #{res_block_forward.5} parent=0
    _
  %s6 = ssub.s32 1, %s4
  %s7 = scalar_select 0, %s6, %s4
  loop: start=0, step=1, limit=4
  $region2: #{res_block_forward.5} parent=0 // loop_pre_header
    _
  $region3: #{res_block_forward.5} parent=0 // loop_header
    %s9 = sphi 0, %s13
    %p10 = scmp.ge.s32.totalorder %s9, 4
    %s16 = sphi 0, %s28
    %s17 = sphi 0, %s24
    %s18 = sphi 0, %s16
    %s19 = sphi 0, %s17
    %s20 = sphi 0, %s18
    %s21 = sphi 0, %s19
    %s31 = sphi 0, %s33
    %s34 = sphi 0, %s31
    %s35 = sphi 0, %s34
    %s51 = sphi 0, %s35
    %s57 = sphi 0, %s59
    %s60 = sphi 0, %s57
    %s61 = sphi 0, %s60
    %s77 = sphi 0, %s61
    %s85 = sphi 0, %s87
    %s88 = sphi 0, %s85
    %s89 = sphi 0, %s88
    %s105 = sphi 0, %s89
    %s113 = sphi 0, %s115
    %s116 = sphi 0, %s113
    %s117 = sphi 0, %s116
    %s133 = sphi 0, %s117
  $region4: #{res_block_forward.5} parent=0 // loop_header_branch
    %12 = sbr.rel (%p10) target = $region8
  $region5: #{res_block_forward.5} parent=0 // loop_body
    %s14 = ssub.s32 %s9, 1
    %s15 = ssub.s32 %s9, 2
    %s22 = sadd.s32 1, %s17
    %p23 = scmp.ge.s32.totalorder %s22, 1
    %s24 = scalar_select %p23, 0, %s22
    %s25 = sadd.s32 1, %s16
    %s26 = scalar_select %p23, %s25, %s16
    %p27 = scmp.ge.s32.totalorder %s26, 2
    %s28 = scalar_select %p27, 0, %s26
    %s29 = ssub.s32 %s16, %s28
    %p30 = scmp.eq.s32.totalorder %s29, 0
    %s32 = sadd.s32 %s31, 1
    %s33 = scalar_select %p30, %s31, %s32
    %p36 = pneg %p30
    %p37 = scmp.eq.s32.totalorder %s9, 1
    %p38 = por %p36, %p37
    %p39 = scmp.ne.s32.totalorder %s31, %s34
    %p40 = scmp.eq.s32.totalorder %s9, 0
    %p41 = por %p39, %p40
    %p42 = scmp.ne.s32.totalorder %s31, %s34
    %p43 = scmp.eq.s32.totalorder %s14, 1
    %p44 = por %p42, %p43
    %p45 = scmp.ne.s32.totalorder %s34, %s35
    %p46 = scmp.eq.s32.totalorder %s14, 0
    %p47 = por %p45, %p46
    %p48 = scmp.ne.s32.totalorder %s34, %s35
    %p49 = scmp.eq.s32.totalorder %s15, 1
    %p50 = por %p48, %p49
    %p52 = scmp.ne.s32.totalorder %s35, %s51
    %p53 = scmp.eq.s32.totalorder %s15, 0
    %p54 = por %p52, %p53
    %s55 = ssub.s32 %s17, %s24
    %p56 = scmp.eq.s32.totalorder %s55, 0
    %s58 = sadd.s32 %s57, 1
    %s59 = scalar_select %p56, %s57, %s58
    %p62 = pneg %p56
    %p63 = scmp.eq.s32.totalorder %s9, 1
    %p64 = por %p62, %p63
    %p65 = scmp.ne.s32.totalorder %s57, %s60
    %p66 = scmp.eq.s32.totalorder %s9, 0
    %p67 = por %p65, %p66
    %p68 = scmp.ne.s32.totalorder %s57, %s60
    %p69 = scmp.eq.s32.totalorder %s14, 1
    %p70 = por %p68, %p69
    %p71 = scmp.ne.s32.totalorder %s60, %s61
    %p72 = scmp.eq.s32.totalorder %s14, 0
    %p73 = por %p71, %p72
    %p74 = scmp.ne.s32.totalorder %s60, %s61
    %p75 = scmp.eq.s32.totalorder %s15, 1
    %p76 = por %p74, %p75
    %p78 = scmp.ne.s32.totalorder %s61, %s77
    %p79 = scmp.eq.s32.totalorder %s15, 0
    %p80 = por %p78, %p79
    %s81 = ssub.s32 %s16, %s28
    %s82 = ssub.s32 %s17, %s24
    %s83 = sor.u32 %s81, %s82
    %p84 = scmp.eq.s32.totalorder %s83, 0
    %s86 = sadd.s32 %s85, 1
    %s87 = scalar_select %p84, %s85, %s86
    %p90 = pneg %p84
    %p91 = scmp.eq.s32.totalorder %s9, 1
    %p92 = por %p90, %p91
    %p93 = scmp.ne.s32.totalorder %s85, %s88
    %p94 = scmp.eq.s32.totalorder %s9, 0
    %p95 = por %p93, %p94
    %p96 = scmp.ne.s32.totalorder %s85, %s88
    %p97 = scmp.eq.s32.totalorder %s14, 1
    %p98 = por %p96, %p97
    %p99 = scmp.ne.s32.totalorder %s88, %s89
    %p100 = scmp.eq.s32.totalorder %s14, 0
    %p101 = por %p99, %p100
    %p102 = scmp.ne.s32.totalorder %s88, %s89
    %p103 = scmp.eq.s32.totalorder %s15, 1
    %p104 = por %p102, %p103
    %p106 = scmp.ne.s32.totalorder %s89, %s105
    %p107 = scmp.eq.s32.totalorder %s15, 0
    %p108 = por %p106, %p107
    %s109 = ssub.s32 %s16, %s28
    %s110 = ssub.s32 %s17, %s24
    %s111 = sor.u32 %s109, %s110
    %p112 = scmp.eq.s32.totalorder %s111, 0
    %s114 = sadd.s32 %s113, 1
    %s115 = scalar_select %p112, %s113, %s114
    %p118 = pneg %p112
    %p119 = scmp.eq.s32.totalorder %s9, 1
    %p120 = por %p118, %p119
    %p121 = scmp.ne.s32.totalorder %s113, %s116
    %p122 = scmp.eq.s32.totalorder %s9, 0
    %p123 = por %p121, %p122
    %p124 = scmp.ne.s32.totalorder %s113, %s116
    %p125 = scmp.eq.s32.totalorder %s14, 1
    %p126 = por %p124, %p125
    %p127 = scmp.ne.s32.totalorder %s116, %s117
    %p128 = scmp.eq.s32.totalorder %s14, 0
    %p129 = por %p127, %p128
    %p130 = scmp.ne.s32.totalorder %s116, %s117
    %p131 = scmp.eq.s32.totalorder %s15, 1
    %p132 = por %p130, %p131
    %p134 = scmp.ne.s32.totalorder %s117, %s133
    %p135 = scmp.eq.s32.totalorder %s15, 0
    %p136 = por %p134, %p135
    %p137 = scmp.le.s32.totalorder 1, %s9
    %p138 = scmp.lt.s32.totalorder %s9, 3
    %p139 = pnand %p137, %p138
    %p140 = pneg %p139
    // Predicated region
    $region9: #{res_block_forward.5} parent=5 // pred_check
      _
    $region10: #{res_block_forward.5} parent=5 // pred_check_branch
      %142 = sbr.rel (%p139) target = $region12
    $region11: #{res_block_forward.5} parent=5 // pred_region
      %s143 = ssub.s32 %s9, 1
      // Predicated region
      $region13: #{res_block_forward.5} parent=11 // pred_check
        %p144 = pneg %p73
      $region14: #{res_block_forward.5} parent=11 // pred_check_branch
        %146 = sbr.rel (%p144) target = $region16
      $region15: #{res_block_forward.5} parent=11 // pred_region
        %s147 = smul.u32 2, %s19
        %p148 = scmp.lt.s32.totalorder %s147, 1
        %s149 = scalar_select %p148, %s147, 1
        %s150 = smul.addr %s149, 4
        %s151 = scalar_lea.vmem %s1, %s150
        %s152 = smul.u32 2, %s19
      $region16: #{res_block_forward.5} parent=11 // pred_fallthru
        _
    $region12: #{res_block_forward.5} parent=5 // pred_fallthru
      _
    %p153 = scmp.lt.s32.totalorder %s9, 2
    // Predicated region
    $region17: #{res_block_forward.5} parent=5 // pred_check
      %p154 = pneg %p153
    $region18: #{res_block_forward.5} parent=5 // pred_check_branch
      %156 = sbr.rel (%p154) target = $region20
    $region19: #{res_block_forward.5} parent=5 // pred_region
      // Predicated region
      $region21: #{res_block_forward.5} parent=19 // pred_check
        %p157 = pneg %p41
      $region22: #{res_block_forward.5} parent=19 // pred_check_branch
        %159 = sbr.rel (%p157) target = $region24
      $region23: #{res_block_forward.5} parent=19 // pred_region
        %p160 = scmp.lt.s32.totalorder %s16, 1
        %s161 = scalar_select %p160, %s16, 1
        %s162 = smul.addr %s161, 16
        %s163 = smul.addr %s162, 4
        %s164 = scalar_lea.vmem %s0, %s163
      $region24: #{res_block_forward.5} parent=19 // pred_fallthru
        _
      // Predicated region
      $region25: #{res_block_forward.5} parent=19 // pred_check
        %p165 = pneg %p95
      $region26: #{res_block_forward.5} parent=19 // pred_check_branch
        %167 = sbr.rel (%p165) target = $region28
      $region27: #{res_block_forward.5} parent=19 // pred_region
        %s168 = smul.u32 2, %s17
        %p169 = scmp.lt.s32.totalorder %s16, 1
        %s170 = scalar_select %p169, %s16, 1
        %p171 = scmp.lt.s32.totalorder %s168, 1
        %s172 = scalar_select %p171, %s168, 1
        %s173 = smul.addr %s170, 2
        %s174 = sadd.s32 %s172, %s173
        %s175 = smul.addr %s174, 8
        %s176 = scalar_lea.vmem %s2, %s175
        %s177 = smul.u32 2, %s17
      $region28: #{res_block_forward.5} parent=19 // pred_fallthru
        _
    $region20: #{res_block_forward.5} parent=5 // pred_fallthru
      _
    %p178 = scmp.le.s32.totalorder 1, %s9
    %p179 = scmp.lt.s32.totalorder %s9, 3
    %p180 = pnand %p178, %p179
    %p181 = pneg %p180
    // Predicated region
    $region29: #{res_block_forward.5} parent=5 // pred_check
      _
    $region30: #{res_block_forward.5} parent=5 // pred_check_branch
      %183 = sbr.rel (%p180) target = $region32
    $region31: #{res_block_forward.5} parent=5 // pred_region
      %s184 = ssub.s32 %s9, 1
      %p185 = scmp.lt.s32.totalorder %s18, 1
      %s186 = scalar_select %p185, %s18, 1
      %s187 = smul.addr %s186, 16
      %s188 = smul.addr %s187, 4
      %s189 = scalar_lea.vmem %s0, %s188
      %p190 = pneg %p47
      %p191 = pneg %p44
      %s192 = smul.u32 2, %s19
      %p193 = scmp.lt.s32.totalorder %s192, 1
      %s194 = scalar_select %p193, %s192, 1
      %s195 = smul.addr %s194, 4
      %s196 = scalar_lea.vmem %s1, %s195
      %p197 = pneg %p73
      %p198 = pneg %p70
      %s199 = smul.u32 2, %s19
      %p200 = scmp.lt.s32.totalorder %s18, 1
      %s201 = scalar_select %p200, %s18, 1
      %p202 = scmp.lt.s32.totalorder %s199, 1
      %s203 = scalar_select %p202, %s199, 1
      %s204 = smul.addr %s201, 2
      %s205 = sadd.s32 %s203, %s204
      %s206 = smul.addr %s205, 8
      %s207 = scalar_lea.vmem %s2, %s206
      %p208 = pneg %p101
      %p209 = pneg %p98
      %p210 = pneg %p129
      %p211 = pneg %p126
      %s212 = smul.u32 2, %s19
      %p213 = scmp.lt.s32.totalorder %s18, 1
      %s214 = scalar_select %p213, %s18, 1
      %p215 = scmp.lt.s32.totalorder %s212, 1
      %s216 = scalar_select %p215, %s212, 1
      %s217 = smul.addr %s214, 2
      %s218 = sadd.s32 %s216, %s217
      %s219 = smul.addr %s218, 8
      %s220 = scalar_lea.vmem %s3, %s219
      %p221 = scmp.lt.s32.totalorder %s18, 1
      %s222 = scalar_select %p221, %s18, 1
      %s223 = smul.addr %s222, 16
      %s224 = smul.addr %s223, 4
      %s225 = scalar_lea.vmem %s0, %s224
      %s226 = smul.u32 2, %s19
      %p227 = scmp.lt.s32.totalorder %s226, 1
      %s228 = scalar_select %p227, %s226, 1
      %s229 = smul.addr %s228, 4
      %s230 = scalar_lea.vmem %s1, %s229
      %s231 = smul.u32 2, %s19
      %s232 = smul.u32 2, %s19
      %p233 = scmp.lt.s32.totalorder %s18, 1
      %s234 = scalar_select %p233, %s18, 1
      %p235 = scmp.lt.s32.totalorder %s232, 1
      %s236 = scalar_select %p235, %s232, 1
      %s237 = smul.addr %s234, 2
      %s238 = sadd.s32 %s236, %s237
      %s239 = smul.addr %s238, 8
      %s240 = scalar_lea.vmem %s2, %s239
      %s241 = smul.u32 2, %s19
      %s242 = smul.u32 2, %s19
      %p243 = scmp.lt.s32.totalorder %s18, 1
      %s244 = scalar_select %p243, %s18, 1
      %p245 = scmp.lt.s32.totalorder %s242, 1
      %s246 = scalar_select %p245, %s242, 1
      %s247 = smul.addr %s244, 2
      %s248 = sadd.s32 %s246, %s247
      %s249 = smul.addr %s248, 8
      %s250 = scalar_lea.vmem %s3, %s249
      %s251 = smul.u32 2, %s19
      %v253 = vld [vmem:[%s225] sm:$0xf]
      %v254 = vld [vmem:[%s225 + $0x8] sm:$0xf]
      %v255 = vld [vmem:[%s225 + $0x10] sm:$0xf]
      %v256 = vld [vmem:[%s225 + $0x18] sm:$0xf]
      %v257 = vld [vmem:[%s225 + $0x20] sm:$0xf]
      %v258 = vld [vmem:[%s225 + $0x28] sm:$0xf]
      %v259 = vld [vmem:[%s225 + $0x30] sm:$0xf]
      %v260 = vld [vmem:[%s225 + $0x38] sm:$0xf]
      %v261 = vld [vmem:[%s230] sm:$0xf]
      %v262 = vld [vmem:[%s230 + $0x4] sm:$0xf]
      %v263 = vld [vmem:[%s225] sm:$0xff]
      %v264 = vld [vmem:[%s225 + $0x8] sm:$0xff]
      %v265 = vld [vmem:[%s225 + $0x10] sm:$0xff]
      %v266 = vld [vmem:[%s225 + $0x18] sm:$0xff]
      %v267 = vld [vmem:[%s225 + $0x20] sm:$0xff]
      %v268 = vld [vmem:[%s225 + $0x28] sm:$0xff]
      %v269 = vld [vmem:[%s225 + $0x30] sm:$0xff]
      %v270 = vld [vmem:[%s225 + $0x38] sm:$0xff]
      %s271 = scalar_lea.vmem %s230, 8
      %v272 = vld [vmem:[%s271] sm:$0xf]
      %v273 = vld [vmem:[%s271 + $0x4] sm:$0xf]
      %v276 = vunpack.c.l.b16 %v272
      %v277 = vunpack.c.l.b16 %v273
      %v278 = vpack.c.b16 %v277, %v276
      %v287 = vunpack.c.l.b16 %v263
      %v288 = vunpack.c.h.b16 %v263
      %v289 = vunpack.c.l.b16 %v264
      %v290 = vunpack.c.h.b16 %v264
      %v291 = vunpack.c.l.b16 %v265
      %v292 = vunpack.c.h.b16 %v265
      %v293 = vunpack.c.l.b16 %v266
      %v294 = vunpack.c.h.b16 %v266
      %v295 = vunpack.c.l.b16 %v267
      %v296 = vunpack.c.h.b16 %v267
      %v297 = vunpack.c.l.b16 %v268
      %v298 = vunpack.c.h.b16 %v268
      %v299 = vunpack.c.l.b16 %v269
      %v300 = vunpack.c.h.b16 %v269
      %v301 = vunpack.c.l.b16 %v270
      %v302 = vunpack.c.h.b16 %v270
      %v303 = vpack.c.b16 %v289, %v287
      %v304 = vpack.c.b16 %v290, %v288
      %v305 = vpack.c.b16 %v293, %v291
      %v306 = vpack.c.b16 %v294, %v292
      %v307 = vpack.c.b16 %v297, %v295
      %v308 = vpack.c.b16 %v298, %v296
      %v309 = vpack.c.b16 %v301, %v299
      %v310 = vpack.c.b16 %v302, %v300
      %311 = vrot.lane.b32.xlu0 %v303, 127
      %v312 = vpop.permute.xlu0 %311
      %313 = vrot.lane.b32.xlu0 %v304, 127
      %v314 = vpop.permute.xlu0 %313
      %315 = vrot.lane.b32.xlu0 %v305, 127
      %v316 = vpop.permute.xlu0 %315
      %317 = vrot.lane.b32.xlu0 %v306, 127
      %v318 = vpop.permute.xlu0 %317
      %319 = vrot.lane.b32.xlu0 %v307, 127
      %v320 = vpop.permute.xlu0 %319
      %321 = vrot.lane.b32.xlu0 %v308, 127
      %v322 = vpop.permute.xlu0 %321
      %323 = vrot.lane.b32.xlu0 %v309, 127
      %v324 = vpop.permute.xlu0 %323
      %325 = vrot.lane.b32.xlu0 %v310, 127
      %v326 = vpop.permute.xlu0 %325
      %vm327 = vcmask 1039360
      %v328 = vsel %vm327, %v312, %v314
      %v329 = vsel %vm327, %v316, %v318
      %v330 = vsel %vm327, %v320, %v322
      %v331 = vsel %vm327, %v324, %v326
      %vm336 = vcmask 523264
      %v338 = vsel %vm336, %v278, 0
      %340 = vmatprep.subr.bf16.mxu0 0
      %341 = vmatpush1.bf16.msra.mxu0 0
      %342 = vmatprep.subr.bf16.mxu0 0
      %343 = vmatpush1.bf16.msra.mxu0 0
      %344 = vmatprep.subr.bf16.mxu0 0
      %345 = vmatpush1.bf16.msra.mxu0 0
      %346 = vmatprep.subr.bf16.mxu0 0
      %347 = vmatpush1.bf16.msra.mxu0 0
      %348 = vmatprep.subr.bf16.mxu0 0
      %349 = vmatpush1.bf16.msra.mxu0 %v331
      %350 = vmatprep.subr.bf16.mxu0 0
      %351 = vmatpush1.bf16.msra.mxu0 %v330
      %352 = vmatprep.subr.bf16.mxu0 0
      %353 = vmatpush1.bf16.msra.mxu0 %v329
      %354 = vmatprep.subr.bf16.mxu0 0
      %355 = vmatpush1.bf16.msra.mxu0 %v328
      %356 = vmatprep.subr.bf16.mxu0 0
      %357 = vmatpush2.bf16.msra.mxu0 0
      %358 = vmatprep.subr.bf16.mxu0 0
      %359 = vmatpush2.bf16.msra.mxu0 0
      %360 = vmatprep.subr.bf16.mxu0 0
      %361 = vmatpush2.bf16.msra.mxu0 0
      %362 = vmatprep.subr.bf16.mxu0 0
      %363 = vmatpush2.bf16.msra.mxu0 0
      %364 = vmatprep.subr.bf16.mxu0 0
      %365 = vmatpush2.bf16.msra.mxu0 0
      %366 = vmatprep.subr.bf16.mxu0 0
      %367 = vmatpush2.bf16.msra.mxu0 0
      %368 = vmatprep.subr.bf16.mxu0 0
      %369 = vmatpush2.bf16.msra.mxu0 0
      %370 = vmatprep.subr.bf16.mxu0 0
      %371 = vmatpush2.bf16.msra.mxu0 0
      %372 = vmatprep.mubr.bf16.mxu0 0
      %373 = vmatmul.mubr.bf16.gmra.mxu0 %v338
      %v374 = vpop.f32.mrf.mxu0
      %v375 = vadd.f32 0.0, %v374
      %v376 = vpop.f32.mrf.mxu0
      %v377 = vpop.f32.mrf.mxu0
      %v378 = vadd.f32 0.0, %v377
      %v379 = vpop.f32.mrf.mxu0
      %380 = vdwg.mxu0
      %v383 = vunpack.c.l.b16 %v261
      %v384 = vunpack.c.l.b16 %v262
      %v385 = vpack.c.b16 %v384, %v383
      %v394 = vunpack.c.l.b16 %v253
      %v395 = vunpack.c.l.b16 %v254
      %v396 = vunpack.c.l.b16 %v255
      %v397 = vunpack.c.l.b16 %v256
      %v398 = vunpack.c.l.b16 %v257
      %v399 = vunpack.c.l.b16 %v258
      %v400 = vunpack.c.l.b16 %v259
      %v401 = vunpack.c.l.b16 %v260
      %v402 = vpack.c.b16 %v395, %v394
      %v403 = vpack.c.b16 %v397, %v396
      %v404 = vpack.c.b16 %v399, %v398
      %v405 = vpack.c.b16 %v401, %v400
      %v411 = vsel %vm336, %v385, 0
      %413 = vmatprep.subr.bf16.mxu0 0
      %414 = vmatpush1.bf16.msra.mxu0 0
      %415 = vmatprep.subr.bf16.mxu0 0
      %416 = vmatpush1.bf16.msra.mxu0 0
      %417 = vmatprep.subr.bf16.mxu0 0
      %418 = vmatpush1.bf16.msra.mxu0 0
      %419 = vmatprep.subr.bf16.mxu0 0
      %420 = vmatpush1.bf16.msra.mxu0 0
      %421 = vmatprep.subr.bf16.mxu0 0
      %422 = vmatpush1.bf16.msra.mxu0 %v405
      %423 = vmatprep.subr.bf16.mxu0 0
      %424 = vmatpush1.bf16.msra.mxu0 %v404
      %425 = vmatprep.subr.bf16.mxu0 0
      %426 = vmatpush1.bf16.msra.mxu0 %v403
      %427 = vmatprep.subr.bf16.mxu0 0
      %428 = vmatpush1.bf16.msra.mxu0 %v402
      %429 = vmatprep.subr.bf16.mxu0 0
      %430 = vmatpush2.bf16.msra.mxu0 0
      %431 = vmatprep.subr.bf16.mxu0 0
      %432 = vmatpush2.bf16.msra.mxu0 0
      %433 = vmatprep.subr.bf16.mxu0 0
      %434 = vmatpush2.bf16.msra.mxu0 0
      %435 = vmatprep.subr.bf16.mxu0 0
      %436 = vmatpush2.bf16.msra.mxu0 0
      %437 = vmatprep.subr.bf16.mxu0 0
      %438 = vmatpush2.bf16.msra.mxu0 0
      %439 = vmatprep.subr.bf16.mxu0 0
      %440 = vmatpush2.bf16.msra.mxu0 0
      %441 = vmatprep.subr.bf16.mxu0 0
      %442 = vmatpush2.bf16.msra.mxu0 0
      %443 = vmatprep.subr.bf16.mxu0 0
      %444 = vmatpush2.bf16.msra.mxu0 0
      %445 = vmatprep.mubr.bf16.mxu0 0
      %446 = vmatmul.mubr.bf16.gmra.mxu0 %v411
      %v447 = vpop.f32.mrf.mxu0
      %v448 = vadd.f32 %v375, %v447
      %v449 = vpop.f32.mrf.mxu0
      %v450 = vpop.f32.mrf.mxu0
      %v451 = vadd.f32 %v378, %v450
      %v452 = vpop.f32.mrf.mxu0
      %453 = vdwg.mxu0
      %s454 = scalar_lea.vmem %s230, 16
      %v455 = vld [vmem:[%s454] sm:$0xf]
      %v456 = vld [vmem:[%s454 + $0x4] sm:$0xf]
      %v459 = vunpack.c.l.b16 %v455
      %v460 = vunpack.c.l.b16 %v456
      %v461 = vpack.c.b16 %v460, %v459
      %462 = vrot.lane.b32.xlu0 %v303, 118
      %v463 = vpop.permute.xlu0 %462
      %464 = vrot.lane.b32.xlu0 %v304, 118
      %v465 = vpop.permute.xlu0 %464
      %466 = vrot.lane.b32.xlu0 %v305, 118
      %v467 = vpop.permute.xlu0 %466
      %468 = vrot.lane.b32.xlu0 %v306, 118
      %v469 = vpop.permute.xlu0 %468
      %470 = vrot.lane.b32.xlu0 %v307, 118
      %v471 = vpop.permute.xlu0 %470
      %472 = vrot.lane.b32.xlu0 %v308, 118
      %v473 = vpop.permute.xlu0 %472
      %474 = vrot.lane.b32.xlu0 %v309, 118
      %v475 = vpop.permute.xlu0 %474
      %476 = vrot.lane.b32.xlu0 %v310, 118
      %v477 = vpop.permute.xlu0 %476
      %vm478 = vcmask 965632
      %v479 = vsel %vm478, %v463, %v465
      %v480 = vsel %vm478, %v467, %v469
      %v481 = vsel %vm478, %v471, %v473
      %v482 = vsel %vm478, %v475, %v477
      %v488 = vsel %vm336, %v461, 0
      %490 = vmatprep.subr.bf16.mxu0 0
      %491 = vmatpush1.bf16.msra.mxu0 0
      %492 = vmatprep.subr.bf16.mxu0 0
      %493 = vmatpush1.bf16.msra.mxu0 0
      %494 = vmatprep.subr.bf16.mxu0 0
      %495 = vmatpush1.bf16.msra.mxu0 0
      %496 = vmatprep.subr.bf16.mxu0 0
      %497 = vmatpush1.bf16.msra.mxu0 0
      %498 = vmatprep.subr.bf16.mxu0 0
      %499 = vmatpush1.bf16.msra.mxu0 %v482
      %500 = vmatprep.subr.bf16.mxu0 0
      %501 = vmatpush1.bf16.msra.mxu0 %v481
      %502 = vmatprep.subr.bf16.mxu0 0
      %503 = vmatpush1.bf16.msra.mxu0 %v480
      %504 = vmatprep.subr.bf16.mxu0 0
      %505 = vmatpush1.bf16.msra.mxu0 %v479
      %506 = vmatprep.subr.bf16.mxu0 0
      %507 = vmatpush2.bf16.msra.mxu0 0
      %508 = vmatprep.subr.bf16.mxu0 0
      %509 = vmatpush2.bf16.msra.mxu0 0
      %510 = vmatprep.subr.bf16.mxu0 0
      %511 = vmatpush2.bf16.msra.mxu0 0
      %512 = vmatprep.subr.bf16.mxu0 0
      %513 = vmatpush2.bf16.msra.mxu0 0
      %514 = vmatprep.subr.bf16.mxu0 0
      %515 = vmatpush2.bf16.msra.mxu0 0
      %516 = vmatprep.subr.bf16.mxu0 0
      %517 = vmatpush2.bf16.msra.mxu0 0
      %518 = vmatprep.subr.bf16.mxu0 0
      %519 = vmatpush2.bf16.msra.mxu0 0
      %520 = vmatprep.subr.bf16.mxu0 0
      %521 = vmatpush2.bf16.msra.mxu0 0
      %522 = vmatprep.mubr.bf16.mxu0 0
      %523 = vmatmul.mubr.bf16.gmra.mxu0 %v488
      %v524 = vpop.f32.mrf.mxu0
      %v525 = vadd.f32 0.0, %v524
      %v526 = vpop.f32.mrf.mxu0
      %v527 = vpop.f32.mrf.mxu0
      %v528 = vadd.f32 0.0, %v527
      %v529 = vpop.f32.mrf.mxu0
      %530 = vdwg.mxu0
      %v531 = vadd.f32 %v448, %v525
      %v532 = vadd.f32 %v451, %v528
      %s533 = scalar_lea.vmem %s230, 24
      %v534 = vld [vmem:[%s533] sm:$0xf]
      %v535 = vld [vmem:[%s533 + $0x4] sm:$0xf]
      %v538 = vunpack.c.l.b16 %v534
      %v539 = vunpack.c.l.b16 %v535
      %v540 = vpack.c.b16 %v539, %v538
      %541 = vrot.lane.b32.xlu0 %v303, 117
      %v542 = vpop.permute.xlu0 %541
      %543 = vrot.lane.b32.xlu0 %v304, 117
      %v544 = vpop.permute.xlu0 %543
      %545 = vrot.lane.b32.xlu0 %v305, 117
      %v546 = vpop.permute.xlu0 %545
      %547 = vrot.lane.b32.xlu0 %v306, 117
      %v548 = vpop.permute.xlu0 %547
      %549 = vrot.lane.b32.xlu0 %v307, 117
      %v550 = vpop.permute.xlu0 %549
      %551 = vrot.lane.b32.xlu0 %v308, 117
      %v552 = vpop.permute.xlu0 %551
      %553 = vrot.lane.b32.xlu0 %v309, 117
      %v554 = vpop.permute.xlu0 %553
      %555 = vrot.lane.b32.xlu0 %v310, 117
      %v556 = vpop.permute.xlu0 %555
      %vm557 = vcmask 957440
      %v558 = vsel %vm557, %v542, %v544
      %v559 = vsel %vm557, %v546, %v548
      %v560 = vsel %vm557, %v550, %v552
      %v561 = vsel %vm557, %v554, %v556
      %v567 = vsel %vm336, %v540, 0
      %569 = vmatprep.subr.bf16.mxu0 0
      %570 = vmatpush1.bf16.msra.mxu0 0
      %571 = vmatprep.subr.bf16.mxu0 0
      %572 = vmatpush1.bf16.msra.mxu0 0
      %573 = vmatprep.subr.bf16.mxu0 0
      %574 = vmatpush1.bf16.msra.mxu0 0
      %575 = vmatprep.subr.bf16.mxu0 0
      %576 = vmatpush1.bf16.msra.mxu0 0
      %577 = vmatprep.subr.bf16.mxu0 0
      %578 = vmatpush1.bf16.msra.mxu0 %v561
      %579 = vmatprep.subr.bf16.mxu0 0
      %580 = vmatpush1.bf16.msra.mxu0 %v560
      %581 = vmatprep.subr.bf16.mxu0 0
      %582 = vmatpush1.bf16.msra.mxu0 %v559
      %583 = vmatprep.subr.bf16.mxu0 0
      %584 = vmatpush1.bf16.msra.mxu0 %v558
      %585 = vmatprep.subr.bf16.mxu0 0
      %586 = vmatpush2.bf16.msra.mxu0 0
      %587 = vmatprep.subr.bf16.mxu0 0
      %588 = vmatpush2.bf16.msra.mxu0 0
      %589 = vmatprep.subr.bf16.mxu0 0
      %590 = vmatpush2.bf16.msra.mxu0 0
      %591 = vmatprep.subr.bf16.mxu0 0
      %592 = vmatpush2.bf16.msra.mxu0 0
      %593 = vmatprep.subr.bf16.mxu0 0
      %594 = vmatpush2.bf16.msra.mxu0 0
      %595 = vmatprep.subr.bf16.mxu0 0
      %596 = vmatpush2.bf16.msra.mxu0 0
      %597 = vmatprep.subr.bf16.mxu0 0
      %598 = vmatpush2.bf16.msra.mxu0 0
      %599 = vmatprep.subr.bf16.mxu0 0
      %600 = vmatpush2.bf16.msra.mxu0 0
      %601 = vmatprep.mubr.bf16.mxu0 0
      %602 = vmatmul.mubr.bf16.gmra.mxu0 %v567
      %v603 = vpop.f32.mrf.mxu0
      %v604 = vadd.f32 0.0, %v603
      %v605 = vpop.f32.mrf.mxu0
      %v606 = vpop.f32.mrf.mxu0
      %v607 = vadd.f32 0.0, %v606
      %v608 = vpop.f32.mrf.mxu0
      %609 = vdwg.mxu0
      %v610 = vadd.f32 %v531, %v604
      %v611 = vadd.f32 %v532, %v607
      %v612 = vld [vmem:[%s240] sm:$0xff]
      %v613 = vld [vmem:[%s240 + $0x8] sm:$0xff]
      %v614 = vadd.f32 %v610, %v612
      %v615 = vadd.f32 %v611, %v613
      %v616 = vmul.f32 %v614, 0.70710677
      %v617 = vmul.f32 %v615, 0.70710677
      %618 = vst [vmem:[%s250] sm:$0xff] %v616
      %619 = vst [vmem:[%s250 + $0x8] sm:$0xff] %v617
      %s620 = smul.u32 2, %s19
      %p621 = scmp.lt.s32.totalorder %s18, 1
      %s622 = scalar_select %p621, %s18, 1
      %p623 = scmp.lt.s32.totalorder %s620, 1
      %s624 = scalar_select %p623, %s620, 1
      %s625 = smul.addr %s622, 2
      %s626 = sadd.s32 %s624, %s625
      %s627 = smul.addr %s626, 8
      %s628 = scalar_lea.vmem %s3, %s627
      // Predicated region
      $region33: #{res_block_forward.5} parent=31 // pred_check
        %p629 = pneg %p126
      $region34: #{res_block_forward.5} parent=31 // pred_check_branch
        %631 = sbr.rel (%p629) target = $region36
      $region35: #{res_block_forward.5} parent=31 // pred_region
        %s632 = smul.u32 2, %s19
      $region36: #{res_block_forward.5} parent=31 // pred_fallthru
        _
    $region32: #{res_block_forward.5} parent=5 // pred_fallthru
      _
    %p633 = scmp.le.s32.totalorder 2, %s9
    // Predicated region
    $region37: #{res_block_forward.5} parent=5 // pred_check
      %p634 = pneg %p633
    $region38: #{res_block_forward.5} parent=5 // pred_check_branch
      %636 = sbr.rel (%p634) target = $region40
    $region39: #{res_block_forward.5} parent=5 // pred_region
      %s637 = ssub.s32 %s9, 2
      // Predicated region
      $region41: #{res_block_forward.5} parent=39 // pred_check
        %p638 = pneg %p132
      $region42: #{res_block_forward.5} parent=39 // pred_check_branch
        %640 = sbr.rel (%p638) target = $region44
      $region43: #{res_block_forward.5} parent=39 // pred_region
        %s641 = smul.u32 2, %s21
        %p642 = scmp.lt.s32.totalorder %s20, 1
        %s643 = scalar_select %p642, %s20, 1
        %p644 = scmp.lt.s32.totalorder %s641, 1
        %s645 = scalar_select %p644, %s641, 1
        %s646 = smul.addr %s643, 2
        %s647 = sadd.s32 %s645, %s646
        %s648 = smul.addr %s647, 8
        %s649 = scalar_lea.vmem %s3, %s648
      $region44: #{res_block_forward.5} parent=39 // pred_fallthru
        _
    $region40: #{res_block_forward.5} parent=5 // pred_fallthru
      _
  $region6: #{res_block_forward.5} parent=0 // loop_footer
    %s13 = sadd.s32 1, %s9
  $region7: #{res_block_forward.5} parent=0 // loop_footer_branch
    %8 = sbr.rel target = $region3
  $region8: #{res_block_forward.5} parent=0 // loop_exit
    _

</llo_original>
